<compile_context>
chip_gen: v7x
topology: tpu7x:2x2x1
jax: 0.10.0
libtpu: 0.0.40
codegen_flags: <defaults>
</compile_context>

<pallas_src>
import jax
import jax.numpy as jnp
from jax.experimental import pallas as pl
from jax.experimental.pallas import tpu as pltpu

VMEM_LIMIT = 48 * 1024 * 1024  # > v5e's 16 MiB scoped default, < v7x physical.


def _round_up(x, m):
    return (x + m - 1) // m * m


def _pick_chunk(seq, t_max=16):
    """Largest divisor of seq that is <= t_max (timesteps per grid step)."""
    t = min(t_max, seq)
    while seq % t != 0:
        t -= 1
    return t


# ----------------------------- Pallas kernels --------------------------------
def matmul_bias_kernel(x_ref, w_ref, b_ref, o_ref):
    """One (tm, K) @ (K, tn) + bias tile.  Used for the fused output heads."""
    o_ref[...] = (
        jnp.dot(x_ref[...], w_ref[...], preferred_element_type=jnp.float32)
        + b_ref[...]
    )


def _matmul_bias(x, w, b, tm=256, tn=512):
    """Tiled (R,K)@(K,N)+bias over a 2-D parallel grid (K kept whole)."""
    R, K = x.shape
    N = w.shape[1]
    tm = min(tm, _round_up(R, 8))
    tn = min(tn, _round_up(N, 128))
    Rp = _round_up(R, tm)
    Np = _round_up(N, tn)
    if Rp != R:
        x = jnp.pad(x, ((0, Rp - R), (0, 0)))
    if Np != N:
        w = jnp.pad(w, ((0, 0), (0, Np - N)))
        b = jnp.pad(b, ((0, 0), (0, Np - N)))
    out = pl.pallas_call(
        matmul_bias_kernel,
        out_shape=jax.ShapeDtypeStruct((Rp, Np), jnp.float32),
        grid_spec=pltpu.PrefetchScalarGridSpec(
            num_scalar_prefetch=0,
            grid=(Rp // tm, Np // tn),
            in_specs=[pl.BlockSpec((tm, K), lambda i, j: (i, 0)),
                      pl.BlockSpec((K, tn), lambda i, j: (0, j)),
                      pl.BlockSpec((1, tn), lambda i, j: (0, j))],
            out_specs=pl.BlockSpec((tm, tn), lambda i, j: (i, j)),
        ),
        compiler_params=pltpu.CompilerParams(
            dimension_semantics=("parallel", "parallel"),
            vmem_limit_bytes=VMEM_LIMIT),
    )(x, w, b)
    return out[:R, :N]


def lstm_chunk_kernel(emb_ref, wih_ref, bias_ref, whh_ref, h0_ref, c0_ref,
                      hs_ref, hn_ref, cn_ref, gx_scr, h_scr, c_scr):
    """One seq-chunk of the LSTM recurrence.

    emb_ref: (T*Bp, 2ninp) rows for this chunk; the chunk's input projection is
    done with a single MXU call into gx_scr, then a serial fori_loop runs the
    T timesteps.  h/c are carried across grid steps in VMEM scratch.
    """
    @pl.when(pl.program_id(0) == 0)
    def _():
        h_scr[...] = h0_ref[...]
        c_scr[...] = c0_ref[...]

    rows = emb_ref.shape[0]
    Bp, Hp = h0_ref.shape
    T = rows // Bp

    # Fused per-chunk input projection (+ biases), parked in VMEM scratch.
    gx_scr[...] = (
        jnp.dot(emb_ref[...], wih_ref[...], preferred_element_type=jnp.float32)
        + bias_ref[...]
    )

    def step(t, carry):
        h, c = carry
        r0 = pl.multiple_of(t * Bp, 8)
        gates = gx_scr[pl.ds(r0, Bp), :] + jnp.dot(
            h, whh_ref[...], preferred_element_type=jnp.float32)
        # PyTorch LSTM gate order i, f, g, o — each gate block is 128-aligned.
        i_g = jax.nn.sigmoid(gates[:, 0 * Hp:1 * Hp])
        f_g = jax.nn.sigmoid(gates[:, 1 * Hp:2 * Hp])
        g_g = jnp.tanh(gates[:, 2 * Hp:3 * Hp])
        o_g = jax.nn.sigmoid(gates[:, 3 * Hp:4 * Hp])
        c_new = f_g * c + i_g * g_g
        h_new = o_g * jnp.tanh(c_new)
        hs_ref[pl.ds(r0, Bp), :] = h_new      # lane-dense (Hp % 128 == 0) store
        return (h_new, c_new)

    h_n, c_n = jax.lax.fori_loop(0, T, step, (h_scr[...], c_scr[...]),
                                 unroll=True)
    h_scr[...] = h_n
    c_scr[...] = c_n
    hn_ref[...] = h_n
    cn_ref[...] = c_n


def _lstm_recurrence(emb2d, wih_p, bias_p, whh_p, h0_p, c0_p, seq, Bp,
                     t_chunk=16):
    Ein = emb2d.shape[1]
    Hp = whh_p.shape[0]
    T = _pick_chunk(seq, t_chunk)

    fixed = lambda shape: pl.BlockSpec(shape, lambda s: (0,) * len(shape))
    return pl.pallas_call(
        lstm_chunk_kernel,
        out_shape=(
            jax.ShapeDtypeStruct((seq * Bp, Hp), jnp.float32),   # all h_t
            jax.ShapeDtypeStruct((Bp, Hp), jnp.float32),         # h_n
            jax.ShapeDtypeStruct((Bp, Hp), jnp.float32),         # c_n
        ),
        grid_spec=pltpu.PrefetchScalarGridSpec(
            num_scalar_prefetch=0,
            grid=(seq // T,),
            in_specs=[pl.BlockSpec((T * Bp, Ein), lambda s: (s, 0)),
                      fixed((Ein, 4 * Hp)),
                      fixed((1, 4 * Hp)),
                      fixed((Hp, 4 * Hp)),
                      fixed((Bp, Hp)),
                      fixed((Bp, Hp))],
            out_specs=[pl.BlockSpec((T * Bp, Hp), lambda s: (s, 0)),
                       fixed((Bp, Hp)),
                       fixed((Bp, Hp))],
            scratch_shapes=[pltpu.VMEM((T * Bp, 4 * Hp), jnp.float32),  # gx
                            pltpu.VMEM((Bp, Hp), jnp.float32),          # h carry
                            pltpu.VMEM((Bp, Hp), jnp.float32)],         # c carry
        ),
        compiler_params=pltpu.CompilerParams(
            dimension_semantics=("arbitrary",),
            vmem_limit_bytes=VMEM_LIMIT),
    )(emb2d, wih_p, bias_p, whh_p, h0_p, c0_p)


# --------------------------- one-time weight prep -----------------------------
def prepare_params(params):
    """Hoisted weight plumbing: gate re-layout to 128-aligned blocks, head
    concat + pad.  Run ONCE at init, not per forward call."""
    H = params["w_hh"].shape[1]
    Hp = _round_up(H, 128)
    ntag = params["w_tag_out"].shape[0]
    ntoken = params["w_word_out"].shape[0]
    K = ntag + ntoken
    Kp = _round_up(K, 128)

    def gate_pad_cols(m):  # (rows, 4H) -> (rows, 4Hp), gate k at [k*Hp, k*Hp+H)
        parts = [jnp.pad(m[:, k * H:(k + 1) * H], ((0, 0), (0, Hp - H)))
                 for k in range(4)]
        return jnp.concatenate(parts, axis=1)

    wih_p = gate_pad_cols(params["w_ih"].T)                          # (2ninp,4Hp)
    whh_p = gate_pad_cols(
        jnp.pad(params["w_hh"].T, ((0, Hp - H), (0, 0))))            # (Hp, 4Hp)
    bias_p = gate_pad_cols(
        (params["b_ih"] + params["b_hh"]).reshape(1, 4 * H))         # (1, 4Hp)

    # Fused heads: [W_tag_out.T | W_word_out.T], rows padded H->Hp (zeros match
    # the zero padded lanes of h), cols padded to a 128-lane-dense Kp.
    w_heads = jnp.concatenate(
        [params["w_tag_out"].T, params["w_word_out"].T], axis=1)     # (H, K)
    w_heads_p = jnp.pad(w_heads, ((0, Hp - H), (0, Kp - K)))         # (Hp, Kp)
    b_heads_p = jnp.pad(
        jnp.concatenate([params["b_tag_out"], params["b_word_out"]]),
        (0, Kp - K)).reshape(1, Kp)

    out = dict(params)
    out.update(wih_p=wih_p, whh_p=whh_p, bias_p=bias_p,
               w_heads_p=w_heads_p, b_heads_p=b_heads_p,
               H=H, Hp=Hp, ntag=ntag, ntoken=ntoken, Kp=Kp)
    return out


# ------------------------------ forward wrapper -------------------------------
def simple_rnn_forward(prepped, input_token, input_tag, hidden):
    """Pallas implementation of SimpleRNNModel.forward (LSTM, eval dropout)."""
    h0, c0 = hidden                                   # (1, B, H) each
    seq, B = input_token.shape
    H, Hp = prepped["H"], prepped["Hp"]
    ntag, ntoken, Kp = prepped["ntag"], prepped["ntoken"], prepped["Kp"]

    # JAX glue: embedding lookups + concat (dropout == identity in eval mode).
    word_emb = jnp.take(prepped["word_emb"], input_token, axis=0)   # (seq,B,ninp)
    tag_emb = jnp.take(prepped["tag_emb"], input_tag, axis=0)       # (seq,B,ninp)
    emb = jnp.concatenate([word_emb, tag_emb], axis=2)              # (seq,B,2ninp)
    Ein = emb.shape[2]

    # Pad batch to the f32 sublane count (8) and hidden to 128 lanes.
    Bp = max(8, _round_up(B, 8))
    pad_b = Bp - B
    emb_p = jnp.pad(emb, ((0, 0), (0, pad_b), (0, 0)))
    h0_p = jnp.pad(h0[0], ((0, pad_b), (0, Hp - H)))
    c0_p = jnp.pad(c0[0], ((0, pad_b), (0, Hp - H)))
    emb2d = emb_p.reshape(seq * Bp, Ein)

    # Seq-chunked LSTM recurrence (projection fused per chunk, h/c in scratch).
    hs2d, h_n, c_n = _lstm_recurrence(
        emb2d, prepped["wih_p"], prepped["bias_p"], prepped["whh_p"],
        h0_p, c0_p, seq, Bp)

    # Fused + tiled output heads over (seq*Bp, Hp) rows.
    p_all = _matmul_bias(hs2d, prepped["w_heads_p"], prepped["b_heads_p"])
    p_all = p_all.reshape(seq, Bp, Kp)[:, :B]
    p_tag = p_all[..., :ntag]
    p_word = p_all[..., ntag:ntag + ntoken]
    if seq == 1:  # matches torch `output.squeeze(0)`
        p_tag, p_word = p_tag[0], p_word[0]

    hidden_out = (h_n[:B, :H][None], c_n[:B, :H][None])             # (1,B,H) each
    return p_word, p_tag, hidden_out


# --------------------------- pure-JAX reference -------------------------------
def reference_forward(params, input_token, input_tag, hidden):
    h0, c0 = hidden
    H = params["w_hh"].shape[1]
    word_emb = jnp.take(params["word_emb"], input_token, axis=0)
    tag_emb = jnp.take(params["tag_emb"], input_tag, axis=0)
    emb = jnp.concatenate([word_emb, tag_emb], axis=2)

    def step(carry, x):
        h, c = carry
        gates = (x @ params["w_ih"].T + h @ params["w_hh"].T
                 + params["b_ih"] + params["b_hh"])
        i = jax.nn.sigmoid(gates[:, 0 * H:1 * H])
        f = jax.nn.sigmoid(gates[:, 1 * H:2 * H])
        g = jnp.tanh(gates[:, 2 * H:3 * H])
        o = jax.nn.sigmoid(gates[:, 3 * H:4 * H])
        c = f * c + i * g
        h = o * jnp.tanh(c)
        return (h, c), h

    (h_n, c_n), outs = jax.lax.scan(step, (h0[0], c0[0]), emb)
    p_tag = outs @ params["w_tag_out"].T + params["b_tag_out"]
    p_word = outs @ params["w_word_out"].T + params["b_word_out"]
    return p_word, p_tag, (h_n[None], c_n[None])


# ------------------------------- main ----------------------------------------
if __name__ == "__main__":
    # Small config: ntoken=32, ntag=8, ninp=16, nhid=32, nlayers=1, seq=8, batch=2
    ntoken, ntag, ninp, nhid, nlayers = 32, 8, 16, 32, 1
    seq, B = 8, 2
    initrange = 0.1

    key = jax.random.PRNGKey(0)
    ks = jax.random.split(key, 12)
    u = lambda k, shape, r: jax.random.uniform(k, shape, jnp.float32, -r, r)
    stdv = 1.0 / jnp.sqrt(nhid)

    params = {
        "word_emb": u(ks[0], (ntoken, ninp), initrange),
        "tag_emb": u(ks[1], (ntag, ninp), initrange),
        # LSTM layer 0 (PyTorch gate order i,f,g,o)
        "w_ih": u(ks[2], (4 * nhid, 2 * ninp), stdv),
        "w_hh": u(ks[3], (4 * nhid, nhid), stdv),
        "b_ih": u(ks[4], (4 * nhid,), stdv),
        "b_hh": u(ks[5], (4 * nhid,), stdv),
        # heads (init_weights: uniform weights, zero biases)
        "w_tag_out": u(ks[6], (ntag, nhid), initrange),
        "b_tag_out": jnp.zeros((ntag,), jnp.float32),
        "w_word_out": u(ks[7], (ntoken, nhid), initrange),
        "b_word_out": jnp.zeros((ntoken,), jnp.float32),
    }
    prepped = prepare_params(params)   # one-time weight plumbing

    input_token = jax.random.randint(ks[8], (seq, B), 0, ntoken)
    input_tag = jax.random.randint(ks[9], (seq, B), 0, ntag)
    hidden = (jnp.zeros((nlayers, B, nhid), jnp.float32),
              jnp.zeros((nlayers, B, nhid), jnp.float32))

    p_word, p_tag, (h_n, c_n) = simple_rnn_forward(
        prepped, input_token, input_tag, hidden)
    jax.block_until_ready((p_word, p_tag, h_n, c_n))

    # Correctness check against pure-JAX reference.
    r_word, r_tag, (rh, rc) = reference_forward(
        params, input_token, input_tag, hidden)
    assert p_word.shape == r_word.shape and p_tag.shape == r_tag.shape
    assert jnp.allclose(p_word, r_word, atol=1e-5, rtol=1e-5)
    assert jnp.allclose(p_tag, r_tag, atol=1e-5, rtol=1e-5)
    assert jnp.allclose(h_n, rh, atol=1e-5, rtol=1e-5)
    assert jnp.allclose(c_n, rc, atol=1e-5, rtol=1e-5)

    print("KERNEL_OK")
</pallas_src>

<mosaic_0001>
module attributes {stable_mosaic.version = 11 : i64} {
  func.func @lstm_chunk_kernel(%arg0: i32, %arg1: memref<64x32xf32, #tpu.memory_space<vmem>>, %arg2: memref<32x512xf32, #tpu.memory_space<vmem>>, %arg3: memref<1x512xf32, #tpu.memory_space<vmem>>, %arg4: memref<128x512xf32, #tpu.memory_space<vmem>>, %arg5: memref<8x128xf32, #tpu.memory_space<vmem>>, %arg6: memref<8x128xf32, #tpu.memory_space<vmem>>, %arg7: memref<64x128xf32, #tpu.memory_space<vmem>>, %arg8: memref<8x128xf32, #tpu.memory_space<vmem>>, %arg9: memref<8x128xf32, #tpu.memory_space<vmem>>, %arg10: memref<64x512xf32, #tpu.memory_space<vmem>>, %arg11: memref<8x128xf32, #tpu.memory_space<vmem>>, %arg12: memref<8x128xf32, #tpu.memory_space<vmem>>) attributes {dimension_semantics = [#tpu.dimension_semantics<arbitrary>], iteration_bounds = array<i64: 1>, scalar_prefetch = 0 : i64, scratch_operands = 3 : i64, tpu.core_type = #tpu.core_type<tc>, window_params = [{transform_indices = @transform_0, window_bounds = array<i64: 64, 32>}, {pipeline_mode = #tpu.pipeline_mode<synchronous>, transform_indices = @transform_1, window_bounds = array<i64: 32, 512>}, {pipeline_mode = #tpu.pipeline_mode<synchronous>, transform_indices = @transform_2, window_bounds = array<i64: 1, 512>}, {pipeline_mode = #tpu.pipeline_mode<synchronous>, transform_indices = @transform_3, window_bounds = array<i64: 128, 512>}, {pipeline_mode = #tpu.pipeline_mode<synchronous>, transform_indices = @transform_4, window_bounds = array<i64: 8, 128>}, {pipeline_mode = #tpu.pipeline_mode<synchronous>, transform_indices = @transform_5, window_bounds = array<i64: 8, 128>}, {transform_indices = @transform_6, window_bounds = array<i64: 64, 128>}, {pipeline_mode = #tpu.pipeline_mode<synchronous>, transform_indices = @transform_7, window_bounds = array<i64: 8, 128>}, {pipeline_mode = #tpu.pipeline_mode<synchronous>, transform_indices = @transform_8, window_bounds = array<i64: 8, 128>}]} {
    %c0_i32 = arith.constant 0 : i32
    %0 = arith.cmpi eq, %arg0, %c0_i32 : i32
    %1 = arith.extui %0 : i1 to i32
    %c0_i32_0 = arith.constant 0 : i32
    %2 = arith.cmpi ne, %1, %c0_i32_0 : i32
    scf.if %2 {
      %c0_93 = arith.constant 0 : index
      %c0_94 = arith.constant 0 : index
      %288 = vector.load %arg5[%c0_93, %c0_94] : memref<8x128xf32, #tpu.memory_space<vmem>>, vector<8x128xf32>
      %c0_95 = arith.constant 0 : index
      %c0_96 = arith.constant 0 : index
      %289 = vector.load %arg11[%c0_95, %c0_96] : memref<8x128xf32, #tpu.memory_space<vmem>>, vector<8x128xf32>
      tpu.vector_store %arg11[%c0_95, %c0_96], %288 {strides = array<i32>} : memref<8x128xf32, #tpu.memory_space<vmem>>, vector<8x128xf32>,
      %c0_97 = arith.constant 0 : index
      %c0_98 = arith.constant 0 : index
      %290 = vector.load %arg6[%c0_97, %c0_98] : memref<8x128xf32, #tpu.memory_space<vmem>>, vector<8x128xf32>
      %c0_99 = arith.constant 0 : index
      %c0_100 = arith.constant 0 : index
      %291 = vector.load %arg12[%c0_99, %c0_100] : memref<8x128xf32, #tpu.memory_space<vmem>>, vector<8x128xf32>
      tpu.vector_store %arg12[%c0_99, %c0_100], %290 {strides = array<i32>} : memref<8x128xf32, #tpu.memory_space<vmem>>, vector<8x128xf32>,
    } else {
    }
    %c0 = arith.constant 0 : index
    %c0_1 = arith.constant 0 : index
    %3 = vector.load %arg1[%c0, %c0_1] : memref<64x32xf32, #tpu.memory_space<vmem>>, vector<64x32xf32>
    %c0_2 = arith.constant 0 : index
    %c0_3 = arith.constant 0 : index
    %4 = vector.load %arg2[%c0_2, %c0_3] : memref<32x512xf32, #tpu.memory_space<vmem>>, vector<32x512xf32>
    %cst = arith.constant dense<0.000000e+00> : vector<64x512xf32>
    %5 = tpu.matmul %3, %4, %cst {dimension_numbers = #tpu.dot_dimension_numbers<[1], [0], [0], [1], [0, 0, 1, 1], [], []>} : vector<64x32xf32>, vector<32x512xf32>, vector<64x512xf32> -> vector<64x512xf32>
    %c0_4 = arith.constant 0 : index
    %c0_5 = arith.constant 0 : index
    %6 = vector.load %arg3[%c0_4, %c0_5] : memref<1x512xf32, #tpu.memory_space<vmem>>, vector<1x512xf32>
    %7 = vector.broadcast %6 : vector<1x512xf32> to vector<64x512xf32>
    %8 = arith.addf %5, %7 : vector<64x512xf32>
    %c0_6 = arith.constant 0 : index
    %c0_7 = arith.constant 0 : index
    %9 = vector.load %arg10[%c0_6, %c0_7] : memref<64x512xf32, #tpu.memory_space<vmem>>, vector<64x512xf32>
    tpu.vector_store %arg10[%c0_6, %c0_7], %8 {strides = array<i32>} : memref<64x512xf32, #tpu.memory_space<vmem>>, vector<64x512xf32>,
    %c0_8 = arith.constant 0 : index
    %c0_9 = arith.constant 0 : index
    %10 = vector.load %arg11[%c0_8, %c0_9] : memref<8x128xf32, #tpu.memory_space<vmem>>, vector<8x128xf32>
    %c0_10 = arith.constant 0 : index
    %c0_11 = arith.constant 0 : index
    %11 = vector.load %arg12[%c0_10, %c0_11] : memref<8x128xf32, #tpu.memory_space<vmem>>, vector<8x128xf32>
    %c0_i32_12 = arith.constant 0 : i32
    %c8_i32 = arith.constant 8 : i32
    %12 = arith.muli %c0_i32_12, %c8_i32 : i32
    %13 = tpu.assume_multiple %12, 8 : i32
    %14 = arith.index_cast %13 : i32 to index
    %c0_13 = arith.constant 0 : index
    %15 = vector.load %arg10[%14, %c0_13] : memref<64x512xf32, #tpu.memory_space<vmem>>, vector<8x512xf32>
    %c0_14 = arith.constant 0 : index
    %c0_15 = arith.constant 0 : index
    %16 = vector.load %arg4[%c0_14, %c0_15] : memref<128x512xf32, #tpu.memory_space<vmem>>, vector<128x512xf32>
    %cst_16 = arith.constant dense<0.000000e+00> : vector<8x512xf32>
    %17 = tpu.matmul %10, %16, %cst_16 {dimension_numbers = #tpu.dot_dimension_numbers<[1], [0], [0], [1], [0, 0, 1, 1], [], []>} : vector<8x128xf32>, vector<128x512xf32>, vector<8x512xf32> -> vector<8x512xf32>
    %18 = arith.addf %15, %17 : vector<8x512xf32>
    %19 = vector.extract_strided_slice %18 {offsets = [0, 0], sizes = [8, 128], strides = [1, 1]} : vector<8x512xf32> to vector<8x128xf32>
    %20 = arith.negf %19 : vector<8x128xf32>
    %21 = math.exp %20 : vector<8x128xf32>
    %cst_17 = arith.constant 1.000000e+00 : f32
    %22 = vector.broadcast %cst_17 : f32 to vector<8x128xf32>
    %23 = arith.addf %22, %21 : vector<8x128xf32>
    %24 = arith.divf %22, %23 : vector<8x128xf32>
    %25 = vector.extract_strided_slice %18 {offsets = [0, 128], sizes = [8, 128], strides = [1, 1]} : vector<8x512xf32> to vector<8x128xf32>
    %26 = arith.negf %25 : vector<8x128xf32>
    %27 = math.exp %26 : vector<8x128xf32>
    %cst_18 = arith.constant 1.000000e+00 : f32
    %28 = vector.broadcast %cst_18 : f32 to vector<8x128xf32>
    %29 = arith.addf %28, %27 : vector<8x128xf32>
    %30 = arith.divf %28, %29 : vector<8x128xf32>
    %31 = vector.extract_strided_slice %18 {offsets = [0, 256], sizes = [8, 128], strides = [1, 1]} : vector<8x512xf32> to vector<8x128xf32>
    %32 = math.tanh %31 : vector<8x128xf32>
    %33 = vector.extract_strided_slice %18 {offsets = [0, 384], sizes = [8, 128], strides = [1, 1]} : vector<8x512xf32> to vector<8x128xf32>
    %34 = arith.negf %33 : vector<8x128xf32>
    %35 = math.exp %34 : vector<8x128xf32>
    %cst_19 = arith.constant 1.000000e+00 : f32
    %36 = vector.broadcast %cst_19 : f32 to vector<8x128xf32>
    %37 = arith.addf %36, %35 : vector<8x128xf32>
    %38 = arith.divf %36, %37 : vector<8x128xf32>
    %39 = arith.mulf %30, %11 : vector<8x128xf32>
    %40 = arith.mulf %24, %32 : vector<8x128xf32>
    %41 = arith.addf %39, %40 : vector<8x128xf32>
    %42 = math.tanh %41 : vector<8x128xf32>
    %43 = arith.mulf %38, %42 : vector<8x128xf32>
    %44 = arith.index_cast %13 : i32 to index
    %c0_20 = arith.constant 0 : index
    %45 = vector.load %arg7[%44, %c0_20] : memref<64x128xf32, #tpu.memory_space<vmem>>, vector<8x128xf32>
    tpu.vector_store %arg7[%44, %c0_20], %43 {strides = array<i32>} : memref<64x128xf32, #tpu.memory_space<vmem>>, vector<8x128xf32>,
    %c1_i32 = arith.constant 1 : i32
    %c8_i32_21 = arith.constant 8 : i32
    %46 = arith.muli %c1_i32, %c8_i32_21 : i32
    %47 = tpu.assume_multiple %46, 8 : i32
    %48 = arith.index_cast %47 : i32 to index
    %c0_22 = arith.constant 0 : index
    %49 = vector.load %arg10[%48, %c0_22] : memref<64x512xf32, #tpu.memory_space<vmem>>, vector<8x512xf32>
    %c0_23 = arith.constant 0 : index
    %c0_24 = arith.constant 0 : index
    %50 = vector.load %arg4[%c0_23, %c0_24] : memref<128x512xf32, #tpu.memory_space<vmem>>, vector<128x512xf32>
    %cst_25 = arith.constant dense<0.000000e+00> : vector<8x512xf32>
    %51 = tpu.matmul %43, %50, %cst_25 {dimension_numbers = #tpu.dot_dimension_numbers<[1], [0], [0], [1], [0, 0, 1, 1], [], []>} : vector<8x128xf32>, vector<128x512xf32>, vector<8x512xf32> -> vector<8x512xf32>
    %52 = arith.addf %49, %51 : vector<8x512xf32>
    %53 = vector.extract_strided_slice %52 {offsets = [0, 0], sizes = [8, 128], strides = [1, 1]} : vector<8x512xf32> to vector<8x128xf32>
    %54 = arith.negf %53 : vector<8x128xf32>
    %55 = math.exp %54 : vector<8x128xf32>
    %cst_26 = arith.constant 1.000000e+00 : f32
    %56 = vector.broadcast %cst_26 : f32 to vector<8x128xf32>
    %57 = arith.addf %56, %55 : vector<8x128xf32>
    %58 = arith.divf %56, %57 : vector<8x128xf32>
    %59 = vector.extract_strided_slice %52 {offsets = [0, 128], sizes = [8, 128], strides = [1, 1]} : vector<8x512xf32> to vector<8x128xf32>
    %60 = arith.negf %59 : vector<8x128xf32>
    %61 = math.exp %60 : vector<8x128xf32>
    %cst_27 = arith.constant 1.000000e+00 : f32
    %62 = vector.broadcast %cst_27 : f32 to vector<8x128xf32>
    %63 = arith.addf %62, %61 : vector<8x128xf32>
    %64 = arith.divf %62, %63 : vector<8x128xf32>
    %65 = vector.extract_strided_slice %52 {offsets = [0, 256], sizes = [8, 128], strides = [1, 1]} : vector<8x512xf32> to vector<8x128xf32>
    %66 = math.tanh %65 : vector<8x128xf32>
    %67 = vector.extract_strided_slice %52 {offsets = [0, 384], sizes = [8, 128], strides = [1, 1]} : vector<8x512xf32> to vector<8x128xf32>
    %68 = arith.negf %67 : vector<8x128xf32>
    %69 = math.exp %68 : vector<8x128xf32>
    %cst_28 = arith.constant 1.000000e+00 : f32
    %70 = vector.broadcast %cst_28 : f32 to vector<8x128xf32>
    %71 = arith.addf %70, %69 : vector<8x128xf32>
    %72 = arith.divf %70, %71 : vector<8x128xf32>
    %73 = arith.mulf %64, %41 : vector<8x128xf32>
    %74 = arith.mulf %58, %66 : vector<8x128xf32>
    %75 = arith.addf %73, %74 : vector<8x128xf32>
    %76 = math.tanh %75 : vector<8x128xf32>
    %77 = arith.mulf %72, %76 : vector<8x128xf32>
    %78 = arith.index_cast %47 : i32 to index
    %c0_29 = arith.constant 0 : index
    %79 = vector.load %arg7[%78, %c0_29] : memref<64x128xf32, #tpu.memory_space<vmem>>, vector<8x128xf32>
    tpu.vector_store %arg7[%78, %c0_29], %77 {strides = array<i32>} : memref<64x128xf32, #tpu.memory_space<vmem>>, vector<8x128xf32>,
    %c2_i32 = arith.constant 2 : i32
    %c8_i32_30 = arith.constant 8 : i32
    %80 = arith.muli %c2_i32, %c8_i32_30 : i32
    %81 = tpu.assume_multiple %80, 8 : i32
    %82 = arith.index_cast %81 : i32 to index
    %c0_31 = arith.constant 0 : index
    %83 = vector.load %arg10[%82, %c0_31] : memref<64x512xf32, #tpu.memory_space<vmem>>, vector<8x512xf32>
    %c0_32 = arith.constant 0 : index
    %c0_33 = arith.constant 0 : index
    %84 = vector.load %arg4[%c0_32, %c0_33] : memref<128x512xf32, #tpu.memory_space<vmem>>, vector<128x512xf32>
    %cst_34 = arith.constant dense<0.000000e+00> : vector<8x512xf32>
    %85 = tpu.matmul %77, %84, %cst_34 {dimension_numbers = #tpu.dot_dimension_numbers<[1], [0], [0], [1], [0, 0, 1, 1], [], []>} : vector<8x128xf32>, vector<128x512xf32>, vector<8x512xf32> -> vector<8x512xf32>
    %86 = arith.addf %83, %85 : vector<8x512xf32>
    %87 = vector.extract_strided_slice %86 {offsets = [0, 0], sizes = [8, 128], strides = [1, 1]} : vector<8x512xf32> to vector<8x128xf32>
    %88 = arith.negf %87 : vector<8x128xf32>
    %89 = math.exp %88 : vector<8x128xf32>
    %cst_35 = arith.constant 1.000000e+00 : f32
    %90 = vector.broadcast %cst_35 : f32 to vector<8x128xf32>
    %91 = arith.addf %90, %89 : vector<8x128xf32>
    %92 = arith.divf %90, %91 : vector<8x128xf32>
    %93 = vector.extract_strided_slice %86 {offsets = [0, 128], sizes = [8, 128], strides = [1, 1]} : vector<8x512xf32> to vector<8x128xf32>
    %94 = arith.negf %93 : vector<8x128xf32>
    %95 = math.exp %94 : vector<8x128xf32>
    %cst_36 = arith.constant 1.000000e+00 : f32
    %96 = vector.broadcast %cst_36 : f32 to vector<8x128xf32>
    %97 = arith.addf %96, %95 : vector<8x128xf32>
    %98 = arith.divf %96, %97 : vector<8x128xf32>
    %99 = vector.extract_strided_slice %86 {offsets = [0, 256], sizes = [8, 128], strides = [1, 1]} : vector<8x512xf32> to vector<8x128xf32>
    %100 = math.tanh %99 : vector<8x128xf32>
    %101 = vector.extract_strided_slice %86 {offsets = [0, 384], sizes = [8, 128], strides = [1, 1]} : vector<8x512xf32> to vector<8x128xf32>
    %102 = arith.negf %101 : vector<8x128xf32>
    %103 = math.exp %102 : vector<8x128xf32>
    %cst_37 = arith.constant 1.000000e+00 : f32
    %104 = vector.broadcast %cst_37 : f32 to vector<8x128xf32>
    %105 = arith.addf %104, %103 : vector<8x128xf32>
    %106 = arith.divf %104, %105 : vector<8x128xf32>
    %107 = arith.mulf %98, %75 : vector<8x128xf32>
    %108 = arith.mulf %92, %100 : vector<8x128xf32>
    %109 = arith.addf %107, %108 : vector<8x128xf32>
    %110 = math.tanh %109 : vector<8x128xf32>
    %111 = arith.mulf %106, %110 : vector<8x128xf32>
    %112 = arith.index_cast %81 : i32 to index
    %c0_38 = arith.constant 0 : index
    %113 = vector.load %arg7[%112, %c0_38] : memref<64x128xf32, #tpu.memory_space<vmem>>, vector<8x128xf32>
    tpu.vector_store %arg7[%112, %c0_38], %111 {strides = array<i32>} : memref<64x128xf32, #tpu.memory_space<vmem>>, vector<8x128xf32>,
    %c3_i32 = arith.constant 3 : i32
    %c8_i32_39 = arith.constant 8 : i32
    %114 = arith.muli %c3_i32, %c8_i32_39 : i32
    %115 = tpu.assume_multiple %114, 8 : i32
    %116 = arith.index_cast %115 : i32 to index
    %c0_40 = arith.constant 0 : index
    %117 = vector.load %arg10[%116, %c0_40] : memref<64x512xf32, #tpu.memory_space<vmem>>, vector<8x512xf32>
    %c0_41 = arith.constant 0 : index
    %c0_42 = arith.constant 0 : index
    %118 = vector.load %arg4[%c0_41, %c0_42] : memref<128x512xf32, #tpu.memory_space<vmem>>, vector<128x512xf32>
    %cst_43 = arith.constant dense<0.000000e+00> : vector<8x512xf32>
    %119 = tpu.matmul %111, %118, %cst_43 {dimension_numbers = #tpu.dot_dimension_numbers<[1], [0], [0], [1], [0, 0, 1, 1], [], []>} : vector<8x128xf32>, vector<128x512xf32>, vector<8x512xf32> -> vector<8x512xf32>
    %120 = arith.addf %117, %119 : vector<8x512xf32>
    %121 = vector.extract_strided_slice %120 {offsets = [0, 0], sizes = [8, 128], strides = [1, 1]} : vector<8x512xf32> to vector<8x128xf32>
    %122 = arith.negf %121 : vector<8x128xf32>
    %123 = math.exp %122 : vector<8x128xf32>
    %cst_44 = arith.constant 1.000000e+00 : f32
    %124 = vector.broadcast %cst_44 : f32 to vector<8x128xf32>
    %125 = arith.addf %124, %123 : vector<8x128xf32>
    %126 = arith.divf %124, %125 : vector<8x128xf32>
    %127 = vector.extract_strided_slice %120 {offsets = [0, 128], sizes = [8, 128], strides = [1, 1]} : vector<8x512xf32> to vector<8x128xf32>
    %128 = arith.negf %127 : vector<8x128xf32>
    %129 = math.exp %128 : vector<8x128xf32>
    %cst_45 = arith.constant 1.000000e+00 : f32
    %130 = vector.broadcast %cst_45 : f32 to vector<8x128xf32>
    %131 = arith.addf %130, %129 : vector<8x128xf32>
    %132 = arith.divf %130, %131 : vector<8x128xf32>
    %133 = vector.extract_strided_slice %120 {offsets = [0, 256], sizes = [8, 128], strides = [1, 1]} : vector<8x512xf32> to vector<8x128xf32>
    %134 = math.tanh %133 : vector<8x128xf32>
    %135 = vector.extract_strided_slice %120 {offsets = [0, 384], sizes = [8, 128], strides = [1, 1]} : vector<8x512xf32> to vector<8x128xf32>
    %136 = arith.negf %135 : vector<8x128xf32>
    %137 = math.exp %136 : vector<8x128xf32>
    %cst_46 = arith.constant 1.000000e+00 : f32
    %138 = vector.broadcast %cst_46 : f32 to vector<8x128xf32>
    %139 = arith.addf %138, %137 : vector<8x128xf32>
    %140 = arith.divf %138, %139 : vector<8x128xf32>
    %141 = arith.mulf %132, %109 : vector<8x128xf32>
    %142 = arith.mulf %126, %134 : vector<8x128xf32>
    %143 = arith.addf %141, %142 : vector<8x128xf32>
    %144 = math.tanh %143 : vector<8x128xf32>
    %145 = arith.mulf %140, %144 : vector<8x128xf32>
    %146 = arith.index_cast %115 : i32 to index
    %c0_47 = arith.constant 0 : index
    %147 = vector.load %arg7[%146, %c0_47] : memref<64x128xf32, #tpu.memory_space<vmem>>, vector<8x128xf32>
    tpu.vector_store %arg7[%146, %c0_47], %145 {strides = array<i32>} : memref<64x128xf32, #tpu.memory_space<vmem>>, vector<8x128xf32>,
    %c4_i32 = arith.constant 4 : i32
    %c8_i32_48 = arith.constant 8 : i32
    %148 = arith.muli %c4_i32, %c8_i32_48 : i32
    %149 = tpu.assume_multiple %148, 8 : i32
    %150 = arith.index_cast %149 : i32 to index
    %c0_49 = arith.constant 0 : index
    %151 = vector.load %arg10[%150, %c0_49] : memref<64x512xf32, #tpu.memory_space<vmem>>, vector<8x512xf32>
    %c0_50 = arith.constant 0 : index
    %c0_51 = arith.constant 0 : index
    %152 = vector.load %arg4[%c0_50, %c0_51] : memref<128x512xf32, #tpu.memory_space<vmem>>, vector<128x512xf32>
    %cst_52 = arith.constant dense<0.000000e+00> : vector<8x512xf32>
    %153 = tpu.matmul %145, %152, %cst_52 {dimension_numbers = #tpu.dot_dimension_numbers<[1], [0], [0], [1], [0, 0, 1, 1], [], []>} : vector<8x128xf32>, vector<128x512xf32>, vector<8x512xf32> -> vector<8x512xf32>
    %154 = arith.addf %151, %153 : vector<8x512xf32>
    %155 = vector.extract_strided_slice %154 {offsets = [0, 0], sizes = [8, 128], strides = [1, 1]} : vector<8x512xf32> to vector<8x128xf32>
    %156 = arith.negf %155 : vector<8x128xf32>
    %157 = math.exp %156 : vector<8x128xf32>
    %cst_53 = arith.constant 1.000000e+00 : f32
    %158 = vector.broadcast %cst_53 : f32 to vector<8x128xf32>
    %159 = arith.addf %158, %157 : vector<8x128xf32>
    %160 = arith.divf %158, %159 : vector<8x128xf32>
    %161 = vector.extract_strided_slice %154 {offsets = [0, 128], sizes = [8, 128], strides = [1, 1]} : vector<8x512xf32> to vector<8x128xf32>
    %162 = arith.negf %161 : vector<8x128xf32>
    %163 = math.exp %162 : vector<8x128xf32>
    %cst_54 = arith.constant 1.000000e+00 : f32
    %164 = vector.broadcast %cst_54 : f32 to vector<8x128xf32>
    %165 = arith.addf %164, %163 : vector<8x128xf32>
    %166 = arith.divf %164, %165 : vector<8x128xf32>
    %167 = vector.extract_strided_slice %154 {offsets = [0, 256], sizes = [8, 128], strides = [1, 1]} : vector<8x512xf32> to vector<8x128xf32>
    %168 = math.tanh %167 : vector<8x128xf32>
    %169 = vector.extract_strided_slice %154 {offsets = [0, 384], sizes = [8, 128], strides = [1, 1]} : vector<8x512xf32> to vector<8x128xf32>
    %170 = arith.negf %169 : vector<8x128xf32>
    %171 = math.exp %170 : vector<8x128xf32>
    %cst_55 = arith.constant 1.000000e+00 : f32
    %172 = vector.broadcast %cst_55 : f32 to vector<8x128xf32>
    %173 = arith.addf %172, %171 : vector<8x128xf32>
    %174 = arith.divf %172, %173 : vector<8x128xf32>
    %175 = arith.mulf %166, %143 : vector<8x128xf32>
    %176 = arith.mulf %160, %168 : vector<8x128xf32>
    %177 = arith.addf %175, %176 : vector<8x128xf32>
    %178 = math.tanh %177 : vector<8x128xf32>
    %179 = arith.mulf %174, %178 : vector<8x128xf32>
    %180 = arith.index_cast %149 : i32 to index
    %c0_56 = arith.constant 0 : index
    %181 = vector.load %arg7[%180, %c0_56] : memref<64x128xf32, #tpu.memory_space<vmem>>, vector<8x128xf32>
    tpu.vector_store %arg7[%180, %c0_56], %179 {strides = array<i32>} : memref<64x128xf32, #tpu.memory_space<vmem>>, vector<8x128xf32>,
    %c5_i32 = arith.constant 5 : i32
    %c8_i32_57 = arith.constant 8 : i32
    %182 = arith.muli %c5_i32, %c8_i32_57 : i32
    %183 = tpu.assume_multiple %182, 8 : i32
    %184 = arith.index_cast %183 : i32 to index
    %c0_58 = arith.constant 0 : index
    %185 = vector.load %arg10[%184, %c0_58] : memref<64x512xf32, #tpu.memory_space<vmem>>, vector<8x512xf32>
    %c0_59 = arith.constant 0 : index
    %c0_60 = arith.constant 0 : index
    %186 = vector.load %arg4[%c0_59, %c0_60] : memref<128x512xf32, #tpu.memory_space<vmem>>, vector<128x512xf32>
    %cst_61 = arith.constant dense<0.000000e+00> : vector<8x512xf32>
    %187 = tpu.matmul %179, %186, %cst_61 {dimension_numbers = #tpu.dot_dimension_numbers<[1], [0], [0], [1], [0, 0, 1, 1], [], []>} : vector<8x128xf32>, vector<128x512xf32>, vector<8x512xf32> -> vector<8x512xf32>
    %188 = arith.addf %185, %187 : vector<8x512xf32>
    %189 = vector.extract_strided_slice %188 {offsets = [0, 0], sizes = [8, 128], strides = [1, 1]} : vector<8x512xf32> to vector<8x128xf32>
    %190 = arith.negf %189 : vector<8x128xf32>
    %191 = math.exp %190 : vector<8x128xf32>
    %cst_62 = arith.constant 1.000000e+00 : f32
    %192 = vector.broadcast %cst_62 : f32 to vector<8x128xf32>
    %193 = arith.addf %192, %191 : vector<8x128xf32>
    %194 = arith.divf %192, %193 : vector<8x128xf32>
    %195 = vector.extract_strided_slice %188 {offsets = [0, 128], sizes = [8, 128], strides = [1, 1]} : vector<8x512xf32> to vector<8x128xf32>
    %196 = arith.negf %195 : vector<8x128xf32>
    %197 = math.exp %196 : vector<8x128xf32>
    %cst_63 = arith.constant 1.000000e+00 : f32
    %198 = vector.broadcast %cst_63 : f32 to vector<8x128xf32>
    %199 = arith.addf %198, %197 : vector<8x128xf32>
    %200 = arith.divf %198, %199 : vector<8x128xf32>
    %201 = vector.extract_strided_slice %188 {offsets = [0, 256], sizes = [8, 128], strides = [1, 1]} : vector<8x512xf32> to vector<8x128xf32>
    %202 = math.tanh %201 : vector<8x128xf32>
    %203 = vector.extract_strided_slice %188 {offsets = [0, 384], sizes = [8, 128], strides = [1, 1]} : vector<8x512xf32> to vector<8x128xf32>
    %204 = arith.negf %203 : vector<8x128xf32>
    %205 = math.exp %204 : vector<8x128xf32>
    %cst_64 = arith.constant 1.000000e+00 : f32
    %206 = vector.broadcast %cst_64 : f32 to vector<8x128xf32>
    %207 = arith.addf %206, %205 : vector<8x128xf32>
    %208 = arith.divf %206, %207 : vector<8x128xf32>
    %209 = arith.mulf %200, %177 : vector<8x128xf32>
    %210 = arith.mulf %194, %202 : vector<8x128xf32>
    %211 = arith.addf %209, %210 : vector<8x128xf32>
    %212 = math.tanh %211 : vector<8x128xf32>
    %213 = arith.mulf %208, %212 : vector<8x128xf32>
    %214 = arith.index_cast %183 : i32 to index
    %c0_65 = arith.constant 0 : index
    %215 = vector.load %arg7[%214, %c0_65] : memref<64x128xf32, #tpu.memory_space<vmem>>, vector<8x128xf32>
    tpu.vector_store %arg7[%214, %c0_65], %213 {strides = array<i32>} : memref<64x128xf32, #tpu.memory_space<vmem>>, vector<8x128xf32>,
    %c6_i32 = arith.constant 6 : i32
    %c8_i32_66 = arith.constant 8 : i32
    %216 = arith.muli %c6_i32, %c8_i32_66 : i32
    %217 = tpu.assume_multiple %216, 8 : i32
    %218 = arith.index_cast %217 : i32 to index
    %c0_67 = arith.constant 0 : index
    %219 = vector.load %arg10[%218, %c0_67] : memref<64x512xf32, #tpu.memory_space<vmem>>, vector<8x512xf32>
    %c0_68 = arith.constant 0 : index
    %c0_69 = arith.constant 0 : index
    %220 = vector.load %arg4[%c0_68, %c0_69] : memref<128x512xf32, #tpu.memory_space<vmem>>, vector<128x512xf32>
    %cst_70 = arith.constant dense<0.000000e+00> : vector<8x512xf32>
    %221 = tpu.matmul %213, %220, %cst_70 {dimension_numbers = #tpu.dot_dimension_numbers<[1], [0], [0], [1], [0, 0, 1, 1], [], []>} : vector<8x128xf32>, vector<128x512xf32>, vector<8x512xf32> -> vector<8x512xf32>
    %222 = arith.addf %219, %221 : vector<8x512xf32>
    %223 = vector.extract_strided_slice %222 {offsets = [0, 0], sizes = [8, 128], strides = [1, 1]} : vector<8x512xf32> to vector<8x128xf32>
    %224 = arith.negf %223 : vector<8x128xf32>
    %225 = math.exp %224 : vector<8x128xf32>
    %cst_71 = arith.constant 1.000000e+00 : f32
    %226 = vector.broadcast %cst_71 : f32 to vector<8x128xf32>
    %227 = arith.addf %226, %225 : vector<8x128xf32>
    %228 = arith.divf %226, %227 : vector<8x128xf32>
    %229 = vector.extract_strided_slice %222 {offsets = [0, 128], sizes = [8, 128], strides = [1, 1]} : vector<8x512xf32> to vector<8x128xf32>
    %230 = arith.negf %229 : vector<8x128xf32>
    %231 = math.exp %230 : vector<8x128xf32>
    %cst_72 = arith.constant 1.000000e+00 : f32
    %232 = vector.broadcast %cst_72 : f32 to vector<8x128xf32>
    %233 = arith.addf %232, %231 : vector<8x128xf32>
    %234 = arith.divf %232, %233 : vector<8x128xf32>
    %235 = vector.extract_strided_slice %222 {offsets = [0, 256], sizes = [8, 128], strides = [1, 1]} : vector<8x512xf32> to vector<8x128xf32>
    %236 = math.tanh %235 : vector<8x128xf32>
    %237 = vector.extract_strided_slice %222 {offsets = [0, 384], sizes = [8, 128], strides = [1, 1]} : vector<8x512xf32> to vector<8x128xf32>
    %238 = arith.negf %237 : vector<8x128xf32>
    %239 = math.exp %238 : vector<8x128xf32>
    %cst_73 = arith.constant 1.000000e+00 : f32
    %240 = vector.broadcast %cst_73 : f32 to vector<8x128xf32>
    %241 = arith.addf %240, %239 : vector<8x128xf32>
    %242 = arith.divf %240, %241 : vector<8x128xf32>
    %243 = arith.mulf %234, %211 : vector<8x128xf32>
    %244 = arith.mulf %228, %236 : vector<8x128xf32>
    %245 = arith.addf %243, %244 : vector<8x128xf32>
    %246 = math.tanh %245 : vector<8x128xf32>
    %247 = arith.mulf %242, %246 : vector<8x128xf32>
    %248 = arith.index_cast %217 : i32 to index
    %c0_74 = arith.constant 0 : index
    %249 = vector.load %arg7[%248, %c0_74] : memref<64x128xf32, #tpu.memory_space<vmem>>, vector<8x128xf32>
    tpu.vector_store %arg7[%248, %c0_74], %247 {strides = array<i32>} : memref<64x128xf32, #tpu.memory_space<vmem>>, vector<8x128xf32>,
    %c7_i32 = arith.constant 7 : i32
    %c8_i32_75 = arith.constant 8 : i32
    %250 = arith.muli %c7_i32, %c8_i32_75 : i32
    %251 = tpu.assume_multiple %250, 8 : i32
    %252 = arith.index_cast %251 : i32 to index
    %c0_76 = arith.constant 0 : index
    %253 = vector.load %arg10[%252, %c0_76] : memref<64x512xf32, #tpu.memory_space<vmem>>, vector<8x512xf32>
    %c0_77 = arith.constant 0 : index
    %c0_78 = arith.constant 0 : index
    %254 = vector.load %arg4[%c0_77, %c0_78] : memref<128x512xf32, #tpu.memory_space<vmem>>, vector<128x512xf32>
    %cst_79 = arith.constant dense<0.000000e+00> : vector<8x512xf32>
    %255 = tpu.matmul %247, %254, %cst_79 {dimension_numbers = #tpu.dot_dimension_numbers<[1], [0], [0], [1], [0, 0, 1, 1], [], []>} : vector<8x128xf32>, vector<128x512xf32>, vector<8x512xf32> -> vector<8x512xf32>
    %256 = arith.addf %253, %255 : vector<8x512xf32>
    %257 = vector.extract_strided_slice %256 {offsets = [0, 0], sizes = [8, 128], strides = [1, 1]} : vector<8x512xf32> to vector<8x128xf32>
    %258 = arith.negf %257 : vector<8x128xf32>
    %259 = math.exp %258 : vector<8x128xf32>
    %cst_80 = arith.constant 1.000000e+00 : f32
    %260 = vector.broadcast %cst_80 : f32 to vector<8x128xf32>
    %261 = arith.addf %260, %259 : vector<8x128xf32>
    %262 = arith.divf %260, %261 : vector<8x128xf32>
    %263 = vector.extract_strided_slice %256 {offsets = [0, 128], sizes = [8, 128], strides = [1, 1]} : vector<8x512xf32> to vector<8x128xf32>
    %264 = arith.negf %263 : vector<8x128xf32>
    %265 = math.exp %264 : vector<8x128xf32>
    %cst_81 = arith.constant 1.000000e+00 : f32
    %266 = vector.broadcast %cst_81 : f32 to vector<8x128xf32>
    %267 = arith.addf %266, %265 : vector<8x128xf32>
    %268 = arith.divf %266, %267 : vector<8x128xf32>
    %269 = vector.extract_strided_slice %256 {offsets = [0, 256], sizes = [8, 128], strides = [1, 1]} : vector<8x512xf32> to vector<8x128xf32>
    %270 = math.tanh %269 : vector<8x128xf32>
    %271 = vector.extract_strided_slice %256 {offsets = [0, 384], sizes = [8, 128], strides = [1, 1]} : vector<8x512xf32> to vector<8x128xf32>
    %272 = arith.negf %271 : vector<8x128xf32>
    %273 = math.exp %272 : vector<8x128xf32>
    %cst_82 = arith.constant 1.000000e+00 : f32
    %274 = vector.broadcast %cst_82 : f32 to vector<8x128xf32>
    %275 = arith.addf %274, %273 : vector<8x128xf32>
    %276 = arith.divf %274, %275 : vector<8x128xf32>
    %277 = arith.mulf %268, %245 : vector<8x128xf32>
    %278 = arith.mulf %262, %270 : vector<8x128xf32>
    %279 = arith.addf %277, %278 : vector<8x128xf32>
    %280 = math.tanh %279 : vector<8x128xf32>
    %281 = arith.mulf %276, %280 : vector<8x128xf32>
    %282 = arith.index_cast %251 : i32 to index
    %c0_83 = arith.constant 0 : index
    %283 = vector.load %arg7[%282, %c0_83] : memref<64x128xf32, #tpu.memory_space<vmem>>, vector<8x128xf32>
    tpu.vector_store %arg7[%282, %c0_83], %281 {strides = array<i32>} : memref<64x128xf32, #tpu.memory_space<vmem>>, vector<8x128xf32>,
    %c8_i32_84 = arith.constant 8 : i32
    %c0_85 = arith.constant 0 : index
    %c0_86 = arith.constant 0 : index
    %284 = vector.load %arg11[%c0_85, %c0_86] : memref<8x128xf32, #tpu.memory_space<vmem>>, vector<8x128xf32>
    tpu.vector_store %arg11[%c0_85, %c0_86], %281 {strides = array<i32>} : memref<8x128xf32, #tpu.memory_space<vmem>>, vector<8x128xf32>,
    %c0_87 = arith.constant 0 : index
    %c0_88 = arith.constant 0 : index
    %285 = vector.load %arg12[%c0_87, %c0_88] : memref<8x128xf32, #tpu.memory_space<vmem>>, vector<8x128xf32>
    tpu.vector_store %arg12[%c0_87, %c0_88], %279 {strides = array<i32>} : memref<8x128xf32, #tpu.memory_space<vmem>>, vector<8x128xf32>,
    %c0_89 = arith.constant 0 : index
    %c0_90 = arith.constant 0 : index
    %286 = vector.load %arg8[%c0_89, %c0_90] : memref<8x128xf32, #tpu.memory_space<vmem>>, vector<8x128xf32>
    tpu.vector_store %arg8[%c0_89, %c0_90], %281 {strides = array<i32>} : memref<8x128xf32, #tpu.memory_space<vmem>>, vector<8x128xf32>,
    %c0_91 = arith.constant 0 : index
    %c0_92 = arith.constant 0 : index
    %287 = vector.load %arg9[%c0_91, %c0_92] : memref<8x128xf32, #tpu.memory_space<vmem>>, vector<8x128xf32>
    tpu.vector_store %arg9[%c0_91, %c0_92], %279 {strides = array<i32>} : memref<8x128xf32, #tpu.memory_space<vmem>>, vector<8x128xf32>,
    return
  }
  func.func @transform_0(%arg0: i32) -> (i32, i32) {
    %c0_i32 = arith.constant 0 : i32
    %c0_i32_0 = arith.constant 0 : i32
    return %arg0, %c0_i32 : i32, i32
  }
  func.func @transform_1(%arg0: i32) -> (i32, i32) {
    %c0_i32 = arith.constant 0 : i32
    %c0_i32_0 = arith.constant 0 : i32
    %c0_i32_1 = arith.constant 0 : i32
    return %c0_i32, %c0_i32_0 : i32, i32
  }
  func.func @transform_2(%arg0: i32) -> (i32, i32) {
    %c0_i32 = arith.constant 0 : i32
    %c0_i32_0 = arith.constant 0 : i32
    %c0_i32_1 = arith.constant 0 : i32
    return %c0_i32, %c0_i32_0 : i32, i32
  }
  func.func @transform_3(%arg0: i32) -> (i32, i32) {
    %c0_i32 = arith.constant 0 : i32
    %c0_i32_0 = arith.constant 0 : i32
    %c0_i32_1 = arith.constant 0 : i32
    return %c0_i32, %c0_i32_0 : i32, i32
  }
  func.func @transform_4(%arg0: i32) -> (i32, i32) {
    %c0_i32 = arith.constant 0 : i32
    %c0_i32_0 = arith.constant 0 : i32
    %c0_i32_1 = arith.constant 0 : i32
    return %c0_i32, %c0_i32_0 : i32, i32
  }
  func.func @transform_5(%arg0: i32) -> (i32, i32) {
    %c0_i32 = arith.constant 0 : i32
    %c0_i32_0 = arith.constant 0 : i32
    %c0_i32_1 = arith.constant 0 : i32
    return %c0_i32, %c0_i32_0 : i32, i32
  }
  func.func @transform_6(%arg0: i32) -> (i32, i32) {
    %c0_i32 = arith.constant 0 : i32
    %c0_i32_0 = arith.constant 0 : i32
    return %arg0, %c0_i32 : i32, i32
  }
  func.func @transform_7(%arg0: i32) -> (i32, i32) {
    %c0_i32 = arith.constant 0 : i32
    %c0_i32_0 = arith.constant 0 : i32
    %c0_i32_1 = arith.constant 0 : i32
    return %c0_i32, %c0_i32_0 : i32, i32
  }
  func.func @transform_8(%arg0: i32) -> (i32, i32) {
    %c0_i32 = arith.constant 0 : i32
    %c0_i32_0 = arith.constant 0 : i32
    %c0_i32_1 = arith.constant 0 : i32
    return %c0_i32, %c0_i32_0 : i32, i32
  }
}

</mosaic_0001>

<llo_original>
// kernel: tpu_custom_call.1
$region0: #{tpu_custom_call.1}
  #allocation0 [shape = 'u32[]', space=smem, size = 0x4, offset = 0x4, fixed_abs, tag = 'smem constant byte address 0x4 - core index']
  #allocation1 [shape = 'u32[144,128]{1,0:T(1,128)}', space=vmem, size = 0x12000, scoped, tag = 'internal scratch']
  #allocation2 [shape = 'f32[64,512]{1,0:T(8,128)}', space=vmem, size = 0x20000, scoped, tag = 'scratch operand']
  #allocation3 [shape = 'f32[8,128]{1,0:T(8,128)}', space=vmem, size = 0x1000, scoped, tag = 'scratch operand']
  #allocation4 [shape = 'f32[8,128]{1,0:T(8,128)}', space=vmem, size = 0x1000, scoped, tag = 'scratch operand']
  %s0 = inlined_call_operand.vmem [shape: f32[64,32], index: 0, kind: input, shape index: {}]
  %s1 = inlined_call_operand.hbm [shape: f32[32,512], index: 1, kind: input, shape index: {}]
  %s2 = inlined_call_operand.vmem [shape: f32[1,512], index: 2, kind: input, shape index: {}]
  %s3 = inlined_call_operand.hbm [shape: f32[128,512], index: 3, kind: input, shape index: {}]
  %s4 = inlined_call_operand.vmem [shape: f32[8,128], index: 4, kind: input, shape index: {}]
  %s5 = inlined_call_operand.vmem [shape: f32[8,128], index: 5, kind: input, shape index: {}]
  %s6 = inlined_call_operand.hbm [shape: f32[64,128], index: 6, kind: output, shape index: {0}]
  %s7 = inlined_call_operand.hbm [shape: f32[8,128], index: 7, kind: output, shape index: {1}]
  %s8 = inlined_call_operand.hbm [shape: f32[8,128], index: 8, kind: output, shape index: {2}]
  %9 = xla_tuple %s6, %s7, %s8
  %s10 = sld [smem:[#allocation0]]
  $region62: #{tpu_custom_call.1} parent=0
    _
  %s12 = ssub.s32 1, %s10
  %s13 = scalar_select 0, %s12, %s10
  $region1: #{tpu_custom_call.1} parent=0
    #allocation5 [shape = 'u8[65536]{0}', space=vmem, size = 0x10000, scoped, tag = 'input window, operand 1, single buffered']
    #allocation6 [shape = 's32[1]{0}', space=sflag, size = 0x4, scoped, tag = 'scoped memory for tpu_custom_call.1']
    #allocation7 [shape = 's32[1]{0}', space=sflag, size = 0x4, scoped, tag = 'scoped memory for tpu_custom_call.1']
    #allocation8 [shape = 'u8[262144]{0}', space=vmem, size = 0x40000, scoped, tag = 'input window, operand 3, single buffered']
    #allocation9 [shape = 's32[1]{0}', space=sflag, size = 0x4, scoped, tag = 'scoped memory for tpu_custom_call.1']
    #allocation10 [shape = 'u8[32768]{0}', space=vmem, size = 0x8000, scoped, tag = 'output window, operand 0, single buffered']
    #allocation11 [shape = 'u8[4096]{0}', space=vmem, size = 0x1000, scoped, tag = 'output window, operand 1, single buffered']
    #allocation12 [shape = 's32[1]{0}', space=sflag, size = 0x4, scoped, tag = 'scoped memory for tpu_custom_call.1']
    #allocation13 [shape = 'u8[4096]{0}', space=vmem, size = 0x1000, scoped, tag = 'output window, operand 2, single buffered']
    %14 = vsyncpa [#allocation6], 0
    %15 = vsyncpa [#allocation9], 0
    %16 = vsyncpa [#allocation7], 0
    %17 = vsyncpa [#allocation12], 0
    // Predicated region
    $region2: #{tpu_custom_call.1} parent=1 // pred_check
      _
    $region3: #{tpu_custom_call.1} parent=1 // pred_check_branch
      %19 = sbr.rel (0) target = $region5
    $region4: #{tpu_custom_call.1} parent=1 // pred_region
      _
    $region5: #{tpu_custom_call.1} parent=1 // pred_fallthru
      _
    // Predicated region
    $region6: #{tpu_custom_call.1} parent=1 // pred_check
      _
    $region7: #{tpu_custom_call.1} parent=1 // pred_check_branch
      %21 = sbr.rel (0) target = $region9
    $region8: #{tpu_custom_call.1} parent=1 // pred_region
      %s23 = ssub.s32 2048, 2048
      %24 = vsyncadd [#allocation6], %s23
      %s25 = sshll.u32 [#allocation5], 4
      %s26 = int_to_ptr.vmem [resolvable:$true] %s25
      %31 = dma.hbm_to_vmem [thread:$0]  %s1, 2048, %s26, [#allocation6], 512, 512, 32
    $region9: #{tpu_custom_call.1} parent=1 // pred_fallthru
      _
    // Predicated region
    $region10: #{tpu_custom_call.1} parent=1 // pred_check
      _
    $region11: #{tpu_custom_call.1} parent=1 // pred_check_branch
      %33 = sbr.rel (0) target = $region13
    $region12: #{tpu_custom_call.1} parent=1 // pred_region
      _
    $region13: #{tpu_custom_call.1} parent=1 // pred_fallthru
      _
    // Predicated region
    $region14: #{tpu_custom_call.1} parent=1 // pred_check
      _
    $region15: #{tpu_custom_call.1} parent=1 // pred_check_branch
      %35 = sbr.rel (0) target = $region17
    $region16: #{tpu_custom_call.1} parent=1 // pred_region
      %s37 = ssub.s32 8192, 8192
      %38 = vsyncadd [#allocation9], %s37
      %s39 = sshll.u32 [#allocation8], 4
      %s40 = int_to_ptr.vmem [resolvable:$true] %s39
      %45 = dma.hbm_to_vmem [thread:$0]  %s3, 8192, %s40, [#allocation9], 512, 512, 32
    $region17: #{tpu_custom_call.1} parent=1 // pred_fallthru
      _
    // Predicated region
    $region18: #{tpu_custom_call.1} parent=1 // pred_check
      _
    $region19: #{tpu_custom_call.1} parent=1 // pred_check_branch
      %47 = sbr.rel (0) target = $region21
    $region20: #{tpu_custom_call.1} parent=1 // pred_region
      _
    $region21: #{tpu_custom_call.1} parent=1 // pred_fallthru
      _
    // Predicated region
    $region22: #{tpu_custom_call.1} parent=1 // pred_check
      _
    $region23: #{tpu_custom_call.1} parent=1 // pred_check_branch
      %49 = sbr.rel (0) target = $region25
    $region24: #{tpu_custom_call.1} parent=1 // pred_region
      _
    $region25: #{tpu_custom_call.1} parent=1 // pred_fallthru
      _
    // Predicated region
    $region26: #{tpu_custom_call.1} parent=1 // pred_check
      _
    $region27: #{tpu_custom_call.1} parent=1 // pred_check_branch
      %51 = sbr.rel (0) target = $region29
    $region28: #{tpu_custom_call.1} parent=1 // pred_region
      %52 = dma.done [#allocation6], 2048
    $region29: #{tpu_custom_call.1} parent=1 // pred_fallthru
      _
    // Predicated region
    $region30: #{tpu_custom_call.1} parent=1 // pred_check
      _
    $region31: #{tpu_custom_call.1} parent=1 // pred_check_branch
      %54 = sbr.rel (0) target = $region33
    $region32: #{tpu_custom_call.1} parent=1 // pred_region
      %55 = dma.done [#allocation9], 8192
    $region33: #{tpu_custom_call.1} parent=1 // pred_fallthru
      _
    %p56 = scmp.eq.s32.totalorder 0, 0
    // Predicated region
    $region34: #{tpu_custom_call.1} parent=1 // pred_check
      %p57 = pneg %p56
    $region35: #{tpu_custom_call.1} parent=1 // pred_check_branch
      %59 = sbr.rel (%p57) target = $region37
    $region36: #{tpu_custom_call.1} parent=1 // pred_region
      %v60 = vld [vmem:[%s4] sm:$0xff]
      %61 = vst [vmem:[#allocation3] sm:$0xff] %v60
      %v62 = vld [vmem:[%s5] sm:$0xff]
      %63 = vst [vmem:[#allocation4] sm:$0xff] %v62
    $region37: #{tpu_custom_call.1} parent=1 // pred_fallthru
      _
    %v64 = vld [vmem:[%s0] sm:$0xff]
    %v65 = vld [vmem:[%s0 + $0x8] sm:$0xff]
    %v66 = vld [vmem:[%s0 + $0x10] sm:$0xff]
    %v67 = vld [vmem:[%s0 + $0x18] sm:$0xff]
    %v68 = vld [vmem:[%s0 + $0x20] sm:$0xff]
    %v69 = vld [vmem:[%s0 + $0x28] sm:$0xff]
    %v70 = vld [vmem:[%s0 + $0x30] sm:$0xff]
    %v71 = vld [vmem:[%s0 + $0x38] sm:$0xff]
    %v72 = vld [vmem:[#allocation5] sm:$0xff]
    %v73 = vld [vmem:[#allocation5 + $0x8] sm:$0xff]
    %v74 = vld [vmem:[#allocation5 + $0x10] sm:$0xff]
    %v75 = vld [vmem:[#allocation5 + $0x18] sm:$0xff]
    %v76 = vld [vmem:[#allocation5 + $0x20] sm:$0xff]
    %v77 = vld [vmem:[#allocation5 + $0x28] sm:$0xff]
    %v78 = vld [vmem:[#allocation5 + $0x30] sm:$0xff]
    %v79 = vld [vmem:[#allocation5 + $0x38] sm:$0xff]
    %v80 = vld [vmem:[#allocation5 + $0x40] sm:$0xff]
    %v81 = vld [vmem:[#allocation5 + $0x48] sm:$0xff]
    %v82 = vld [vmem:[#allocation5 + $0x50] sm:$0xff]
    %v83 = vld [vmem:[#allocation5 + $0x58] sm:$0xff]
    %v84 = vld [vmem:[#allocation5 + $0x60] sm:$0xff]
    %v85 = vld [vmem:[#allocation5 + $0x68] sm:$0xff]
    %v86 = vld [vmem:[#allocation5 + $0x70] sm:$0xff]
    %v87 = vld [vmem:[#allocation5 + $0x78] sm:$0xff]
    %v88 = vld [vmem:[%s2] sm:$0xf]
    %v90 = vlaneseq
    %v91 = vshrl.u32 %v90, 7
    %v92 = vsub.s32 0, %v91
    %v93 = vrot.slane %v88, %v92
    %v94 = vlaneseq
    %v95 = vshrl.u32 %v94, 7
    %v96 = vsub.s32 1, %v95
    %v97 = vrot.slane %v88, %v96
    %v98 = vlaneseq
    %v99 = vshrl.u32 %v98, 7
    %v100 = vsub.s32 2, %v99
    %v101 = vrot.slane %v88, %v100
    %v102 = vlaneseq
    %v103 = vshrl.u32 %v102, 7
    %v104 = vsub.s32 3, %v103
    %v105 = vrot.slane %v88, %v104
    %vm110 = vcmask 261120
    %v112 = vsel %vm110, %v64, 0
    %v115 = vsel %vm110, %v65, 0
    %v118 = vsel %vm110, %v66, 0
    %v121 = vsel %vm110, %v67, 0
    %v124 = vsel %vm110, %v68, 0
    %v127 = vsel %vm110, %v69, 0
    %v130 = vsel %vm110, %v70, 0
    %v133 = vsel %vm110, %v71, 0
    %135 = vmatprep.subr.mxu0 %v73
    %136 = vmatpush1.msra.mxu0 %v72
    %137 = vmatprep.subr.mxu0 %v77
    %138 = vmatpush1.msra.mxu0 %v76
    %139 = vmatprep.subr.mxu0 %v81
    %140 = vmatpush1.msra.mxu0 %v80
    %141 = vmatprep.subr.mxu0 %v85
    %142 = vmatpush1.msra.mxu0 %v84
    %143 = vmatprep.subr.mxu0 0.0
    %144 = vmatpush1.msra.mxu0 0.0
    %145 = vmatprep.subr.mxu0 0.0
    %146 = vmatpush1.msra.mxu0 0.0
    %147 = vmatprep.subr.mxu0 0.0
    %148 = vmatpush1.msra.mxu0 0.0
    %149 = vmatprep.subr.mxu0 0.0
    %150 = vmatpush1.msra.mxu0 0.0
    %151 = vmatprep.subr.mxu0 0.0
    %152 = vmatpush1.msra.mxu0 0.0
    %153 = vmatprep.subr.mxu0 0.0
    %154 = vmatpush1.msra.mxu0 0.0
    %155 = vmatprep.subr.mxu0 0.0
    %156 = vmatpush1.msra.mxu0 0.0
    %157 = vmatprep.subr.mxu0 0.0
    %158 = vmatpush1.msra.mxu0 0.0
    %159 = vmatprep.subr.mxu0 0.0
    %160 = vmatpush1.msra.mxu0 0.0
    %161 = vmatprep.subr.mxu0 0.0
    %162 = vmatpush1.msra.mxu0 0.0
    %163 = vmatprep.subr.mxu0 0.0
    %164 = vmatpush1.msra.mxu0 0.0
    %165 = vmatprep.subr.mxu0 0.0
    %166 = vmatpush1.msra.mxu0 0.0
    %167 = vmatprep.subr.mxu0 0.0
    %168 = vmatpush1.msra.mxu0 0.0
    %169 = vmatprep.subr.mxu0 0.0
    %170 = vmatpush1.msra.mxu0 0.0
    %171 = vmatprep.subr.mxu0 0.0
    %172 = vmatpush1.msra.mxu0 0.0
    %173 = vmatprep.subr.mxu0 0.0
    %174 = vmatpush1.msra.mxu0 0.0
    %175 = vmatprep.subr.mxu0 0.0
    %176 = vmatpush1.msra.mxu0 0.0
    %177 = vmatprep.subr.mxu0 0.0
    %178 = vmatpush1.msra.mxu0 0.0
    %179 = vmatprep.subr.mxu0 0.0
    %180 = vmatpush1.msra.mxu0 0.0
    %181 = vmatprep.subr.mxu0 0.0
    %182 = vmatpush1.msra.mxu0 0.0
    %183 = vmatprep.subr.mxu0 0.0
    %184 = vmatpush1.msra.mxu0 0.0
    %185 = vmatprep.subr.mxu0 0.0
    %186 = vmatpush1.msra.mxu0 0.0
    %187 = vmatprep.subr.mxu0 0.0
    %188 = vmatpush1.msra.mxu0 0.0
    %189 = vmatprep.subr.mxu0 0.0
    %190 = vmatpush1.msra.mxu0 0.0
    %191 = vmatprep.subr.mxu0 0.0
    %192 = vmatpush1.msra.mxu0 0.0
    %193 = vmatprep.subr.mxu0 0.0
    %194 = vmatpush1.msra.mxu0 0.0
    %195 = vmatprep.subr.mxu0 0.0
    %196 = vmatpush1.msra.mxu0 0.0
    %197 = vmatprep.subr.mxu0 0.0
    %198 = vmatpush1.msra.mxu0 0.0
    %199 = vmatprep.mubr.f32.mxu0 0.0
    %200 = vmatmul.mubr.f32.gmra.mrb[0].mxu0 %v112
    %v201 = vpop.f32.mrb[0].mxu0
    %v202 = vadd.f32 %v93, %v201
    %v203 = vpop.f32.mrb[0].mxu0
    %v204 = vadd.f32 %v97, %v203
    %205 = vmatprep.mubr.f32.mxu0 0.0
    %206 = vmatmul.mubr.f32.gmra.mrb[0].mxu0 %v115
    %v207 = vpop.f32.mrb[0].mxu0
    %v208 = vadd.f32 %v93, %v207
    %v209 = vpop.f32.mrb[0].mxu0
    %v210 = vadd.f32 %v97, %v209
    %211 = vmatprep.mubr.f32.mxu0 0.0
    %212 = vmatmul.mubr.f32.gmra.mrb[0].mxu0 %v118
    %v213 = vpop.f32.mrb[0].mxu0
    %v214 = vadd.f32 %v93, %v213
    %v215 = vpop.f32.mrb[0].mxu0
    %v216 = vadd.f32 %v97, %v215
    %217 = vmatprep.mubr.f32.mxu0 0.0
    %218 = vmatmul.mubr.f32.gmra.mrb[0].mxu0 %v121
    %v219 = vpop.f32.mrb[0].mxu0
    %v220 = vadd.f32 %v93, %v219
    %v221 = vpop.f32.mrb[0].mxu0
    %v222 = vadd.f32 %v97, %v221
    %223 = vmatprep.mubr.f32.mxu0 0.0
    %224 = vmatmul.mubr.f32.gmra.mrb[0].mxu0 %v124
    %v225 = vpop.f32.mrb[0].mxu0
    %v226 = vadd.f32 %v93, %v225
    %v227 = vpop.f32.mrb[0].mxu0
    %v228 = vadd.f32 %v97, %v227
    %229 = vmatprep.mubr.f32.mxu0 0.0
    %230 = vmatmul.mubr.f32.gmra.mrb[0].mxu0 %v127
    %v231 = vpop.f32.mrb[0].mxu0
    %v232 = vadd.f32 %v93, %v231
    %v233 = vpop.f32.mrb[0].mxu0
    %v234 = vadd.f32 %v97, %v233
    %235 = vmatprep.mubr.f32.mxu0 0.0
    %236 = vmatmul.mubr.f32.gmra.mrb[0].mxu0 %v130
    %v237 = vpop.f32.mrb[0].mxu0
    %v238 = vadd.f32 %v93, %v237
    %v239 = vpop.f32.mrb[0].mxu0
    %v240 = vadd.f32 %v97, %v239
    %241 = vmatprep.mubr.f32.mxu0 0.0
    %242 = vmatmul.mubr.f32.gmra.mrb[0].mxu0 %v133
    %v243 = vpop.f32.mrb[0].mxu0
    %v244 = vadd.f32 %v93, %v243
    %v245 = vpop.f32.mrb[0].mxu0
    %v246 = vadd.f32 %v97, %v245
    %247 = vdwg.mxu0
    %248 = vmatprep.subr.mxu0 %v75
    %249 = vmatpush1.msra.mxu0 %v74
    %250 = vmatprep.subr.mxu0 %v79
    %251 = vmatpush1.msra.mxu0 %v78
    %252 = vmatprep.subr.mxu0 %v83
    %253 = vmatpush1.msra.mxu0 %v82
    %254 = vmatprep.subr.mxu0 %v87
    %255 = vmatpush1.msra.mxu0 %v86
    %256 = vmatprep.subr.mxu0 0.0
    %257 = vmatpush1.msra.mxu0 0.0
    %258 = vmatprep.subr.mxu0 0.0
    %259 = vmatpush1.msra.mxu0 0.0
    %260 = vmatprep.subr.mxu0 0.0
    %261 = vmatpush1.msra.mxu0 0.0
    %262 = vmatprep.subr.mxu0 0.0
    %263 = vmatpush1.msra.mxu0 0.0
    %264 = vmatprep.subr.mxu0 0.0
    %265 = vmatpush1.msra.mxu0 0.0
    %266 = vmatprep.subr.mxu0 0.0
    %267 = vmatpush1.msra.mxu0 0.0
    %268 = vmatprep.subr.mxu0 0.0
    %269 = vmatpush1.msra.mxu0 0.0
    %270 = vmatprep.subr.mxu0 0.0
    %271 = vmatpush1.msra.mxu0 0.0
    %272 = vmatprep.subr.mxu0 0.0
    %273 = vmatpush1.msra.mxu0 0.0
    %274 = vmatprep.subr.mxu0 0.0
    %275 = vmatpush1.msra.mxu0 0.0
    %276 = vmatprep.subr.mxu0 0.0
    %277 = vmatpush1.msra.mxu0 0.0
    %278 = vmatprep.subr.mxu0 0.0
    %279 = vmatpush1.msra.mxu0 0.0
    %280 = vmatprep.subr.mxu0 0.0
    %281 = vmatpush1.msra.mxu0 0.0
    %282 = vmatprep.subr.mxu0 0.0
    %283 = vmatpush1.msra.mxu0 0.0
    %284 = vmatprep.subr.mxu0 0.0
    %285 = vmatpush1.msra.mxu0 0.0
    %286 = vmatprep.subr.mxu0 0.0
    %287 = vmatpush1.msra.mxu0 0.0
    %288 = vmatprep.subr.mxu0 0.0
    %289 = vmatpush1.msra.mxu0 0.0
    %290 = vmatprep.subr.mxu0 0.0
    %291 = vmatpush1.msra.mxu0 0.0
    %292 = vmatprep.subr.mxu0 0.0
    %293 = vmatpush1.msra.mxu0 0.0
    %294 = vmatprep.subr.mxu0 0.0
    %295 = vmatpush1.msra.mxu0 0.0
    %296 = vmatprep.subr.mxu0 0.0
    %297 = vmatpush1.msra.mxu0 0.0
    %298 = vmatprep.subr.mxu0 0.0
    %299 = vmatpush1.msra.mxu0 0.0
    %300 = vmatprep.subr.mxu0 0.0
    %301 = vmatpush1.msra.mxu0 0.0
    %302 = vmatprep.subr.mxu0 0.0
    %303 = vmatpush1.msra.mxu0 0.0
    %304 = vmatprep.subr.mxu0 0.0
    %305 = vmatpush1.msra.mxu0 0.0
    %306 = vmatprep.subr.mxu0 0.0
    %307 = vmatpush1.msra.mxu0 0.0
    %308 = vmatprep.subr.mxu0 0.0
    %309 = vmatpush1.msra.mxu0 0.0
    %310 = vmatprep.subr.mxu0 0.0
    %311 = vmatpush1.msra.mxu0 0.0
    %312 = vmatprep.mubr.f32.mxu0 0.0
    %313 = vmatmul.mubr.f32.gmra.mrb[0].mxu0 %v112
    %v314 = vpop.f32.mrb[0].mxu0
    %v315 = vadd.f32 %v101, %v314
    %v316 = vpop.f32.mrb[0].mxu0
    %v317 = vadd.f32 %v105, %v316
    %318 = vmatprep.mubr.f32.mxu0 0.0
    %319 = vmatmul.mubr.f32.gmra.mrb[0].mxu0 %v115
    %v320 = vpop.f32.mrb[0].mxu0
    %v321 = vadd.f32 %v101, %v320
    %v322 = vpop.f32.mrb[0].mxu0
    %v323 = vadd.f32 %v105, %v322
    %324 = vmatprep.mubr.f32.mxu0 0.0
    %325 = vmatmul.mubr.f32.gmra.mrb[0].mxu0 %v118
    %v326 = vpop.f32.mrb[0].mxu0
    %v327 = vadd.f32 %v101, %v326
    %v328 = vpop.f32.mrb[0].mxu0
    %v329 = vadd.f32 %v105, %v328
    %330 = vmatprep.mubr.f32.mxu0 0.0
    %331 = vmatmul.mubr.f32.gmra.mrb[0].mxu0 %v121
    %v332 = vpop.f32.mrb[0].mxu0
    %v333 = vadd.f32 %v101, %v332
    %v334 = vpop.f32.mrb[0].mxu0
    %v335 = vadd.f32 %v105, %v334
    %336 = vmatprep.mubr.f32.mxu0 0.0
    %337 = vmatmul.mubr.f32.gmra.mrb[0].mxu0 %v124
    %v338 = vpop.f32.mrb[0].mxu0
    %v339 = vadd.f32 %v101, %v338
    %v340 = vpop.f32.mrb[0].mxu0
    %v341 = vadd.f32 %v105, %v340
    %342 = vmatprep.mubr.f32.mxu0 0.0
    %343 = vmatmul.mubr.f32.gmra.mrb[0].mxu0 %v127
    %v344 = vpop.f32.mrb[0].mxu0
    %v345 = vadd.f32 %v101, %v344
    %v346 = vpop.f32.mrb[0].mxu0
    %v347 = vadd.f32 %v105, %v346
    %348 = vmatprep.mubr.f32.mxu0 0.0
    %349 = vmatmul.mubr.f32.gmra.mrb[0].mxu0 %v130
    %v350 = vpop.f32.mrb[0].mxu0
    %v351 = vadd.f32 %v101, %v350
    %v352 = vpop.f32.mrb[0].mxu0
    %v353 = vadd.f32 %v105, %v352
    %354 = vmatprep.mubr.f32.mxu0 0.0
    %355 = vmatmul.mubr.f32.gmra.mrb[0].mxu0 %v133
    %v356 = vpop.f32.mrb[0].mxu0
    %v357 = vadd.f32 %v101, %v356
    %v358 = vpop.f32.mrb[0].mxu0
    %v359 = vadd.f32 %v105, %v358
    %360 = vdwg.mxu0
    %361 = vst [vmem:[#allocation2] sm:$0xff] %v202
    %362 = vst [vmem:[#allocation2 + $0x8] sm:$0xff] %v204
    %363 = vst [vmem:[#allocation2 + $0x10] sm:$0xff] %v315
    %364 = vst [vmem:[#allocation2 + $0x18] sm:$0xff] %v317
    %365 = vst [vmem:[#allocation2 + $0x20] sm:$0xff] %v208
    %366 = vst [vmem:[#allocation2 + $0x28] sm:$0xff] %v210
    %367 = vst [vmem:[#allocation2 + $0x30] sm:$0xff] %v321
    %368 = vst [vmem:[#allocation2 + $0x38] sm:$0xff] %v323
    %369 = vst [vmem:[#allocation2 + $0x40] sm:$0xff] %v214
    %370 = vst [vmem:[#allocation2 + $0x48] sm:$0xff] %v216
    %371 = vst [vmem:[#allocation2 + $0x50] sm:$0xff] %v327
    %372 = vst [vmem:[#allocation2 + $0x58] sm:$0xff] %v329
    %373 = vst [vmem:[#allocation2 + $0x60] sm:$0xff] %v220
    %374 = vst [vmem:[#allocation2 + $0x68] sm:$0xff] %v222
    %375 = vst [vmem:[#allocation2 + $0x70] sm:$0xff] %v333
    %376 = vst [vmem:[#allocation2 + $0x78] sm:$0xff] %v335
    %377 = vst [vmem:[#allocation2 + $0x80] sm:$0xff] %v226
    %378 = vst [vmem:[#allocation2 + $0x88] sm:$0xff] %v228
    %379 = vst [vmem:[#allocation2 + $0x90] sm:$0xff] %v339
    %380 = vst [vmem:[#allocation2 + $0x98] sm:$0xff] %v341
    %381 = vst [vmem:[#allocation2 + $0xa0] sm:$0xff] %v232
    %382 = vst [vmem:[#allocation2 + $0xa8] sm:$0xff] %v234
    %383 = vst [vmem:[#allocation2 + $0xb0] sm:$0xff] %v345
    %384 = vst [vmem:[#allocation2 + $0xb8] sm:$0xff] %v347
    %385 = vst [vmem:[#allocation2 + $0xc0] sm:$0xff] %v238
    %386 = vst [vmem:[#allocation2 + $0xc8] sm:$0xff] %v240
    %387 = vst [vmem:[#allocation2 + $0xd0] sm:$0xff] %v351
    %388 = vst [vmem:[#allocation2 + $0xd8] sm:$0xff] %v353
    %389 = vst [vmem:[#allocation2 + $0xe0] sm:$0xff] %v244
    %390 = vst [vmem:[#allocation2 + $0xe8] sm:$0xff] %v246
    %391 = vst [vmem:[#allocation2 + $0xf0] sm:$0xff] %v357
    %392 = vst [vmem:[#allocation2 + $0xf8] sm:$0xff] %v359
    %v393 = vld [vmem:[#allocation3] sm:$0xff]
    %v394 = vld [vmem:[#allocation4] sm:$0xff]
    %s395 = smul.u32 0, 4
    %s396 = smul.addr %s395, 8
    %s397 = scalar_lea.vmem [#allocation2], %s396
    %v398 = vld [vmem:[%s397] sm:$0xff]
    %v399 = vld [vmem:[%s397 + $0x8] sm:$0xff]
    %v400 = vld [vmem:[%s397 + $0x10] sm:$0xff]
    %v401 = vld [vmem:[%s397 + $0x18] sm:$0xff]
    %v402 = vld [vmem:[#allocation8] sm:$0xff]
    %v403 = vld [vmem:[#allocation8 + $0x8] sm:$0xff]
    %v404 = vld [vmem:[#allocation8 + $0x10] sm:$0xff]
    %v405 = vld [vmem:[#allocation8 + $0x18] sm:$0xff]
    %v406 = vld [vmem:[#allocation8 + $0x20] sm:$0xff]
    %v407 = vld [vmem:[#allocation8 + $0x28] sm:$0xff]
    %v408 = vld [vmem:[#allocation8 + $0x30] sm:$0xff]
    %v409 = vld [vmem:[#allocation8 + $0x38] sm:$0xff]
    %v410 = vld [vmem:[#allocation8 + $0x40] sm:$0xff]
    %v411 = vld [vmem:[#allocation8 + $0x48] sm:$0xff]
    %v412 = vld [vmem:[#allocation8 + $0x50] sm:$0xff]
    %v413 = vld [vmem:[#allocation8 + $0x58] sm:$0xff]
    %v414 = vld [vmem:[#allocation8 + $0x60] sm:$0xff]
    %v415 = vld [vmem:[#allocation8 + $0x68] sm:$0xff]
    %v416 = vld [vmem:[#allocation8 + $0x70] sm:$0xff]
    %v417 = vld [vmem:[#allocation8 + $0x78] sm:$0xff]
    %v418 = vld [vmem:[#allocation8 + $0x80] sm:$0xff]
    %v419 = vld [vmem:[#allocation8 + $0x88] sm:$0xff]
    %v420 = vld [vmem:[#allocation8 + $0x90] sm:$0xff]
    %v421 = vld [vmem:[#allocation8 + $0x98] sm:$0xff]
    %v422 = vld [vmem:[#allocation8 + $0xa0] sm:$0xff]
    %v423 = vld [vmem:[#allocation8 + $0xa8] sm:$0xff]
    %v424 = vld [vmem:[#allocation8 + $0xb0] sm:$0xff]
    %v425 = vld [vmem:[#allocation8 + $0xb8] sm:$0xff]
    %v426 = vld [vmem:[#allocation8 + $0xc0] sm:$0xff]
    %v427 = vld [vmem:[#allocation8 + $0xc8] sm:$0xff]
    %v428 = vld [vmem:[#allocation8 + $0xd0] sm:$0xff]
    %v429 = vld [vmem:[#allocation8 + $0xd8] sm:$0xff]
    %v430 = vld [vmem:[#allocation8 + $0xe0] sm:$0xff]
    %v431 = vld [vmem:[#allocation8 + $0xe8] sm:$0xff]
    %v432 = vld [vmem:[#allocation8 + $0xf0] sm:$0xff]
    %v433 = vld [vmem:[#allocation8 + $0xf8] sm:$0xff]
    %v434 = vld [vmem:[#allocation8 + $0x100] sm:$0xff]
    %v435 = vld [vmem:[#allocation8 + $0x108] sm:$0xff]
    %v436 = vld [vmem:[#allocation8 + $0x110] sm:$0xff]
    %v437 = vld [vmem:[#allocation8 + $0x118] sm:$0xff]
    %v438 = vld [vmem:[#allocation8 + $0x120] sm:$0xff]
    %v439 = vld [vmem:[#allocation8 + $0x128] sm:$0xff]
    %v440 = vld [vmem:[#allocation8 + $0x130] sm:$0xff]
    %v441 = vld [vmem:[#allocation8 + $0x138] sm:$0xff]
    %v442 = vld [vmem:[#allocation8 + $0x140] sm:$0xff]
    %v443 = vld [vmem:[#allocation8 + $0x148] sm:$0xff]
    %v444 = vld [vmem:[#allocation8 + $0x150] sm:$0xff]
    %v445 = vld [vmem:[#allocation8 + $0x158] sm:$0xff]
    %v446 = vld [vmem:[#allocation8 + $0x160] sm:$0xff]
    %v447 = vld [vmem:[#allocation8 + $0x168] sm:$0xff]
    %v448 = vld [vmem:[#allocation8 + $0x170] sm:$0xff]
    %v449 = vld [vmem:[#allocation8 + $0x178] sm:$0xff]
    %v450 = vld [vmem:[#allocation8 + $0x180] sm:$0xff]
    %v451 = vld [vmem:[#allocation8 + $0x188] sm:$0xff]
    %v452 = vld [vmem:[#allocation8 + $0x190] sm:$0xff]
    %v453 = vld [vmem:[#allocation8 + $0x198] sm:$0xff]
    %v454 = vld [vmem:[#allocation8 + $0x1a0] sm:$0xff]
    %v455 = vld [vmem:[#allocation8 + $0x1a8] sm:$0xff]
    %v456 = vld [vmem:[#allocation8 + $0x1b0] sm:$0xff]
    %v457 = vld [vmem:[#allocation8 + $0x1b8] sm:$0xff]
    %v458 = vld [vmem:[#allocation8 + $0x1c0] sm:$0xff]
    %v459 = vld [vmem:[#allocation8 + $0x1c8] sm:$0xff]
    %v460 = vld [vmem:[#allocation8 + $0x1d0] sm:$0xff]
    %v461 = vld [vmem:[#allocation8 + $0x1d8] sm:$0xff]
    %v462 = vld [vmem:[#allocation8 + $0x1e0] sm:$0xff]
    %v463 = vld [vmem:[#allocation8 + $0x1e8] sm:$0xff]
    %v464 = vld [vmem:[#allocation8 + $0x1f0] sm:$0xff]
    %v465 = vld [vmem:[#allocation8 + $0x1f8] sm:$0xff]
    %466 = vmatprep.subr.mxu0 %v403
    %467 = vmatpush1.msra.mxu0 %v402
    %468 = vmatprep.subr.mxu0 %v407
    %469 = vmatpush1.msra.mxu0 %v406
    %470 = vmatprep.subr.mxu0 %v411
    %471 = vmatpush1.msra.mxu0 %v410
    %472 = vmatprep.subr.mxu0 %v415
    %473 = vmatpush1.msra.mxu0 %v414
    %474 = vmatprep.subr.mxu0 %v419
    %475 = vmatpush1.msra.mxu0 %v418
    %476 = vmatprep.subr.mxu0 %v423
    %477 = vmatpush1.msra.mxu0 %v422
    %478 = vmatprep.subr.mxu0 %v427
    %479 = vmatpush1.msra.mxu0 %v426
    %480 = vmatprep.subr.mxu0 %v431
    %481 = vmatpush1.msra.mxu0 %v430
    %482 = vmatprep.subr.mxu0 %v435
    %483 = vmatpush1.msra.mxu0 %v434
    %484 = vmatprep.subr.mxu0 %v439
    %485 = vmatpush1.msra.mxu0 %v438
    %486 = vmatprep.subr.mxu0 %v443
    %487 = vmatpush1.msra.mxu0 %v442
    %488 = vmatprep.subr.mxu0 %v447
    %489 = vmatpush1.msra.mxu0 %v446
    %490 = vmatprep.subr.mxu0 %v451
    %491 = vmatpush1.msra.mxu0 %v450
    %492 = vmatprep.subr.mxu0 %v455
    %493 = vmatpush1.msra.mxu0 %v454
    %494 = vmatprep.subr.mxu0 %v459
    %495 = vmatpush1.msra.mxu0 %v458
    %496 = vmatprep.subr.mxu0 %v463
    %497 = vmatpush1.msra.mxu0 %v462
    %498 = vmatprep.subr.mxu0 0.0
    %499 = vmatpush1.msra.mxu0 0.0
    %500 = vmatprep.subr.mxu0 0.0
    %501 = vmatpush1.msra.mxu0 0.0
    %502 = vmatprep.subr.mxu0 0.0
    %503 = vmatpush1.msra.mxu0 0.0
    %504 = vmatprep.subr.mxu0 0.0
    %505 = vmatpush1.msra.mxu0 0.0
    %506 = vmatprep.subr.mxu0 0.0
    %507 = vmatpush1.msra.mxu0 0.0
    %508 = vmatprep.subr.mxu0 0.0
    %509 = vmatpush1.msra.mxu0 0.0
    %510 = vmatprep.subr.mxu0 0.0
    %511 = vmatpush1.msra.mxu0 0.0
    %512 = vmatprep.subr.mxu0 0.0
    %513 = vmatpush1.msra.mxu0 0.0
    %514 = vmatprep.subr.mxu0 0.0
    %515 = vmatpush1.msra.mxu0 0.0
    %516 = vmatprep.subr.mxu0 0.0
    %517 = vmatpush1.msra.mxu0 0.0
    %518 = vmatprep.subr.mxu0 0.0
    %519 = vmatpush1.msra.mxu0 0.0
    %520 = vmatprep.subr.mxu0 0.0
    %521 = vmatpush1.msra.mxu0 0.0
    %522 = vmatprep.subr.mxu0 0.0
    %523 = vmatpush1.msra.mxu0 0.0
    %524 = vmatprep.subr.mxu0 0.0
    %525 = vmatpush1.msra.mxu0 0.0
    %526 = vmatprep.subr.mxu0 0.0
    %527 = vmatpush1.msra.mxu0 0.0
    %528 = vmatprep.subr.mxu0 0.0
    %529 = vmatpush1.msra.mxu0 0.0
    %530 = vmatprep.mubr.f32.mxu0 0.0
    %531 = vmatmul.mubr.f32.gmra.mrb[0].mxu0 %v393
    %v532 = vpop.f32.mrb[0].mxu0
    %v533 = vadd.f32 0.0, %v532
    %v534 = vpop.f32.mrb[0].mxu0
    %v535 = vadd.f32 0.0, %v534
    %536 = vdwg.mxu0
    %537 = vmatprep.subr.mxu0 %v405
    %538 = vmatpush1.msra.mxu0 %v404
    %539 = vmatprep.subr.mxu0 %v409
    %540 = vmatpush1.msra.mxu0 %v408
    %541 = vmatprep.subr.mxu0 %v413
    %542 = vmatpush1.msra.mxu0 %v412
    %543 = vmatprep.subr.mxu0 %v417
    %544 = vmatpush1.msra.mxu0 %v416
    %545 = vmatprep.subr.mxu0 %v421
    %546 = vmatpush1.msra.mxu0 %v420
    %547 = vmatprep.subr.mxu0 %v425
    %548 = vmatpush1.msra.mxu0 %v424
    %549 = vmatprep.subr.mxu0 %v429
    %550 = vmatpush1.msra.mxu0 %v428
    %551 = vmatprep.subr.mxu0 %v433
    %552 = vmatpush1.msra.mxu0 %v432
    %553 = vmatprep.subr.mxu0 %v437
    %554 = vmatpush1.msra.mxu0 %v436
    %555 = vmatprep.subr.mxu0 %v441
    %556 = vmatpush1.msra.mxu0 %v440
    %557 = vmatprep.subr.mxu0 %v445
    %558 = vmatpush1.msra.mxu0 %v444
    %559 = vmatprep.subr.mxu0 %v449
    %560 = vmatpush1.msra.mxu0 %v448
    %561 = vmatprep.subr.mxu0 %v453
    %562 = vmatpush1.msra.mxu0 %v452
    %563 = vmatprep.subr.mxu0 %v457
    %564 = vmatpush1.msra.mxu0 %v456
    %565 = vmatprep.subr.mxu0 %v461
    %566 = vmatpush1.msra.mxu0 %v460
    %567 = vmatprep.subr.mxu0 %v465
    %568 = vmatpush1.msra.mxu0 %v464
    %569 = vmatprep.subr.mxu0 0.0
    %570 = vmatpush1.msra.mxu0 0.0
    %571 = vmatprep.subr.mxu0 0.0
    %572 = vmatpush1.msra.mxu0 0.0
    %573 = vmatprep.subr.mxu0 0.0
    %574 = vmatpush1.msra.mxu0 0.0
    %575 = vmatprep.subr.mxu0 0.0
    %576 = vmatpush1.msra.mxu0 0.0
    %577 = vmatprep.subr.mxu0 0.0
    %578 = vmatpush1.msra.mxu0 0.0
    %579 = vmatprep.subr.mxu0 0.0
    %580 = vmatpush1.msra.mxu0 0.0
    %581 = vmatprep.subr.mxu0 0.0
    %582 = vmatpush1.msra.mxu0 0.0
    %583 = vmatprep.subr.mxu0 0.0
    %584 = vmatpush1.msra.mxu0 0.0
    %585 = vmatprep.subr.mxu0 0.0
    %586 = vmatpush1.msra.mxu0 0.0
    %587 = vmatprep.subr.mxu0 0.0
    %588 = vmatpush1.msra.mxu0 0.0
    %589 = vmatprep.subr.mxu0 0.0
    %590 = vmatpush1.msra.mxu0 0.0
    %591 = vmatprep.subr.mxu0 0.0
    %592 = vmatpush1.msra.mxu0 0.0
    %593 = vmatprep.subr.mxu0 0.0
    %594 = vmatpush1.msra.mxu0 0.0
    %595 = vmatprep.subr.mxu0 0.0
    %596 = vmatpush1.msra.mxu0 0.0
    %597 = vmatprep.subr.mxu0 0.0
    %598 = vmatpush1.msra.mxu0 0.0
    %599 = vmatprep.subr.mxu0 0.0
    %600 = vmatpush1.msra.mxu0 0.0
    %601 = vmatprep.mubr.f32.mxu0 0.0
    %602 = vmatmul.mubr.f32.gmra.mrb[0].mxu0 %v393
    %v603 = vpop.f32.mrb[0].mxu0
    %v604 = vadd.f32 0.0, %v603
    %v605 = vpop.f32.mrb[0].mxu0
    %v606 = vadd.f32 0.0, %v605
    %607 = vdwg.mxu0
    %v608 = vadd.f32 %v398, %v533
    %v609 = vadd.f32 %v399, %v535
    %v610 = vadd.f32 %v400, %v604
    %v611 = vadd.f32 %v401, %v606
    %v612 = vxor.u32 %v608, 2147483648
    %v613 = vmul.f32 %v612, 1.442695
    %v614 = vpow.pop %v613
    %v615 = vadd.f32 %v614, 1.0
    %v616 = vrcp.pop %v615
    %v617 = vmul.f32 1.0, %v616
    %v618 = vxor.u32 %v609, 2147483648
    %v619 = vmul.f32 %v618, 1.442695
    %v620 = vpow.pop %v619
    %v621 = vadd.f32 %v620, 1.0
    %v622 = vrcp.pop %v621
    %v623 = vmul.f32 1.0, %v622
    %v624 = vtanh.pop %v610
    %v625 = vxor.u32 %v611, 2147483648
    %v626 = vmul.f32 %v625, 1.442695
    %v627 = vpow.pop %v626
    %v628 = vadd.f32 %v627, 1.0
    %v629 = vrcp.pop %v628
    %v630 = vmul.f32 1.0, %v629
    %v631 = vmul.f32 %v623, %v394
    %v632 = vmul.f32 %v617, %v624
    %v633 = vadd.f32 %v631, %v632
    %v634 = vtanh.pop %v633
    %v635 = vmul.f32 %v630, %v634
    %636 = vst [vmem:[#allocation10] sm:$0xff] %v635
    %s637 = smul.u32 1, 4
    %s638 = smul.addr %s637, 8
    %s639 = scalar_lea.vmem [#allocation2], %s638
    %v640 = vld [vmem:[%s639] sm:$0xff]
    %v641 = vld [vmem:[%s639 + $0x8] sm:$0xff]
    %v642 = vld [vmem:[%s639 + $0x10] sm:$0xff]
    %v643 = vld [vmem:[%s639 + $0x18] sm:$0xff]
    %v644 = vld [vmem:[#allocation8] sm:$0xff]
    %v645 = vld [vmem:[#allocation8 + $0x8] sm:$0xff]
    %v646 = vld [vmem:[#allocation8 + $0x10] sm:$0xff]
    %v647 = vld [vmem:[#allocation8 + $0x18] sm:$0xff]
    %v648 = vld [vmem:[#allocation8 + $0x20] sm:$0xff]
    %v649 = vld [vmem:[#allocation8 + $0x28] sm:$0xff]
    %v650 = vld [vmem:[#allocation8 + $0x30] sm:$0xff]
    %v651 = vld [vmem:[#allocation8 + $0x38] sm:$0xff]
    %v652 = vld [vmem:[#allocation8 + $0x40] sm:$0xff]
    %v653 = vld [vmem:[#allocation8 + $0x48] sm:$0xff]
    %v654 = vld [vmem:[#allocation8 + $0x50] sm:$0xff]
    %v655 = vld [vmem:[#allocation8 + $0x58] sm:$0xff]
    %v656 = vld [vmem:[#allocation8 + $0x60] sm:$0xff]
    %v657 = vld [vmem:[#allocation8 + $0x68] sm:$0xff]
    %v658 = vld [vmem:[#allocation8 + $0x70] sm:$0xff]
    %v659 = vld [vmem:[#allocation8 + $0x78] sm:$0xff]
    %v660 = vld [vmem:[#allocation8 + $0x80] sm:$0xff]
    %v661 = vld [vmem:[#allocation8 + $0x88] sm:$0xff]
    %v662 = vld [vmem:[#allocation8 + $0x90] sm:$0xff]
    %v663 = vld [vmem:[#allocation8 + $0x98] sm:$0xff]
    %v664 = vld [vmem:[#allocation8 + $0xa0] sm:$0xff]
    %v665 = vld [vmem:[#allocation8 + $0xa8] sm:$0xff]
    %v666 = vld [vmem:[#allocation8 + $0xb0] sm:$0xff]
    %v667 = vld [vmem:[#allocation8 + $0xb8] sm:$0xff]
    %v668 = vld [vmem:[#allocation8 + $0xc0] sm:$0xff]
    %v669 = vld [vmem:[#allocation8 + $0xc8] sm:$0xff]
    %v670 = vld [vmem:[#allocation8 + $0xd0] sm:$0xff]
    %v671 = vld [vmem:[#allocation8 + $0xd8] sm:$0xff]
    %v672 = vld [vmem:[#allocation8 + $0xe0] sm:$0xff]
    %v673 = vld [vmem:[#allocation8 + $0xe8] sm:$0xff]
    %v674 = vld [vmem:[#allocation8 + $0xf0] sm:$0xff]
    %v675 = vld [vmem:[#allocation8 + $0xf8] sm:$0xff]
    %v676 = vld [vmem:[#allocation8 + $0x100] sm:$0xff]
    %v677 = vld [vmem:[#allocation8 + $0x108] sm:$0xff]
    %v678 = vld [vmem:[#allocation8 + $0x110] sm:$0xff]
    %v679 = vld [vmem:[#allocation8 + $0x118] sm:$0xff]
    %v680 = vld [vmem:[#allocation8 + $0x120] sm:$0xff]
    %v681 = vld [vmem:[#allocation8 + $0x128] sm:$0xff]
    %v682 = vld [vmem:[#allocation8 + $0x130] sm:$0xff]
    %v683 = vld [vmem:[#allocation8 + $0x138] sm:$0xff]
    %v684 = vld [vmem:[#allocation8 + $0x140] sm:$0xff]
    %v685 = vld [vmem:[#allocation8 + $0x148] sm:$0xff]
    %v686 = vld [vmem:[#allocation8 + $0x150] sm:$0xff]
    %v687 = vld [vmem:[#allocation8 + $0x158] sm:$0xff]
    %v688 = vld [vmem:[#allocation8 + $0x160] sm:$0xff]
    %v689 = vld [vmem:[#allocation8 + $0x168] sm:$0xff]
    %v690 = vld [vmem:[#allocation8 + $0x170] sm:$0xff]
    %v691 = vld [vmem:[#allocation8 + $0x178] sm:$0xff]
    %v692 = vld [vmem:[#allocation8 + $0x180] sm:$0xff]
    %v693 = vld [vmem:[#allocation8 + $0x188] sm:$0xff]
    %v694 = vld [vmem:[#allocation8 + $0x190] sm:$0xff]
    %v695 = vld [vmem:[#allocation8 + $0x198] sm:$0xff]
    %v696 = vld [vmem:[#allocation8 + $0x1a0] sm:$0xff]
    %v697 = vld [vmem:[#allocation8 + $0x1a8] sm:$0xff]
    %v698 = vld [vmem:[#allocation8 + $0x1b0] sm:$0xff]
    %v699 = vld [vmem:[#allocation8 + $0x1b8] sm:$0xff]
    %v700 = vld [vmem:[#allocation8 + $0x1c0] sm:$0xff]
    %v701 = vld [vmem:[#allocation8 + $0x1c8] sm:$0xff]
    %v702 = vld [vmem:[#allocation8 + $0x1d0] sm:$0xff]
    %v703 = vld [vmem:[#allocation8 + $0x1d8] sm:$0xff]
    %v704 = vld [vmem:[#allocation8 + $0x1e0] sm:$0xff]
    %v705 = vld [vmem:[#allocation8 + $0x1e8] sm:$0xff]
    %v706 = vld [vmem:[#allocation8 + $0x1f0] sm:$0xff]
    %v707 = vld [vmem:[#allocation8 + $0x1f8] sm:$0xff]
    %708 = vmatprep.subr.mxu0 %v645
    %709 = vmatpush1.msra.mxu0 %v644
    %710 = vmatprep.subr.mxu0 %v649
    %711 = vmatpush1.msra.mxu0 %v648
    %712 = vmatprep.subr.mxu0 %v653
    %713 = vmatpush1.msra.mxu0 %v652
    %714 = vmatprep.subr.mxu0 %v657
    %715 = vmatpush1.msra.mxu0 %v656
    %716 = vmatprep.subr.mxu0 %v661
    %717 = vmatpush1.msra.mxu0 %v660
    %718 = vmatprep.subr.mxu0 %v665
    %719 = vmatpush1.msra.mxu0 %v664
    %720 = vmatprep.subr.mxu0 %v669
    %721 = vmatpush1.msra.mxu0 %v668
    %722 = vmatprep.subr.mxu0 %v673
    %723 = vmatpush1.msra.mxu0 %v672
    %724 = vmatprep.subr.mxu0 %v677
    %725 = vmatpush1.msra.mxu0 %v676
    %726 = vmatprep.subr.mxu0 %v681
    %727 = vmatpush1.msra.mxu0 %v680
    %728 = vmatprep.subr.mxu0 %v685
    %729 = vmatpush1.msra.mxu0 %v684
    %730 = vmatprep.subr.mxu0 %v689
    %731 = vmatpush1.msra.mxu0 %v688
    %732 = vmatprep.subr.mxu0 %v693
    %733 = vmatpush1.msra.mxu0 %v692
    %734 = vmatprep.subr.mxu0 %v697
    %735 = vmatpush1.msra.mxu0 %v696
    %736 = vmatprep.subr.mxu0 %v701
    %737 = vmatpush1.msra.mxu0 %v700
    %738 = vmatprep.subr.mxu0 %v705
    %739 = vmatpush1.msra.mxu0 %v704
    %740 = vmatprep.subr.mxu0 0.0
    %741 = vmatpush1.msra.mxu0 0.0
    %742 = vmatprep.subr.mxu0 0.0
    %743 = vmatpush1.msra.mxu0 0.0
    %744 = vmatprep.subr.mxu0 0.0
    %745 = vmatpush1.msra.mxu0 0.0
    %746 = vmatprep.subr.mxu0 0.0
    %747 = vmatpush1.msra.mxu0 0.0
    %748 = vmatprep.subr.mxu0 0.0
    %749 = vmatpush1.msra.mxu0 0.0
    %750 = vmatprep.subr.mxu0 0.0
    %751 = vmatpush1.msra.mxu0 0.0
    %752 = vmatprep.subr.mxu0 0.0
    %753 = vmatpush1.msra.mxu0 0.0
    %754 = vmatprep.subr.mxu0 0.0
    %755 = vmatpush1.msra.mxu0 0.0
    %756 = vmatprep.subr.mxu0 0.0
    %757 = vmatpush1.msra.mxu0 0.0
    %758 = vmatprep.subr.mxu0 0.0
    %759 = vmatpush1.msra.mxu0 0.0
    %760 = vmatprep.subr.mxu0 0.0
    %761 = vmatpush1.msra.mxu0 0.0
    %762 = vmatprep.subr.mxu0 0.0
    %763 = vmatpush1.msra.mxu0 0.0
    %764 = vmatprep.subr.mxu0 0.0
    %765 = vmatpush1.msra.mxu0 0.0
    %766 = vmatprep.subr.mxu0 0.0
    %767 = vmatpush1.msra.mxu0 0.0
    %768 = vmatprep.subr.mxu0 0.0
    %769 = vmatpush1.msra.mxu0 0.0
    %770 = vmatprep.subr.mxu0 0.0
    %771 = vmatpush1.msra.mxu0 0.0
    %772 = vmatprep.mubr.f32.mxu0 0.0
    %773 = vmatmul.mubr.f32.gmra.mrb[0].mxu0 %v635
    %v774 = vpop.f32.mrb[0].mxu0
    %v775 = vadd.f32 0.0, %v774
    %v776 = vpop.f32.mrb[0].mxu0
    %v777 = vadd.f32 0.0, %v776
    %778 = vdwg.mxu0
    %779 = vmatprep.subr.mxu0 %v647
    %780 = vmatpush1.msra.mxu0 %v646
    %781 = vmatprep.subr.mxu0 %v651
    %782 = vmatpush1.msra.mxu0 %v650
    %783 = vmatprep.subr.mxu0 %v655
    %784 = vmatpush1.msra.mxu0 %v654
    %785 = vmatprep.subr.mxu0 %v659
    %786 = vmatpush1.msra.mxu0 %v658
    %787 = vmatprep.subr.mxu0 %v663
    %788 = vmatpush1.msra.mxu0 %v662
    %789 = vmatprep.subr.mxu0 %v667
    %790 = vmatpush1.msra.mxu0 %v666
    %791 = vmatprep.subr.mxu0 %v671
    %792 = vmatpush1.msra.mxu0 %v670
    %793 = vmatprep.subr.mxu0 %v675
    %794 = vmatpush1.msra.mxu0 %v674
    %795 = vmatprep.subr.mxu0 %v679
    %796 = vmatpush1.msra.mxu0 %v678
    %797 = vmatprep.subr.mxu0 %v683
    %798 = vmatpush1.msra.mxu0 %v682
    %799 = vmatprep.subr.mxu0 %v687
    %800 = vmatpush1.msra.mxu0 %v686
    %801 = vmatprep.subr.mxu0 %v691
    %802 = vmatpush1.msra.mxu0 %v690
    %803 = vmatprep.subr.mxu0 %v695
    %804 = vmatpush1.msra.mxu0 %v694
    %805 = vmatprep.subr.mxu0 %v699
    %806 = vmatpush1.msra.mxu0 %v698
    %807 = vmatprep.subr.mxu0 %v703
    %808 = vmatpush1.msra.mxu0 %v702
    %809 = vmatprep.subr.mxu0 %v707
    %810 = vmatpush1.msra.mxu0 %v706
    %811 = vmatprep.subr.mxu0 0.0
    %812 = vmatpush1.msra.mxu0 0.0
    %813 = vmatprep.subr.mxu0 0.0
    %814 = vmatpush1.msra.mxu0 0.0
    %815 = vmatprep.subr.mxu0 0.0
    %816 = vmatpush1.msra.mxu0 0.0
    %817 = vmatprep.subr.mxu0 0.0
    %818 = vmatpush1.msra.mxu0 0.0
    %819 = vmatprep.subr.mxu0 0.0
    %820 = vmatpush1.msra.mxu0 0.0
    %821 = vmatprep.subr.mxu0 0.0
    %822 = vmatpush1.msra.mxu0 0.0
    %823 = vmatprep.subr.mxu0 0.0
    %824 = vmatpush1.msra.mxu0 0.0
    %825 = vmatprep.subr.mxu0 0.0
    %826 = vmatpush1.msra.mxu0 0.0
    %827 = vmatprep.subr.mxu0 0.0
    %828 = vmatpush1.msra.mxu0 0.0
    %829 = vmatprep.subr.mxu0 0.0
    %830 = vmatpush1.msra.mxu0 0.0
    %831 = vmatprep.subr.mxu0 0.0
    %832 = vmatpush1.msra.mxu0 0.0
    %833 = vmatprep.subr.mxu0 0.0
    %834 = vmatpush1.msra.mxu0 0.0
    %835 = vmatprep.subr.mxu0 0.0
    %836 = vmatpush1.msra.mxu0 0.0
    %837 = vmatprep.subr.mxu0 0.0
    %838 = vmatpush1.msra.mxu0 0.0
    %839 = vmatprep.subr.mxu0 0.0
    %840 = vmatpush1.msra.mxu0 0.0
    %841 = vmatprep.subr.mxu0 0.0
    %842 = vmatpush1.msra.mxu0 0.0
    %843 = vmatprep.mubr.f32.mxu0 0.0
    %844 = vmatmul.mubr.f32.gmra.mrb[0].mxu0 %v635
    %v845 = vpop.f32.mrb[0].mxu0
    %v846 = vadd.f32 0.0, %v845
    %v847 = vpop.f32.mrb[0].mxu0
    %v848 = vadd.f32 0.0, %v847
    %849 = vdwg.mxu0
    %v850 = vadd.f32 %v640, %v775
    %v851 = vadd.f32 %v641, %v777
    %v852 = vadd.f32 %v642, %v846
    %v853 = vadd.f32 %v643, %v848
    %v854 = vxor.u32 %v850, 2147483648
    %v855 = vmul.f32 %v854, 1.442695
    %v856 = vpow.pop %v855
    %v857 = vadd.f32 %v856, 1.0
    %v858 = vrcp.pop %v857
    %v859 = vmul.f32 1.0, %v858
    %v860 = vxor.u32 %v851, 2147483648
    %v861 = vmul.f32 %v860, 1.442695
    %v862 = vpow.pop %v861
    %v863 = vadd.f32 %v862, 1.0
    %v864 = vrcp.pop %v863
    %v865 = vmul.f32 1.0, %v864
    %v866 = vtanh.pop %v852
    %v867 = vxor.u32 %v853, 2147483648
    %v868 = vmul.f32 %v867, 1.442695
    %v869 = vpow.pop %v868
    %v870 = vadd.f32 %v869, 1.0
    %v871 = vrcp.pop %v870
    %v872 = vmul.f32 1.0, %v871
    %v873 = vmul.f32 %v865, %v633
    %v874 = vmul.f32 %v859, %v866
    %v875 = vadd.f32 %v873, %v874
    %v876 = vtanh.pop %v875
    %v877 = vmul.f32 %v872, %v876
    %s878 = scalar_lea.vmem [#allocation10], 8
    %879 = vst [vmem:[%s878] sm:$0xff] %v877
    %s880 = smul.u32 2, 4
    %s881 = smul.addr %s880, 8
    %s882 = scalar_lea.vmem [#allocation2], %s881
    %v883 = vld [vmem:[%s882] sm:$0xff]
    %v884 = vld [vmem:[%s882 + $0x8] sm:$0xff]
    %v885 = vld [vmem:[%s882 + $0x10] sm:$0xff]
    %v886 = vld [vmem:[%s882 + $0x18] sm:$0xff]
    %v887 = vld [vmem:[#allocation8] sm:$0xff]
    %v888 = vld [vmem:[#allocation8 + $0x8] sm:$0xff]
    %v889 = vld [vmem:[#allocation8 + $0x10] sm:$0xff]
    %v890 = vld [vmem:[#allocation8 + $0x18] sm:$0xff]
    %v891 = vld [vmem:[#allocation8 + $0x20] sm:$0xff]
    %v892 = vld [vmem:[#allocation8 + $0x28] sm:$0xff]
    %v893 = vld [vmem:[#allocation8 + $0x30] sm:$0xff]
    %v894 = vld [vmem:[#allocation8 + $0x38] sm:$0xff]
    %v895 = vld [vmem:[#allocation8 + $0x40] sm:$0xff]
    %v896 = vld [vmem:[#allocation8 + $0x48] sm:$0xff]
    %v897 = vld [vmem:[#allocation8 + $0x50] sm:$0xff]
    %v898 = vld [vmem:[#allocation8 + $0x58] sm:$0xff]
    %v899 = vld [vmem:[#allocation8 + $0x60] sm:$0xff]
    %v900 = vld [vmem:[#allocation8 + $0x68] sm:$0xff]
    %v901 = vld [vmem:[#allocation8 + $0x70] sm:$0xff]
    %v902 = vld [vmem:[#allocation8 + $0x78] sm:$0xff]
    %v903 = vld [vmem:[#allocation8 + $0x80] sm:$0xff]
    %v904 = vld [vmem:[#allocation8 + $0x88] sm:$0xff]
    %v905 = vld [vmem:[#allocation8 + $0x90] sm:$0xff]
    %v906 = vld [vmem:[#allocation8 + $0x98] sm:$0xff]
    %v907 = vld [vmem:[#allocation8 + $0xa0] sm:$0xff]
    %v908 = vld [vmem:[#allocation8 + $0xa8] sm:$0xff]
    %v909 = vld [vmem:[#allocation8 + $0xb0] sm:$0xff]
    %v910 = vld [vmem:[#allocation8 + $0xb8] sm:$0xff]
    %v911 = vld [vmem:[#allocation8 + $0xc0] sm:$0xff]
    %v912 = vld [vmem:[#allocation8 + $0xc8] sm:$0xff]
    %v913 = vld [vmem:[#allocation8 + $0xd0] sm:$0xff]
    %v914 = vld [vmem:[#allocation8 + $0xd8] sm:$0xff]
    %v915 = vld [vmem:[#allocation8 + $0xe0] sm:$0xff]
    %v916 = vld [vmem:[#allocation8 + $0xe8] sm:$0xff]
    %v917 = vld [vmem:[#allocation8 + $0xf0] sm:$0xff]
    %v918 = vld [vmem:[#allocation8 + $0xf8] sm:$0xff]
    %v919 = vld [vmem:[#allocation8 + $0x100] sm:$0xff]
    %v920 = vld [vmem:[#allocation8 + $0x108] sm:$0xff]
    %v921 = vld [vmem:[#allocation8 + $0x110] sm:$0xff]
    %v922 = vld [vmem:[#allocation8 + $0x118] sm:$0xff]
    %v923 = vld [vmem:[#allocation8 + $0x120] sm:$0xff]
    %v924 = vld [vmem:[#allocation8 + $0x128] sm:$0xff]
    %v925 = vld [vmem:[#allocation8 + $0x130] sm:$0xff]
    %v926 = vld [vmem:[#allocation8 + $0x138] sm:$0xff]
    %v927 = vld [vmem:[#allocation8 + $0x140] sm:$0xff]
    %v928 = vld [vmem:[#allocation8 + $0x148] sm:$0xff]
    %v929 = vld [vmem:[#allocation8 + $0x150] sm:$0xff]
    %v930 = vld [vmem:[#allocation8 + $0x158] sm:$0xff]
    %v931 = vld [vmem:[#allocation8 + $0x160] sm:$0xff]
    %v932 = vld [vmem:[#allocation8 + $0x168] sm:$0xff]
    %v933 = vld [vmem:[#allocation8 + $0x170] sm:$0xff]
    %v934 = vld [vmem:[#allocation8 + $0x178] sm:$0xff]
    %v935 = vld [vmem:[#allocation8 + $0x180] sm:$0xff]
    %v936 = vld [vmem:[#allocation8 + $0x188] sm:$0xff]
    %v937 = vld [vmem:[#allocation8 + $0x190] sm:$0xff]
    %v938 = vld [vmem:[#allocation8 + $0x198] sm:$0xff]
    %v939 = vld [vmem:[#allocation8 + $0x1a0] sm:$0xff]
    %v940 = vld [vmem:[#allocation8 + $0x1a8] sm:$0xff]
    %v941 = vld [vmem:[#allocation8 + $0x1b0] sm:$0xff]
    %v942 = vld [vmem:[#allocation8 + $0x1b8] sm:$0xff]
    %v943 = vld [vmem:[#allocation8 + $0x1c0] sm:$0xff]
    %v944 = vld [vmem:[#allocation8 + $0x1c8] sm:$0xff]
    %v945 = vld [vmem:[#allocation8 + $0x1d0] sm:$0xff]
    %v946 = vld [vmem:[#allocation8 + $0x1d8] sm:$0xff]
    %v947 = vld [vmem:[#allocation8 + $0x1e0] sm:$0xff]
    %v948 = vld [vmem:[#allocation8 + $0x1e8] sm:$0xff]
    %v949 = vld [vmem:[#allocation8 + $0x1f0] sm:$0xff]
    %v950 = vld [vmem:[#allocation8 + $0x1f8] sm:$0xff]
    %951 = vmatprep.subr.mxu0 %v888
    %952 = vmatpush1.msra.mxu0 %v887
    %953 = vmatprep.subr.mxu0 %v892
    %954 = vmatpush1.msra.mxu0 %v891
    %955 = vmatprep.subr.mxu0 %v896
    %956 = vmatpush1.msra.mxu0 %v895
    %957 = vmatprep.subr.mxu0 %v900
    %958 = vmatpush1.msra.mxu0 %v899
    %959 = vmatprep.subr.mxu0 %v904
    %960 = vmatpush1.msra.mxu0 %v903
    %961 = vmatprep.subr.mxu0 %v908
    %962 = vmatpush1.msra.mxu0 %v907
    %963 = vmatprep.subr.mxu0 %v912
    %964 = vmatpush1.msra.mxu0 %v911
    %965 = vmatprep.subr.mxu0 %v916
    %966 = vmatpush1.msra.mxu0 %v915
    %967 = vmatprep.subr.mxu0 %v920
    %968 = vmatpush1.msra.mxu0 %v919
    %969 = vmatprep.subr.mxu0 %v924
    %970 = vmatpush1.msra.mxu0 %v923
    %971 = vmatprep.subr.mxu0 %v928
    %972 = vmatpush1.msra.mxu0 %v927
    %973 = vmatprep.subr.mxu0 %v932
    %974 = vmatpush1.msra.mxu0 %v931
    %975 = vmatprep.subr.mxu0 %v936
    %976 = vmatpush1.msra.mxu0 %v935
    %977 = vmatprep.subr.mxu0 %v940
    %978 = vmatpush1.msra.mxu0 %v939
    %979 = vmatprep.subr.mxu0 %v944
    %980 = vmatpush1.msra.mxu0 %v943
    %981 = vmatprep.subr.mxu0 %v948
    %982 = vmatpush1.msra.mxu0 %v947
    %983 = vmatprep.subr.mxu0 0.0
    %984 = vmatpush1.msra.mxu0 0.0
    %985 = vmatprep.subr.mxu0 0.0
    %986 = vmatpush1.msra.mxu0 0.0
    %987 = vmatprep.subr.mxu0 0.0
    %988 = vmatpush1.msra.mxu0 0.0
    %989 = vmatprep.subr.mxu0 0.0
    %990 = vmatpush1.msra.mxu0 0.0
    %991 = vmatprep.subr.mxu0 0.0
    %992 = vmatpush1.msra.mxu0 0.0
    %993 = vmatprep.subr.mxu0 0.0
    %994 = vmatpush1.msra.mxu0 0.0
    %995 = vmatprep.subr.mxu0 0.0
    %996 = vmatpush1.msra.mxu0 0.0
    %997 = vmatprep.subr.mxu0 0.0
    %998 = vmatpush1.msra.mxu0 0.0
    %999 = vmatprep.subr.mxu0 0.0
    %1000 = vmatpush1.msra.mxu0 0.0
    %1001 = vmatprep.subr.mxu0 0.0
    %1002 = vmatpush1.msra.mxu0 0.0
    %1003 = vmatprep.subr.mxu0 0.0
    %1004 = vmatpush1.msra.mxu0 0.0
    %1005 = vmatprep.subr.mxu0 0.0
    %1006 = vmatpush1.msra.mxu0 0.0
    %1007 = vmatprep.subr.mxu0 0.0
    %1008 = vmatpush1.msra.mxu0 0.0
    %1009 = vmatprep.subr.mxu0 0.0
    %1010 = vmatpush1.msra.mxu0 0.0
    %1011 = vmatprep.subr.mxu0 0.0
    %1012 = vmatpush1.msra.mxu0 0.0
    %1013 = vmatprep.subr.mxu0 0.0
    %1014 = vmatpush1.msra.mxu0 0.0
    %1015 = vmatprep.mubr.f32.mxu0 0.0
    %1016 = vmatmul.mubr.f32.gmra.mrb[0].mxu0 %v877
    %v1017 = vpop.f32.mrb[0].mxu0
    %v1018 = vadd.f32 0.0, %v1017
    %v1019 = vpop.f32.mrb[0].mxu0
    %v1020 = vadd.f32 0.0, %v1019
    %1021 = vdwg.mxu0
    %1022 = vmatprep.subr.mxu0 %v890
    %1023 = vmatpush1.msra.mxu0 %v889
    %1024 = vmatprep.subr.mxu0 %v894
    %1025 = vmatpush1.msra.mxu0 %v893
    %1026 = vmatprep.subr.mxu0 %v898
    %1027 = vmatpush1.msra.mxu0 %v897
    %1028 = vmatprep.subr.mxu0 %v902
    %1029 = vmatpush1.msra.mxu0 %v901
    %1030 = vmatprep.subr.mxu0 %v906
    %1031 = vmatpush1.msra.mxu0 %v905
    %1032 = vmatprep.subr.mxu0 %v910
    %1033 = vmatpush1.msra.mxu0 %v909
    %1034 = vmatprep.subr.mxu0 %v914
    %1035 = vmatpush1.msra.mxu0 %v913
    %1036 = vmatprep.subr.mxu0 %v918
    %1037 = vmatpush1.msra.mxu0 %v917
    %1038 = vmatprep.subr.mxu0 %v922
    %1039 = vmatpush1.msra.mxu0 %v921
    %1040 = vmatprep.subr.mxu0 %v926
    %1041 = vmatpush1.msra.mxu0 %v925
    %1042 = vmatprep.subr.mxu0 %v930
    %1043 = vmatpush1.msra.mxu0 %v929
    %1044 = vmatprep.subr.mxu0 %v934
    %1045 = vmatpush1.msra.mxu0 %v933
    %1046 = vmatprep.subr.mxu0 %v938
    %1047 = vmatpush1.msra.mxu0 %v937
    %1048 = vmatprep.subr.mxu0 %v942
    %1049 = vmatpush1.msra.mxu0 %v941
    %1050 = vmatprep.subr.mxu0 %v946
    %1051 = vmatpush1.msra.mxu0 %v945
    %1052 = vmatprep.subr.mxu0 %v950
    %1053 = vmatpush1.msra.mxu0 %v949
    %1054 = vmatprep.subr.mxu0 0.0
    %1055 = vmatpush1.msra.mxu0 0.0
    %1056 = vmatprep.subr.mxu0 0.0
    %1057 = vmatpush1.msra.mxu0 0.0
    %1058 = vmatprep.subr.mxu0 0.0
    %1059 = vmatpush1.msra.mxu0 0.0
    %1060 = vmatprep.subr.mxu0 0.0
    %1061 = vmatpush1.msra.mxu0 0.0
    %1062 = vmatprep.subr.mxu0 0.0
    %1063 = vmatpush1.msra.mxu0 0.0
    %1064 = vmatprep.subr.mxu0 0.0
    %1065 = vmatpush1.msra.mxu0 0.0
    %1066 = vmatprep.subr.mxu0 0.0
    %1067 = vmatpush1.msra.mxu0 0.0
    %1068 = vmatprep.subr.mxu0 0.0
    %1069 = vmatpush1.msra.mxu0 0.0
    %1070 = vmatprep.subr.mxu0 0.0
    %1071 = vmatpush1.msra.mxu0 0.0
    %1072 = vmatprep.subr.mxu0 0.0
    %1073 = vmatpush1.msra.mxu0 0.0
    %1074 = vmatprep.subr.mxu0 0.0
    %1075 = vmatpush1.msra.mxu0 0.0
    %1076 = vmatprep.subr.mxu0 0.0
    %1077 = vmatpush1.msra.mxu0 0.0
    %1078 = vmatprep.subr.mxu0 0.0
    %1079 = vmatpush1.msra.mxu0 0.0
    %1080 = vmatprep.subr.mxu0 0.0
    %1081 = vmatpush1.msra.mxu0 0.0
    %1082 = vmatprep.subr.mxu0 0.0
    %1083 = vmatpush1.msra.mxu0 0.0
    %1084 = vmatprep.subr.mxu0 0.0
    %1085 = vmatpush1.msra.mxu0 0.0
    %1086 = vmatprep.mubr.f32.mxu0 0.0
    %1087 = vmatmul.mubr.f32.gmra.mrb[0].mxu0 %v877
    %v1088 = vpop.f32.mrb[0].mxu0
    %v1089 = vadd.f32 0.0, %v1088
    %v1090 = vpop.f32.mrb[0].mxu0
    %v1091 = vadd.f32 0.0, %v1090
    %1092 = vdwg.mxu0
    %v1093 = vadd.f32 %v883, %v1018
    %v1094 = vadd.f32 %v884, %v1020
    %v1095 = vadd.f32 %v885, %v1089
    %v1096 = vadd.f32 %v886, %v1091
    %v1097 = vxor.u32 %v1093, 2147483648
    %v1098 = vmul.f32 %v1097, 1.442695
    %v1099 = vpow.pop %v1098
    %v1100 = vadd.f32 %v1099, 1.0
    %v1101 = vrcp.pop %v1100
    %v1102 = vmul.f32 1.0, %v1101
    %v1103 = vxor.u32 %v1094, 2147483648
    %v1104 = vmul.f32 %v1103, 1.442695
    %v1105 = vpow.pop %v1104
    %v1106 = vadd.f32 %v1105, 1.0
    %v1107 = vrcp.pop %v1106
    %v1108 = vmul.f32 1.0, %v1107
    %v1109 = vtanh.pop %v1095
    %v1110 = vxor.u32 %v1096, 2147483648
    %v1111 = vmul.f32 %v1110, 1.442695
    %v1112 = vpow.pop %v1111
    %v1113 = vadd.f32 %v1112, 1.0
    %v1114 = vrcp.pop %v1113
    %v1115 = vmul.f32 1.0, %v1114
    %v1116 = vmul.f32 %v1108, %v875
    %v1117 = vmul.f32 %v1102, %v1109
    %v1118 = vadd.f32 %v1116, %v1117
    %v1119 = vtanh.pop %v1118
    %v1120 = vmul.f32 %v1115, %v1119
    %s1121 = scalar_lea.vmem [#allocation10], 16
    %1122 = vst [vmem:[%s1121] sm:$0xff] %v1120
    %s1123 = smul.u32 3, 4
    %s1124 = smul.addr %s1123, 8
    %s1125 = scalar_lea.vmem [#allocation2], %s1124
    %v1126 = vld [vmem:[%s1125] sm:$0xff]
    %v1127 = vld [vmem:[%s1125 + $0x8] sm:$0xff]
    %v1128 = vld [vmem:[%s1125 + $0x10] sm:$0xff]
    %v1129 = vld [vmem:[%s1125 + $0x18] sm:$0xff]
    %v1130 = vld [vmem:[#allocation8] sm:$0xff]
    %v1131 = vld [vmem:[#allocation8 + $0x8] sm:$0xff]
    %v1132 = vld [vmem:[#allocation8 + $0x10] sm:$0xff]
    %v1133 = vld [vmem:[#allocation8 + $0x18] sm:$0xff]
    %v1134 = vld [vmem:[#allocation8 + $0x20] sm:$0xff]
    %v1135 = vld [vmem:[#allocation8 + $0x28] sm:$0xff]
    %v1136 = vld [vmem:[#allocation8 + $0x30] sm:$0xff]
    %v1137 = vld [vmem:[#allocation8 + $0x38] sm:$0xff]
    %v1138 = vld [vmem:[#allocation8 + $0x40] sm:$0xff]
    %v1139 = vld [vmem:[#allocation8 + $0x48] sm:$0xff]
    %v1140 = vld [vmem:[#allocation8 + $0x50] sm:$0xff]
    %v1141 = vld [vmem:[#allocation8 + $0x58] sm:$0xff]
    %v1142 = vld [vmem:[#allocation8 + $0x60] sm:$0xff]
    %v1143 = vld [vmem:[#allocation8 + $0x68] sm:$0xff]
    %v1144 = vld [vmem:[#allocation8 + $0x70] sm:$0xff]
    %v1145 = vld [vmem:[#allocation8 + $0x78] sm:$0xff]
    %v1146 = vld [vmem:[#allocation8 + $0x80] sm:$0xff]
    %v1147 = vld [vmem:[#allocation8 + $0x88] sm:$0xff]
    %v1148 = vld [vmem:[#allocation8 + $0x90] sm:$0xff]
    %v1149 = vld [vmem:[#allocation8 + $0x98] sm:$0xff]
    %v1150 = vld [vmem:[#allocation8 + $0xa0] sm:$0xff]
    %v1151 = vld [vmem:[#allocation8 + $0xa8] sm:$0xff]
    %v1152 = vld [vmem:[#allocation8 + $0xb0] sm:$0xff]
    %v1153 = vld [vmem:[#allocation8 + $0xb8] sm:$0xff]
    %v1154 = vld [vmem:[#allocation8 + $0xc0] sm:$0xff]
    %v1155 = vld [vmem:[#allocation8 + $0xc8] sm:$0xff]
    %v1156 = vld [vmem:[#allocation8 + $0xd0] sm:$0xff]
    %v1157 = vld [vmem:[#allocation8 + $0xd8] sm:$0xff]
    %v1158 = vld [vmem:[#allocation8 + $0xe0] sm:$0xff]
    %v1159 = vld [vmem:[#allocation8 + $0xe8] sm:$0xff]
    %v1160 = vld [vmem:[#allocation8 + $0xf0] sm:$0xff]
    %v1161 = vld [vmem:[#allocation8 + $0xf8] sm:$0xff]
    %v1162 = vld [vmem:[#allocation8 + $0x100] sm:$0xff]
    %v1163 = vld [vmem:[#allocation8 + $0x108] sm:$0xff]
    %v1164 = vld [vmem:[#allocation8 + $0x110] sm:$0xff]
    %v1165 = vld [vmem:[#allocation8 + $0x118] sm:$0xff]
    %v1166 = vld [vmem:[#allocation8 + $0x120] sm:$0xff]
    %v1167 = vld [vmem:[#allocation8 + $0x128] sm:$0xff]
    %v1168 = vld [vmem:[#allocation8 + $0x130] sm:$0xff]
    %v1169 = vld [vmem:[#allocation8 + $0x138] sm:$0xff]
    %v1170 = vld [vmem:[#allocation8 + $0x140] sm:$0xff]
    %v1171 = vld [vmem:[#allocation8 + $0x148] sm:$0xff]
    %v1172 = vld [vmem:[#allocation8 + $0x150] sm:$0xff]
    %v1173 = vld [vmem:[#allocation8 + $0x158] sm:$0xff]
    %v1174 = vld [vmem:[#allocation8 + $0x160] sm:$0xff]
    %v1175 = vld [vmem:[#allocation8 + $0x168] sm:$0xff]
    %v1176 = vld [vmem:[#allocation8 + $0x170] sm:$0xff]
    %v1177 = vld [vmem:[#allocation8 + $0x178] sm:$0xff]
    %v1178 = vld [vmem:[#allocation8 + $0x180] sm:$0xff]
    %v1179 = vld [vmem:[#allocation8 + $0x188] sm:$0xff]
    %v1180 = vld [vmem:[#allocation8 + $0x190] sm:$0xff]
    %v1181 = vld [vmem:[#allocation8 + $0x198] sm:$0xff]
    %v1182 = vld [vmem:[#allocation8 + $0x1a0] sm:$0xff]
    %v1183 = vld [vmem:[#allocation8 + $0x1a8] sm:$0xff]
    %v1184 = vld [vmem:[#allocation8 + $0x1b0] sm:$0xff]
    %v1185 = vld [vmem:[#allocation8 + $0x1b8] sm:$0xff]
    %v1186 = vld [vmem:[#allocation8 + $0x1c0] sm:$0xff]
    %v1187 = vld [vmem:[#allocation8 + $0x1c8] sm:$0xff]
    %v1188 = vld [vmem:[#allocation8 + $0x1d0] sm:$0xff]
    %v1189 = vld [vmem:[#allocation8 + $0x1d8] sm:$0xff]
    %v1190 = vld [vmem:[#allocation8 + $0x1e0] sm:$0xff]
    %v1191 = vld [vmem:[#allocation8 + $0x1e8] sm:$0xff]
    %v1192 = vld [vmem:[#allocation8 + $0x1f0] sm:$0xff]
    %v1193 = vld [vmem:[#allocation8 + $0x1f8] sm:$0xff]
    %1194 = vmatprep.subr.mxu0 %v1131
    %1195 = vmatpush1.msra.mxu0 %v1130
    %1196 = vmatprep.subr.mxu0 %v1135
    %1197 = vmatpush1.msra.mxu0 %v1134
    %1198 = vmatprep.subr.mxu0 %v1139
    %1199 = vmatpush1.msra.mxu0 %v1138
    %1200 = vmatprep.subr.mxu0 %v1143
    %1201 = vmatpush1.msra.mxu0 %v1142
    %1202 = vmatprep.subr.mxu0 %v1147
    %1203 = vmatpush1.msra.mxu0 %v1146
    %1204 = vmatprep.subr.mxu0 %v1151
    %1205 = vmatpush1.msra.mxu0 %v1150
    %1206 = vmatprep.subr.mxu0 %v1155
    %1207 = vmatpush1.msra.mxu0 %v1154
    %1208 = vmatprep.subr.mxu0 %v1159
    %1209 = vmatpush1.msra.mxu0 %v1158
    %1210 = vmatprep.subr.mxu0 %v1163
    %1211 = vmatpush1.msra.mxu0 %v1162
    %1212 = vmatprep.subr.mxu0 %v1167
    %1213 = vmatpush1.msra.mxu0 %v1166
    %1214 = vmatprep.subr.mxu0 %v1171
    %1215 = vmatpush1.msra.mxu0 %v1170
    %1216 = vmatprep.subr.mxu0 %v1175
    %1217 = vmatpush1.msra.mxu0 %v1174
    %1218 = vmatprep.subr.mxu0 %v1179
    %1219 = vmatpush1.msra.mxu0 %v1178
    %1220 = vmatprep.subr.mxu0 %v1183
    %1221 = vmatpush1.msra.mxu0 %v1182
    %1222 = vmatprep.subr.mxu0 %v1187
    %1223 = vmatpush1.msra.mxu0 %v1186
    %1224 = vmatprep.subr.mxu0 %v1191
    %1225 = vmatpush1.msra.mxu0 %v1190
    %1226 = vmatprep.subr.mxu0 0.0
    %1227 = vmatpush1.msra.mxu0 0.0
    %1228 = vmatprep.subr.mxu0 0.0
    %1229 = vmatpush1.msra.mxu0 0.0
    %1230 = vmatprep.subr.mxu0 0.0
    %1231 = vmatpush1.msra.mxu0 0.0
    %1232 = vmatprep.subr.mxu0 0.0
    %1233 = vmatpush1.msra.mxu0 0.0
    %1234 = vmatprep.subr.mxu0 0.0
    %1235 = vmatpush1.msra.mxu0 0.0
    %1236 = vmatprep.subr.mxu0 0.0
    %1237 = vmatpush1.msra.mxu0 0.0
    %1238 = vmatprep.subr.mxu0 0.0
    %1239 = vmatpush1.msra.mxu0 0.0
    %1240 = vmatprep.subr.mxu0 0.0
    %1241 = vmatpush1.msra.mxu0 0.0
    %1242 = vmatprep.subr.mxu0 0.0
    %1243 = vmatpush1.msra.mxu0 0.0
    %1244 = vmatprep.subr.mxu0 0.0
    %1245 = vmatpush1.msra.mxu0 0.0
    %1246 = vmatprep.subr.mxu0 0.0
    %1247 = vmatpush1.msra.mxu0 0.0
    %1248 = vmatprep.subr.mxu0 0.0
    %1249 = vmatpush1.msra.mxu0 0.0
    %1250 = vmatprep.subr.mxu0 0.0
    %1251 = vmatpush1.msra.mxu0 0.0
    %1252 = vmatprep.subr.mxu0 0.0
    %1253 = vmatpush1.msra.mxu0 0.0
    %1254 = vmatprep.subr.mxu0 0.0
    %1255 = vmatpush1.msra.mxu0 0.0
    %1256 = vmatprep.subr.mxu0 0.0
    %1257 = vmatpush1.msra.mxu0 0.0
    %1258 = vmatprep.mubr.f32.mxu0 0.0
    %1259 = vmatmul.mubr.f32.gmra.mrb[0].mxu0 %v1120
    %v1260 = vpop.f32.mrb[0].mxu0
    %v1261 = vadd.f32 0.0, %v1260
    %v1262 = vpop.f32.mrb[0].mxu0
    %v1263 = vadd.f32 0.0, %v1262
    %1264 = vdwg.mxu0
    %1265 = vmatprep.subr.mxu0 %v1133
    %1266 = vmatpush1.msra.mxu0 %v1132
    %1267 = vmatprep.subr.mxu0 %v1137
    %1268 = vmatpush1.msra.mxu0 %v1136
    %1269 = vmatprep.subr.mxu0 %v1141
    %1270 = vmatpush1.msra.mxu0 %v1140
    %1271 = vmatprep.subr.mxu0 %v1145
    %1272 = vmatpush1.msra.mxu0 %v1144
    %1273 = vmatprep.subr.mxu0 %v1149
    %1274 = vmatpush1.msra.mxu0 %v1148
    %1275 = vmatprep.subr.mxu0 %v1153
    %1276 = vmatpush1.msra.mxu0 %v1152
    %1277 = vmatprep.subr.mxu0 %v1157
    %1278 = vmatpush1.msra.mxu0 %v1156
    %1279 = vmatprep.subr.mxu0 %v1161
    %1280 = vmatpush1.msra.mxu0 %v1160
    %1281 = vmatprep.subr.mxu0 %v1165
    %1282 = vmatpush1.msra.mxu0 %v1164
    %1283 = vmatprep.subr.mxu0 %v1169
    %1284 = vmatpush1.msra.mxu0 %v1168
    %1285 = vmatprep.subr.mxu0 %v1173
    %1286 = vmatpush1.msra.mxu0 %v1172
    %1287 = vmatprep.subr.mxu0 %v1177
    %1288 = vmatpush1.msra.mxu0 %v1176
    %1289 = vmatprep.subr.mxu0 %v1181
    %1290 = vmatpush1.msra.mxu0 %v1180
    %1291 = vmatprep.subr.mxu0 %v1185
    %1292 = vmatpush1.msra.mxu0 %v1184
    %1293 = vmatprep.subr.mxu0 %v1189
    %1294 = vmatpush1.msra.mxu0 %v1188
    %1295 = vmatprep.subr.mxu0 %v1193
    %1296 = vmatpush1.msra.mxu0 %v1192
    %1297 = vmatprep.subr.mxu0 0.0
    %1298 = vmatpush1.msra.mxu0 0.0
    %1299 = vmatprep.subr.mxu0 0.0
    %1300 = vmatpush1.msra.mxu0 0.0
    %1301 = vmatprep.subr.mxu0 0.0
    %1302 = vmatpush1.msra.mxu0 0.0
    %1303 = vmatprep.subr.mxu0 0.0
    %1304 = vmatpush1.msra.mxu0 0.0
    %1305 = vmatprep.subr.mxu0 0.0
    %1306 = vmatpush1.msra.mxu0 0.0
    %1307 = vmatprep.subr.mxu0 0.0
    %1308 = vmatpush1.msra.mxu0 0.0
    %1309 = vmatprep.subr.mxu0 0.0
    %1310 = vmatpush1.msra.mxu0 0.0
    %1311 = vmatprep.subr.mxu0 0.0
    %1312 = vmatpush1.msra.mxu0 0.0
    %1313 = vmatprep.subr.mxu0 0.0
    %1314 = vmatpush1.msra.mxu0 0.0
    %1315 = vmatprep.subr.mxu0 0.0
    %1316 = vmatpush1.msra.mxu0 0.0
    %1317 = vmatprep.subr.mxu0 0.0
    %1318 = vmatpush1.msra.mxu0 0.0
    %1319 = vmatprep.subr.mxu0 0.0
    %1320 = vmatpush1.msra.mxu0 0.0
    %1321 = vmatprep.subr.mxu0 0.0
    %1322 = vmatpush1.msra.mxu0 0.0
    %1323 = vmatprep.subr.mxu0 0.0
    %1324 = vmatpush1.msra.mxu0 0.0
    %1325 = vmatprep.subr.mxu0 0.0
    %1326 = vmatpush1.msra.mxu0 0.0
    %1327 = vmatprep.subr.mxu0 0.0
    %1328 = vmatpush1.msra.mxu0 0.0
    %1329 = vmatprep.mubr.f32.mxu0 0.0
    %1330 = vmatmul.mubr.f32.gmra.mrb[0].mxu0 %v1120
    %v1331 = vpop.f32.mrb[0].mxu0
    %v1332 = vadd.f32 0.0, %v1331
    %v1333 = vpop.f32.mrb[0].mxu0
    %v1334 = vadd.f32 0.0, %v1333
    %1335 = vdwg.mxu0
    %v1336 = vadd.f32 %v1126, %v1261
    %v1337 = vadd.f32 %v1127, %v1263
    %v1338 = vadd.f32 %v1128, %v1332
    %v1339 = vadd.f32 %v1129, %v1334
    %v1340 = vxor.u32 %v1336, 2147483648
    %v1341 = vmul.f32 %v1340, 1.442695
    %v1342 = vpow.pop %v1341
    %v1343 = vadd.f32 %v1342, 1.0
    %v1344 = vrcp.pop %v1343
    %v1345 = vmul.f32 1.0, %v1344
    %v1346 = vxor.u32 %v1337, 2147483648
    %v1347 = vmul.f32 %v1346, 1.442695
    %v1348 = vpow.pop %v1347
    %v1349 = vadd.f32 %v1348, 1.0
    %v1350 = vrcp.pop %v1349
    %v1351 = vmul.f32 1.0, %v1350
    %v1352 = vtanh.pop %v1338
    %v1353 = vxor.u32 %v1339, 2147483648
    %v1354 = vmul.f32 %v1353, 1.442695
    %v1355 = vpow.pop %v1354
    %v1356 = vadd.f32 %v1355, 1.0
    %v1357 = vrcp.pop %v1356
    %v1358 = vmul.f32 1.0, %v1357
    %v1359 = vmul.f32 %v1351, %v1118
    %v1360 = vmul.f32 %v1345, %v1352
    %v1361 = vadd.f32 %v1359, %v1360
    %v1362 = vtanh.pop %v1361
    %v1363 = vmul.f32 %v1358, %v1362
    %s1364 = scalar_lea.vmem [#allocation10], 24
    %1365 = vst [vmem:[%s1364] sm:$0xff] %v1363
    %s1366 = smul.u32 4, 4
    %s1367 = smul.addr %s1366, 8
    %s1368 = scalar_lea.vmem [#allocation2], %s1367
    %v1369 = vld [vmem:[%s1368] sm:$0xff]
    %v1370 = vld [vmem:[%s1368 + $0x8] sm:$0xff]
    %v1371 = vld [vmem:[%s1368 + $0x10] sm:$0xff]
    %v1372 = vld [vmem:[%s1368 + $0x18] sm:$0xff]
    %v1373 = vld [vmem:[#allocation8] sm:$0xff]
    %v1374 = vld [vmem:[#allocation8 + $0x8] sm:$0xff]
    %v1375 = vld [vmem:[#allocation8 + $0x10] sm:$0xff]
    %v1376 = vld [vmem:[#allocation8 + $0x18] sm:$0xff]
    %v1377 = vld [vmem:[#allocation8 + $0x20] sm:$0xff]
    %v1378 = vld [vmem:[#allocation8 + $0x28] sm:$0xff]
    %v1379 = vld [vmem:[#allocation8 + $0x30] sm:$0xff]
    %v1380 = vld [vmem:[#allocation8 + $0x38] sm:$0xff]
    %v1381 = vld [vmem:[#allocation8 + $0x40] sm:$0xff]
    %v1382 = vld [vmem:[#allocation8 + $0x48] sm:$0xff]
    %v1383 = vld [vmem:[#allocation8 + $0x50] sm:$0xff]
    %v1384 = vld [vmem:[#allocation8 + $0x58] sm:$0xff]
    %v1385 = vld [vmem:[#allocation8 + $0x60] sm:$0xff]
    %v1386 = vld [vmem:[#allocation8 + $0x68] sm:$0xff]
    %v1387 = vld [vmem:[#allocation8 + $0x70] sm:$0xff]
    %v1388 = vld [vmem:[#allocation8 + $0x78] sm:$0xff]
    %v1389 = vld [vmem:[#allocation8 + $0x80] sm:$0xff]
    %v1390 = vld [vmem:[#allocation8 + $0x88] sm:$0xff]
    %v1391 = vld [vmem:[#allocation8 + $0x90] sm:$0xff]
    %v1392 = vld [vmem:[#allocation8 + $0x98] sm:$0xff]
    %v1393 = vld [vmem:[#allocation8 + $0xa0] sm:$0xff]
    %v1394 = vld [vmem:[#allocation8 + $0xa8] sm:$0xff]
    %v1395 = vld [vmem:[#allocation8 + $0xb0] sm:$0xff]
    %v1396 = vld [vmem:[#allocation8 + $0xb8] sm:$0xff]
    %v1397 = vld [vmem:[#allocation8 + $0xc0] sm:$0xff]
    %v1398 = vld [vmem:[#allocation8 + $0xc8] sm:$0xff]
    %v1399 = vld [vmem:[#allocation8 + $0xd0] sm:$0xff]
    %v1400 = vld [vmem:[#allocation8 + $0xd8] sm:$0xff]
    %v1401 = vld [vmem:[#allocation8 + $0xe0] sm:$0xff]
    %v1402 = vld [vmem:[#allocation8 + $0xe8] sm:$0xff]
    %v1403 = vld [vmem:[#allocation8 + $0xf0] sm:$0xff]
    %v1404 = vld [vmem:[#allocation8 + $0xf8] sm:$0xff]
    %v1405 = vld [vmem:[#allocation8 + $0x100] sm:$0xff]
    %v1406 = vld [vmem:[#allocation8 + $0x108] sm:$0xff]
    %v1407 = vld [vmem:[#allocation8 + $0x110] sm:$0xff]
    %v1408 = vld [vmem:[#allocation8 + $0x118] sm:$0xff]
    %v1409 = vld [vmem:[#allocation8 + $0x120] sm:$0xff]
    %v1410 = vld [vmem:[#allocation8 + $0x128] sm:$0xff]
    %v1411 = vld [vmem:[#allocation8 + $0x130] sm:$0xff]
    %v1412 = vld [vmem:[#allocation8 + $0x138] sm:$0xff]
    %v1413 = vld [vmem:[#allocation8 + $0x140] sm:$0xff]
    %v1414 = vld [vmem:[#allocation8 + $0x148] sm:$0xff]
    %v1415 = vld [vmem:[#allocation8 + $0x150] sm:$0xff]
    %v1416 = vld [vmem:[#allocation8 + $0x158] sm:$0xff]
    %v1417 = vld [vmem:[#allocation8 + $0x160] sm:$0xff]
    %v1418 = vld [vmem:[#allocation8 + $0x168] sm:$0xff]
    %v1419 = vld [vmem:[#allocation8 + $0x170] sm:$0xff]
    %v1420 = vld [vmem:[#allocation8 + $0x178] sm:$0xff]
    %v1421 = vld [vmem:[#allocation8 + $0x180] sm:$0xff]
    %v1422 = vld [vmem:[#allocation8 + $0x188] sm:$0xff]
    %v1423 = vld [vmem:[#allocation8 + $0x190] sm:$0xff]
    %v1424 = vld [vmem:[#allocation8 + $0x198] sm:$0xff]
    %v1425 = vld [vmem:[#allocation8 + $0x1a0] sm:$0xff]
    %v1426 = vld [vmem:[#allocation8 + $0x1a8] sm:$0xff]
    %v1427 = vld [vmem:[#allocation8 + $0x1b0] sm:$0xff]
    %v1428 = vld [vmem:[#allocation8 + $0x1b8] sm:$0xff]
    %v1429 = vld [vmem:[#allocation8 + $0x1c0] sm:$0xff]
    %v1430 = vld [vmem:[#allocation8 + $0x1c8] sm:$0xff]
    %v1431 = vld [vmem:[#allocation8 + $0x1d0] sm:$0xff]
    %v1432 = vld [vmem:[#allocation8 + $0x1d8] sm:$0xff]
    %v1433 = vld [vmem:[#allocation8 + $0x1e0] sm:$0xff]
    %v1434 = vld [vmem:[#allocation8 + $0x1e8] sm:$0xff]
    %v1435 = vld [vmem:[#allocation8 + $0x1f0] sm:$0xff]
    %v1436 = vld [vmem:[#allocation8 + $0x1f8] sm:$0xff]
    %1437 = vmatprep.subr.mxu0 %v1374
    %1438 = vmatpush1.msra.mxu0 %v1373
    %1439 = vmatprep.subr.mxu0 %v1378
    %1440 = vmatpush1.msra.mxu0 %v1377
    %1441 = vmatprep.subr.mxu0 %v1382
    %1442 = vmatpush1.msra.mxu0 %v1381
    %1443 = vmatprep.subr.mxu0 %v1386
    %1444 = vmatpush1.msra.mxu0 %v1385
    %1445 = vmatprep.subr.mxu0 %v1390
    %1446 = vmatpush1.msra.mxu0 %v1389
    %1447 = vmatprep.subr.mxu0 %v1394
    %1448 = vmatpush1.msra.mxu0 %v1393
    %1449 = vmatprep.subr.mxu0 %v1398
    %1450 = vmatpush1.msra.mxu0 %v1397
    %1451 = vmatprep.subr.mxu0 %v1402
    %1452 = vmatpush1.msra.mxu0 %v1401
    %1453 = vmatprep.subr.mxu0 %v1406
    %1454 = vmatpush1.msra.mxu0 %v1405
    %1455 = vmatprep.subr.mxu0 %v1410
    %1456 = vmatpush1.msra.mxu0 %v1409
    %1457 = vmatprep.subr.mxu0 %v1414
    %1458 = vmatpush1.msra.mxu0 %v1413
    %1459 = vmatprep.subr.mxu0 %v1418
    %1460 = vmatpush1.msra.mxu0 %v1417
    %1461 = vmatprep.subr.mxu0 %v1422
    %1462 = vmatpush1.msra.mxu0 %v1421
    %1463 = vmatprep.subr.mxu0 %v1426
    %1464 = vmatpush1.msra.mxu0 %v1425
    %1465 = vmatprep.subr.mxu0 %v1430
    %1466 = vmatpush1.msra.mxu0 %v1429
    %1467 = vmatprep.subr.mxu0 %v1434
    %1468 = vmatpush1.msra.mxu0 %v1433
    %1469 = vmatprep.subr.mxu0 0.0
    %1470 = vmatpush1.msra.mxu0 0.0
    %1471 = vmatprep.subr.mxu0 0.0
    %1472 = vmatpush1.msra.mxu0 0.0
    %1473 = vmatprep.subr.mxu0 0.0
    %1474 = vmatpush1.msra.mxu0 0.0
    %1475 = vmatprep.subr.mxu0 0.0
    %1476 = vmatpush1.msra.mxu0 0.0
    %1477 = vmatprep.subr.mxu0 0.0
    %1478 = vmatpush1.msra.mxu0 0.0
    %1479 = vmatprep.subr.mxu0 0.0
    %1480 = vmatpush1.msra.mxu0 0.0
    %1481 = vmatprep.subr.mxu0 0.0
    %1482 = vmatpush1.msra.mxu0 0.0
    %1483 = vmatprep.subr.mxu0 0.0
    %1484 = vmatpush1.msra.mxu0 0.0
    %1485 = vmatprep.subr.mxu0 0.0
    %1486 = vmatpush1.msra.mxu0 0.0
    %1487 = vmatprep.subr.mxu0 0.0
    %1488 = vmatpush1.msra.mxu0 0.0
    %1489 = vmatprep.subr.mxu0 0.0
    %1490 = vmatpush1.msra.mxu0 0.0
    %1491 = vmatprep.subr.mxu0 0.0
    %1492 = vmatpush1.msra.mxu0 0.0
    %1493 = vmatprep.subr.mxu0 0.0
    %1494 = vmatpush1.msra.mxu0 0.0
    %1495 = vmatprep.subr.mxu0 0.0
    %1496 = vmatpush1.msra.mxu0 0.0
    %1497 = vmatprep.subr.mxu0 0.0
    %1498 = vmatpush1.msra.mxu0 0.0
    %1499 = vmatprep.subr.mxu0 0.0
    %1500 = vmatpush1.msra.mxu0 0.0
    %1501 = vmatprep.mubr.f32.mxu0 0.0
    %1502 = vmatmul.mubr.f32.gmra.mrb[0].mxu0 %v1363
    %v1503 = vpop.f32.mrb[0].mxu0
    %v1504 = vadd.f32 0.0, %v1503
    %v1505 = vpop.f32.mrb[0].mxu0
    %v1506 = vadd.f32 0.0, %v1505
    %1507 = vdwg.mxu0
    %1508 = vmatprep.subr.mxu0 %v1376
    %1509 = vmatpush1.msra.mxu0 %v1375
    %1510 = vmatprep.subr.mxu0 %v1380
    %1511 = vmatpush1.msra.mxu0 %v1379
    %1512 = vmatprep.subr.mxu0 %v1384
    %1513 = vmatpush1.msra.mxu0 %v1383
    %1514 = vmatprep.subr.mxu0 %v1388
    %1515 = vmatpush1.msra.mxu0 %v1387
    %1516 = vmatprep.subr.mxu0 %v1392
    %1517 = vmatpush1.msra.mxu0 %v1391
    %1518 = vmatprep.subr.mxu0 %v1396
    %1519 = vmatpush1.msra.mxu0 %v1395
    %1520 = vmatprep.subr.mxu0 %v1400
    %1521 = vmatpush1.msra.mxu0 %v1399
    %1522 = vmatprep.subr.mxu0 %v1404
    %1523 = vmatpush1.msra.mxu0 %v1403
    %1524 = vmatprep.subr.mxu0 %v1408
    %1525 = vmatpush1.msra.mxu0 %v1407
    %1526 = vmatprep.subr.mxu0 %v1412
    %1527 = vmatpush1.msra.mxu0 %v1411
    %1528 = vmatprep.subr.mxu0 %v1416
    %1529 = vmatpush1.msra.mxu0 %v1415
    %1530 = vmatprep.subr.mxu0 %v1420
    %1531 = vmatpush1.msra.mxu0 %v1419
    %1532 = vmatprep.subr.mxu0 %v1424
    %1533 = vmatpush1.msra.mxu0 %v1423
    %1534 = vmatprep.subr.mxu0 %v1428
    %1535 = vmatpush1.msra.mxu0 %v1427
    %1536 = vmatprep.subr.mxu0 %v1432
    %1537 = vmatpush1.msra.mxu0 %v1431
    %1538 = vmatprep.subr.mxu0 %v1436
    %1539 = vmatpush1.msra.mxu0 %v1435
    %1540 = vmatprep.subr.mxu0 0.0
    %1541 = vmatpush1.msra.mxu0 0.0
    %1542 = vmatprep.subr.mxu0 0.0
    %1543 = vmatpush1.msra.mxu0 0.0
    %1544 = vmatprep.subr.mxu0 0.0
    %1545 = vmatpush1.msra.mxu0 0.0
    %1546 = vmatprep.subr.mxu0 0.0
    %1547 = vmatpush1.msra.mxu0 0.0
    %1548 = vmatprep.subr.mxu0 0.0
    %1549 = vmatpush1.msra.mxu0 0.0
    %1550 = vmatprep.subr.mxu0 0.0
    %1551 = vmatpush1.msra.mxu0 0.0
    %1552 = vmatprep.subr.mxu0 0.0
    %1553 = vmatpush1.msra.mxu0 0.0
    %1554 = vmatprep.subr.mxu0 0.0
    %1555 = vmatpush1.msra.mxu0 0.0
    %1556 = vmatprep.subr.mxu0 0.0
    %1557 = vmatpush1.msra.mxu0 0.0
    %1558 = vmatprep.subr.mxu0 0.0
    %1559 = vmatpush1.msra.mxu0 0.0
    %1560 = vmatprep.subr.mxu0 0.0
    %1561 = vmatpush1.msra.mxu0 0.0
    %1562 = vmatprep.subr.mxu0 0.0
    %1563 = vmatpush1.msra.mxu0 0.0
    %1564 = vmatprep.subr.mxu0 0.0
    %1565 = vmatpush1.msra.mxu0 0.0
    %1566 = vmatprep.subr.mxu0 0.0
    %1567 = vmatpush1.msra.mxu0 0.0
    %1568 = vmatprep.subr.mxu0 0.0
    %1569 = vmatpush1.msra.mxu0 0.0
    %1570 = vmatprep.subr.mxu0 0.0
    %1571 = vmatpush1.msra.mxu0 0.0
    %1572 = vmatprep.mubr.f32.mxu0 0.0
    %1573 = vmatmul.mubr.f32.gmra.mrb[0].mxu0 %v1363
    %v1574 = vpop.f32.mrb[0].mxu0
    %v1575 = vadd.f32 0.0, %v1574
    %v1576 = vpop.f32.mrb[0].mxu0
    %v1577 = vadd.f32 0.0, %v1576
    %1578 = vdwg.mxu0
    %v1579 = vadd.f32 %v1369, %v1504
    %v1580 = vadd.f32 %v1370, %v1506
    %v1581 = vadd.f32 %v1371, %v1575
    %v1582 = vadd.f32 %v1372, %v1577
    %v1583 = vxor.u32 %v1579, 2147483648
    %v1584 = vmul.f32 %v1583, 1.442695
    %v1585 = vpow.pop %v1584
    %v1586 = vadd.f32 %v1585, 1.0
    %v1587 = vrcp.pop %v1586
    %v1588 = vmul.f32 1.0, %v1587
    %v1589 = vxor.u32 %v1580, 2147483648
    %v1590 = vmul.f32 %v1589, 1.442695
    %v1591 = vpow.pop %v1590
    %v1592 = vadd.f32 %v1591, 1.0
    %v1593 = vrcp.pop %v1592
    %v1594 = vmul.f32 1.0, %v1593
    %v1595 = vtanh.pop %v1581
    %v1596 = vxor.u32 %v1582, 2147483648
    %v1597 = vmul.f32 %v1596, 1.442695
    %v1598 = vpow.pop %v1597
    %v1599 = vadd.f32 %v1598, 1.0
    %v1600 = vrcp.pop %v1599
    %v1601 = vmul.f32 1.0, %v1600
    %v1602 = vmul.f32 %v1594, %v1361
    %v1603 = vmul.f32 %v1588, %v1595
    %v1604 = vadd.f32 %v1602, %v1603
    %v1605 = vtanh.pop %v1604
    %v1606 = vmul.f32 %v1601, %v1605
    %s1607 = scalar_lea.vmem [#allocation10], 32
    %1608 = vst [vmem:[%s1607] sm:$0xff] %v1606
    %s1609 = smul.u32 5, 4
    %s1610 = smul.addr %s1609, 8
    %s1611 = scalar_lea.vmem [#allocation2], %s1610
    %v1612 = vld [vmem:[%s1611] sm:$0xff]
    %v1613 = vld [vmem:[%s1611 + $0x8] sm:$0xff]
    %v1614 = vld [vmem:[%s1611 + $0x10] sm:$0xff]
    %v1615 = vld [vmem:[%s1611 + $0x18] sm:$0xff]
    %v1616 = vld [vmem:[#allocation8] sm:$0xff]
    %v1617 = vld [vmem:[#allocation8 + $0x8] sm:$0xff]
    %v1618 = vld [vmem:[#allocation8 + $0x10] sm:$0xff]
    %v1619 = vld [vmem:[#allocation8 + $0x18] sm:$0xff]
    %v1620 = vld [vmem:[#allocation8 + $0x20] sm:$0xff]
    %v1621 = vld [vmem:[#allocation8 + $0x28] sm:$0xff]
    %v1622 = vld [vmem:[#allocation8 + $0x30] sm:$0xff]
    %v1623 = vld [vmem:[#allocation8 + $0x38] sm:$0xff]
    %v1624 = vld [vmem:[#allocation8 + $0x40] sm:$0xff]
    %v1625 = vld [vmem:[#allocation8 + $0x48] sm:$0xff]
    %v1626 = vld [vmem:[#allocation8 + $0x50] sm:$0xff]
    %v1627 = vld [vmem:[#allocation8 + $0x58] sm:$0xff]
    %v1628 = vld [vmem:[#allocation8 + $0x60] sm:$0xff]
    %v1629 = vld [vmem:[#allocation8 + $0x68] sm:$0xff]
    %v1630 = vld [vmem:[#allocation8 + $0x70] sm:$0xff]
    %v1631 = vld [vmem:[#allocation8 + $0x78] sm:$0xff]
    %v1632 = vld [vmem:[#allocation8 + $0x80] sm:$0xff]
    %v1633 = vld [vmem:[#allocation8 + $0x88] sm:$0xff]
    %v1634 = vld [vmem:[#allocation8 + $0x90] sm:$0xff]
    %v1635 = vld [vmem:[#allocation8 + $0x98] sm:$0xff]
    %v1636 = vld [vmem:[#allocation8 + $0xa0] sm:$0xff]
    %v1637 = vld [vmem:[#allocation8 + $0xa8] sm:$0xff]
    %v1638 = vld [vmem:[#allocation8 + $0xb0] sm:$0xff]
    %v1639 = vld [vmem:[#allocation8 + $0xb8] sm:$0xff]
    %v1640 = vld [vmem:[#allocation8 + $0xc0] sm:$0xff]
    %v1641 = vld [vmem:[#allocation8 + $0xc8] sm:$0xff]
    %v1642 = vld [vmem:[#allocation8 + $0xd0] sm:$0xff]
    %v1643 = vld [vmem:[#allocation8 + $0xd8] sm:$0xff]
    %v1644 = vld [vmem:[#allocation8 + $0xe0] sm:$0xff]
    %v1645 = vld [vmem:[#allocation8 + $0xe8] sm:$0xff]
    %v1646 = vld [vmem:[#allocation8 + $0xf0] sm:$0xff]
    %v1647 = vld [vmem:[#allocation8 + $0xf8] sm:$0xff]
    %v1648 = vld [vmem:[#allocation8 + $0x100] sm:$0xff]
    %v1649 = vld [vmem:[#allocation8 + $0x108] sm:$0xff]
    %v1650 = vld [vmem:[#allocation8 + $0x110] sm:$0xff]
    %v1651 = vld [vmem:[#allocation8 + $0x118] sm:$0xff]
    %v1652 = vld [vmem:[#allocation8 + $0x120] sm:$0xff]
    %v1653 = vld [vmem:[#allocation8 + $0x128] sm:$0xff]
    %v1654 = vld [vmem:[#allocation8 + $0x130] sm:$0xff]
    %v1655 = vld [vmem:[#allocation8 + $0x138] sm:$0xff]
    %v1656 = vld [vmem:[#allocation8 + $0x140] sm:$0xff]
    %v1657 = vld [vmem:[#allocation8 + $0x148] sm:$0xff]
    %v1658 = vld [vmem:[#allocation8 + $0x150] sm:$0xff]
    %v1659 = vld [vmem:[#allocation8 + $0x158] sm:$0xff]
    %v1660 = vld [vmem:[#allocation8 + $0x160] sm:$0xff]
    %v1661 = vld [vmem:[#allocation8 + $0x168] sm:$0xff]
    %v1662 = vld [vmem:[#allocation8 + $0x170] sm:$0xff]
    %v1663 = vld [vmem:[#allocation8 + $0x178] sm:$0xff]
    %v1664 = vld [vmem:[#allocation8 + $0x180] sm:$0xff]
    %v1665 = vld [vmem:[#allocation8 + $0x188] sm:$0xff]
    %v1666 = vld [vmem:[#allocation8 + $0x190] sm:$0xff]
    %v1667 = vld [vmem:[#allocation8 + $0x198] sm:$0xff]
    %v1668 = vld [vmem:[#allocation8 + $0x1a0] sm:$0xff]
    %v1669 = vld [vmem:[#allocation8 + $0x1a8] sm:$0xff]
    %v1670 = vld [vmem:[#allocation8 + $0x1b0] sm:$0xff]
    %v1671 = vld [vmem:[#allocation8 + $0x1b8] sm:$0xff]
    %v1672 = vld [vmem:[#allocation8 + $0x1c0] sm:$0xff]
    %v1673 = vld [vmem:[#allocation8 + $0x1c8] sm:$0xff]
    %v1674 = vld [vmem:[#allocation8 + $0x1d0] sm:$0xff]
    %v1675 = vld [vmem:[#allocation8 + $0x1d8] sm:$0xff]
    %v1676 = vld [vmem:[#allocation8 + $0x1e0] sm:$0xff]
    %v1677 = vld [vmem:[#allocation8 + $0x1e8] sm:$0xff]
    %v1678 = vld [vmem:[#allocation8 + $0x1f0] sm:$0xff]
    %v1679 = vld [vmem:[#allocation8 + $0x1f8] sm:$0xff]
    %1680 = vmatprep.subr.mxu0 %v1617
    %1681 = vmatpush1.msra.mxu0 %v1616
    %1682 = vmatprep.subr.mxu0 %v1621
    %1683 = vmatpush1.msra.mxu0 %v1620
    %1684 = vmatprep.subr.mxu0 %v1625
    %1685 = vmatpush1.msra.mxu0 %v1624
    %1686 = vmatprep.subr.mxu0 %v1629
    %1687 = vmatpush1.msra.mxu0 %v1628
    %1688 = vmatprep.subr.mxu0 %v1633
    %1689 = vmatpush1.msra.mxu0 %v1632
    %1690 = vmatprep.subr.mxu0 %v1637
    %1691 = vmatpush1.msra.mxu0 %v1636
    %1692 = vmatprep.subr.mxu0 %v1641
    %1693 = vmatpush1.msra.mxu0 %v1640
    %1694 = vmatprep.subr.mxu0 %v1645
    %1695 = vmatpush1.msra.mxu0 %v1644
    %1696 = vmatprep.subr.mxu0 %v1649
    %1697 = vmatpush1.msra.mxu0 %v1648
    %1698 = vmatprep.subr.mxu0 %v1653
    %1699 = vmatpush1.msra.mxu0 %v1652
    %1700 = vmatprep.subr.mxu0 %v1657
    %1701 = vmatpush1.msra.mxu0 %v1656
    %1702 = vmatprep.subr.mxu0 %v1661
    %1703 = vmatpush1.msra.mxu0 %v1660
    %1704 = vmatprep.subr.mxu0 %v1665
    %1705 = vmatpush1.msra.mxu0 %v1664
    %1706 = vmatprep.subr.mxu0 %v1669
    %1707 = vmatpush1.msra.mxu0 %v1668
    %1708 = vmatprep.subr.mxu0 %v1673
    %1709 = vmatpush1.msra.mxu0 %v1672
    %1710 = vmatprep.subr.mxu0 %v1677
    %1711 = vmatpush1.msra.mxu0 %v1676
    %1712 = vmatprep.subr.mxu0 0.0
    %1713 = vmatpush1.msra.mxu0 0.0
    %1714 = vmatprep.subr.mxu0 0.0
    %1715 = vmatpush1.msra.mxu0 0.0
    %1716 = vmatprep.subr.mxu0 0.0
    %1717 = vmatpush1.msra.mxu0 0.0
    %1718 = vmatprep.subr.mxu0 0.0
    %1719 = vmatpush1.msra.mxu0 0.0
    %1720 = vmatprep.subr.mxu0 0.0
    %1721 = vmatpush1.msra.mxu0 0.0
    %1722 = vmatprep.subr.mxu0 0.0
    %1723 = vmatpush1.msra.mxu0 0.0
    %1724 = vmatprep.subr.mxu0 0.0
    %1725 = vmatpush1.msra.mxu0 0.0
    %1726 = vmatprep.subr.mxu0 0.0
    %1727 = vmatpush1.msra.mxu0 0.0
    %1728 = vmatprep.subr.mxu0 0.0
    %1729 = vmatpush1.msra.mxu0 0.0
    %1730 = vmatprep.subr.mxu0 0.0
    %1731 = vmatpush1.msra.mxu0 0.0
    %1732 = vmatprep.subr.mxu0 0.0
    %1733 = vmatpush1.msra.mxu0 0.0
    %1734 = vmatprep.subr.mxu0 0.0
    %1735 = vmatpush1.msra.mxu0 0.0
    %1736 = vmatprep.subr.mxu0 0.0
    %1737 = vmatpush1.msra.mxu0 0.0
    %1738 = vmatprep.subr.mxu0 0.0
    %1739 = vmatpush1.msra.mxu0 0.0
    %1740 = vmatprep.subr.mxu0 0.0
    %1741 = vmatpush1.msra.mxu0 0.0
    %1742 = vmatprep.subr.mxu0 0.0
    %1743 = vmatpush1.msra.mxu0 0.0
    %1744 = vmatprep.mubr.f32.mxu0 0.0
    %1745 = vmatmul.mubr.f32.gmra.mrb[0].mxu0 %v1606
    %v1746 = vpop.f32.mrb[0].mxu0
    %v1747 = vadd.f32 0.0, %v1746
    %v1748 = vpop.f32.mrb[0].mxu0
    %v1749 = vadd.f32 0.0, %v1748
    %1750 = vdwg.mxu0
    %1751 = vmatprep.subr.mxu0 %v1619
    %1752 = vmatpush1.msra.mxu0 %v1618
    %1753 = vmatprep.subr.mxu0 %v1623
    %1754 = vmatpush1.msra.mxu0 %v1622
    %1755 = vmatprep.subr.mxu0 %v1627
    %1756 = vmatpush1.msra.mxu0 %v1626
    %1757 = vmatprep.subr.mxu0 %v1631
    %1758 = vmatpush1.msra.mxu0 %v1630
    %1759 = vmatprep.subr.mxu0 %v1635
    %1760 = vmatpush1.msra.mxu0 %v1634
    %1761 = vmatprep.subr.mxu0 %v1639
    %1762 = vmatpush1.msra.mxu0 %v1638
    %1763 = vmatprep.subr.mxu0 %v1643
    %1764 = vmatpush1.msra.mxu0 %v1642
    %1765 = vmatprep.subr.mxu0 %v1647
    %1766 = vmatpush1.msra.mxu0 %v1646
    %1767 = vmatprep.subr.mxu0 %v1651
    %1768 = vmatpush1.msra.mxu0 %v1650
    %1769 = vmatprep.subr.mxu0 %v1655
    %1770 = vmatpush1.msra.mxu0 %v1654
    %1771 = vmatprep.subr.mxu0 %v1659
    %1772 = vmatpush1.msra.mxu0 %v1658
    %1773 = vmatprep.subr.mxu0 %v1663
    %1774 = vmatpush1.msra.mxu0 %v1662
    %1775 = vmatprep.subr.mxu0 %v1667
    %1776 = vmatpush1.msra.mxu0 %v1666
    %1777 = vmatprep.subr.mxu0 %v1671
    %1778 = vmatpush1.msra.mxu0 %v1670
    %1779 = vmatprep.subr.mxu0 %v1675
    %1780 = vmatpush1.msra.mxu0 %v1674
    %1781 = vmatprep.subr.mxu0 %v1679
    %1782 = vmatpush1.msra.mxu0 %v1678
    %1783 = vmatprep.subr.mxu0 0.0
    %1784 = vmatpush1.msra.mxu0 0.0
    %1785 = vmatprep.subr.mxu0 0.0
    %1786 = vmatpush1.msra.mxu0 0.0
    %1787 = vmatprep.subr.mxu0 0.0
    %1788 = vmatpush1.msra.mxu0 0.0
    %1789 = vmatprep.subr.mxu0 0.0
    %1790 = vmatpush1.msra.mxu0 0.0
    %1791 = vmatprep.subr.mxu0 0.0
    %1792 = vmatpush1.msra.mxu0 0.0
    %1793 = vmatprep.subr.mxu0 0.0
    %1794 = vmatpush1.msra.mxu0 0.0
    %1795 = vmatprep.subr.mxu0 0.0
    %1796 = vmatpush1.msra.mxu0 0.0
    %1797 = vmatprep.subr.mxu0 0.0
    %1798 = vmatpush1.msra.mxu0 0.0
    %1799 = vmatprep.subr.mxu0 0.0
    %1800 = vmatpush1.msra.mxu0 0.0
    %1801 = vmatprep.subr.mxu0 0.0
    %1802 = vmatpush1.msra.mxu0 0.0
    %1803 = vmatprep.subr.mxu0 0.0
    %1804 = vmatpush1.msra.mxu0 0.0
    %1805 = vmatprep.subr.mxu0 0.0
    %1806 = vmatpush1.msra.mxu0 0.0
    %1807 = vmatprep.subr.mxu0 0.0
    %1808 = vmatpush1.msra.mxu0 0.0
    %1809 = vmatprep.subr.mxu0 0.0
    %1810 = vmatpush1.msra.mxu0 0.0
    %1811 = vmatprep.subr.mxu0 0.0
    %1812 = vmatpush1.msra.mxu0 0.0
    %1813 = vmatprep.subr.mxu0 0.0
    %1814 = vmatpush1.msra.mxu0 0.0
    %1815 = vmatprep.mubr.f32.mxu0 0.0
    %1816 = vmatmul.mubr.f32.gmra.mrb[0].mxu0 %v1606
    %v1817 = vpop.f32.mrb[0].mxu0
    %v1818 = vadd.f32 0.0, %v1817
    %v1819 = vpop.f32.mrb[0].mxu0
    %v1820 = vadd.f32 0.0, %v1819
    %1821 = vdwg.mxu0
    %v1822 = vadd.f32 %v1612, %v1747
    %v1823 = vadd.f32 %v1613, %v1749
    %v1824 = vadd.f32 %v1614, %v1818
    %v1825 = vadd.f32 %v1615, %v1820
    %v1826 = vxor.u32 %v1822, 2147483648
    %v1827 = vmul.f32 %v1826, 1.442695
    %v1828 = vpow.pop %v1827
    %v1829 = vadd.f32 %v1828, 1.0
    %v1830 = vrcp.pop %v1829
    %v1831 = vmul.f32 1.0, %v1830
    %v1832 = vxor.u32 %v1823, 2147483648
    %v1833 = vmul.f32 %v1832, 1.442695
    %v1834 = vpow.pop %v1833
    %v1835 = vadd.f32 %v1834, 1.0
    %v1836 = vrcp.pop %v1835
    %v1837 = vmul.f32 1.0, %v1836
    %v1838 = vtanh.pop %v1824
    %v1839 = vxor.u32 %v1825, 2147483648
    %v1840 = vmul.f32 %v1839, 1.442695
    %v1841 = vpow.pop %v1840
    %v1842 = vadd.f32 %v1841, 1.0
    %v1843 = vrcp.pop %v1842
    %v1844 = vmul.f32 1.0, %v1843
    %v1845 = vmul.f32 %v1837, %v1604
    %v1846 = vmul.f32 %v1831, %v1838
    %v1847 = vadd.f32 %v1845, %v1846
    %v1848 = vtanh.pop %v1847
    %v1849 = vmul.f32 %v1844, %v1848
    %s1850 = scalar_lea.vmem [#allocation10], 40
    %1851 = vst [vmem:[%s1850] sm:$0xff] %v1849
    %s1852 = smul.u32 6, 4
    %s1853 = smul.addr %s1852, 8
    %s1854 = scalar_lea.vmem [#allocation2], %s1853
    %v1855 = vld [vmem:[%s1854] sm:$0xff]
    %v1856 = vld [vmem:[%s1854 + $0x8] sm:$0xff]
    %v1857 = vld [vmem:[%s1854 + $0x10] sm:$0xff]
    %v1858 = vld [vmem:[%s1854 + $0x18] sm:$0xff]
    %v1859 = vld [vmem:[#allocation8] sm:$0xff]
    %v1860 = vld [vmem:[#allocation8 + $0x8] sm:$0xff]
    %v1861 = vld [vmem:[#allocation8 + $0x10] sm:$0xff]
    %v1862 = vld [vmem:[#allocation8 + $0x18] sm:$0xff]
    %v1863 = vld [vmem:[#allocation8 + $0x20] sm:$0xff]
    %v1864 = vld [vmem:[#allocation8 + $0x28] sm:$0xff]
    %v1865 = vld [vmem:[#allocation8 + $0x30] sm:$0xff]
    %v1866 = vld [vmem:[#allocation8 + $0x38] sm:$0xff]
    %v1867 = vld [vmem:[#allocation8 + $0x40] sm:$0xff]
    %v1868 = vld [vmem:[#allocation8 + $0x48] sm:$0xff]
    %v1869 = vld [vmem:[#allocation8 + $0x50] sm:$0xff]
    %v1870 = vld [vmem:[#allocation8 + $0x58] sm:$0xff]
    %v1871 = vld [vmem:[#allocation8 + $0x60] sm:$0xff]
    %v1872 = vld [vmem:[#allocation8 + $0x68] sm:$0xff]
    %v1873 = vld [vmem:[#allocation8 + $0x70] sm:$0xff]
    %v1874 = vld [vmem:[#allocation8 + $0x78] sm:$0xff]
    %v1875 = vld [vmem:[#allocation8 + $0x80] sm:$0xff]
    %v1876 = vld [vmem:[#allocation8 + $0x88] sm:$0xff]
    %v1877 = vld [vmem:[#allocation8 + $0x90] sm:$0xff]
    %v1878 = vld [vmem:[#allocation8 + $0x98] sm:$0xff]
    %v1879 = vld [vmem:[#allocation8 + $0xa0] sm:$0xff]
    %v1880 = vld [vmem:[#allocation8 + $0xa8] sm:$0xff]
    %v1881 = vld [vmem:[#allocation8 + $0xb0] sm:$0xff]
    %v1882 = vld [vmem:[#allocation8 + $0xb8] sm:$0xff]
    %v1883 = vld [vmem:[#allocation8 + $0xc0] sm:$0xff]
    %v1884 = vld [vmem:[#allocation8 + $0xc8] sm:$0xff]
    %v1885 = vld [vmem:[#allocation8 + $0xd0] sm:$0xff]
    %v1886 = vld [vmem:[#allocation8 + $0xd8] sm:$0xff]
    %v1887 = vld [vmem:[#allocation8 + $0xe0] sm:$0xff]
    %v1888 = vld [vmem:[#allocation8 + $0xe8] sm:$0xff]
    %v1889 = vld [vmem:[#allocation8 + $0xf0] sm:$0xff]
    %v1890 = vld [vmem:[#allocation8 + $0xf8] sm:$0xff]
    %v1891 = vld [vmem:[#allocation8 + $0x100] sm:$0xff]
    %v1892 = vld [vmem:[#allocation8 + $0x108] sm:$0xff]
    %v1893 = vld [vmem:[#allocation8 + $0x110] sm:$0xff]
    %v1894 = vld [vmem:[#allocation8 + $0x118] sm:$0xff]
    %v1895 = vld [vmem:[#allocation8 + $0x120] sm:$0xff]
    %v1896 = vld [vmem:[#allocation8 + $0x128] sm:$0xff]
    %v1897 = vld [vmem:[#allocation8 + $0x130] sm:$0xff]
    %v1898 = vld [vmem:[#allocation8 + $0x138] sm:$0xff]
    %v1899 = vld [vmem:[#allocation8 + $0x140] sm:$0xff]
    %v1900 = vld [vmem:[#allocation8 + $0x148] sm:$0xff]
    %v1901 = vld [vmem:[#allocation8 + $0x150] sm:$0xff]
    %v1902 = vld [vmem:[#allocation8 + $0x158] sm:$0xff]
    %v1903 = vld [vmem:[#allocation8 + $0x160] sm:$0xff]
    %v1904 = vld [vmem:[#allocation8 + $0x168] sm:$0xff]
    %v1905 = vld [vmem:[#allocation8 + $0x170] sm:$0xff]
    %v1906 = vld [vmem:[#allocation8 + $0x178] sm:$0xff]
    %v1907 = vld [vmem:[#allocation8 + $0x180] sm:$0xff]
    %v1908 = vld [vmem:[#allocation8 + $0x188] sm:$0xff]
    %v1909 = vld [vmem:[#allocation8 + $0x190] sm:$0xff]
    %v1910 = vld [vmem:[#allocation8 + $0x198] sm:$0xff]
    %v1911 = vld [vmem:[#allocation8 + $0x1a0] sm:$0xff]
    %v1912 = vld [vmem:[#allocation8 + $0x1a8] sm:$0xff]
    %v1913 = vld [vmem:[#allocation8 + $0x1b0] sm:$0xff]
    %v1914 = vld [vmem:[#allocation8 + $0x1b8] sm:$0xff]
    %v1915 = vld [vmem:[#allocation8 + $0x1c0] sm:$0xff]
    %v1916 = vld [vmem:[#allocation8 + $0x1c8] sm:$0xff]
    %v1917 = vld [vmem:[#allocation8 + $0x1d0] sm:$0xff]
    %v1918 = vld [vmem:[#allocation8 + $0x1d8] sm:$0xff]
    %v1919 = vld [vmem:[#allocation8 + $0x1e0] sm:$0xff]
    %v1920 = vld [vmem:[#allocation8 + $0x1e8] sm:$0xff]
    %v1921 = vld [vmem:[#allocation8 + $0x1f0] sm:$0xff]
    %v1922 = vld [vmem:[#allocation8 + $0x1f8] sm:$0xff]
    %1923 = vmatprep.subr.mxu0 %v1860
    %1924 = vmatpush1.msra.mxu0 %v1859
    %1925 = vmatprep.subr.mxu0 %v1864
    %1926 = vmatpush1.msra.mxu0 %v1863
    %1927 = vmatprep.subr.mxu0 %v1868
    %1928 = vmatpush1.msra.mxu0 %v1867
    %1929 = vmatprep.subr.mxu0 %v1872
    %1930 = vmatpush1.msra.mxu0 %v1871
    %1931 = vmatprep.subr.mxu0 %v1876
    %1932 = vmatpush1.msra.mxu0 %v1875
    %1933 = vmatprep.subr.mxu0 %v1880
    %1934 = vmatpush1.msra.mxu0 %v1879
    %1935 = vmatprep.subr.mxu0 %v1884
    %1936 = vmatpush1.msra.mxu0 %v1883
    %1937 = vmatprep.subr.mxu0 %v1888
    %1938 = vmatpush1.msra.mxu0 %v1887
    %1939 = vmatprep.subr.mxu0 %v1892
    %1940 = vmatpush1.msra.mxu0 %v1891
    %1941 = vmatprep.subr.mxu0 %v1896
    %1942 = vmatpush1.msra.mxu0 %v1895
    %1943 = vmatprep.subr.mxu0 %v1900
    %1944 = vmatpush1.msra.mxu0 %v1899
    %1945 = vmatprep.subr.mxu0 %v1904
    %1946 = vmatpush1.msra.mxu0 %v1903
    %1947 = vmatprep.subr.mxu0 %v1908
    %1948 = vmatpush1.msra.mxu0 %v1907
    %1949 = vmatprep.subr.mxu0 %v1912
    %1950 = vmatpush1.msra.mxu0 %v1911
    %1951 = vmatprep.subr.mxu0 %v1916
    %1952 = vmatpush1.msra.mxu0 %v1915
    %1953 = vmatprep.subr.mxu0 %v1920
    %1954 = vmatpush1.msra.mxu0 %v1919
    %1955 = vmatprep.subr.mxu0 0.0
    %1956 = vmatpush1.msra.mxu0 0.0
    %1957 = vmatprep.subr.mxu0 0.0
    %1958 = vmatpush1.msra.mxu0 0.0
    %1959 = vmatprep.subr.mxu0 0.0
    %1960 = vmatpush1.msra.mxu0 0.0
    %1961 = vmatprep.subr.mxu0 0.0
    %1962 = vmatpush1.msra.mxu0 0.0
    %1963 = vmatprep.subr.mxu0 0.0
    %1964 = vmatpush1.msra.mxu0 0.0
    %1965 = vmatprep.subr.mxu0 0.0
    %1966 = vmatpush1.msra.mxu0 0.0
    %1967 = vmatprep.subr.mxu0 0.0
    %1968 = vmatpush1.msra.mxu0 0.0
    %1969 = vmatprep.subr.mxu0 0.0
    %1970 = vmatpush1.msra.mxu0 0.0
    %1971 = vmatprep.subr.mxu0 0.0
    %1972 = vmatpush1.msra.mxu0 0.0
    %1973 = vmatprep.subr.mxu0 0.0
    %1974 = vmatpush1.msra.mxu0 0.0
    %1975 = vmatprep.subr.mxu0 0.0
    %1976 = vmatpush1.msra.mxu0 0.0
    %1977 = vmatprep.subr.mxu0 0.0
    %1978 = vmatpush1.msra.mxu0 0.0
    %1979 = vmatprep.subr.mxu0 0.0
    %1980 = vmatpush1.msra.mxu0 0.0
    %1981 = vmatprep.subr.mxu0 0.0
    %1982 = vmatpush1.msra.mxu0 0.0
    %1983 = vmatprep.subr.mxu0 0.0
    %1984 = vmatpush1.msra.mxu0 0.0
    %1985 = vmatprep.subr.mxu0 0.0
    %1986 = vmatpush1.msra.mxu0 0.0
    %1987 = vmatprep.mubr.f32.mxu0 0.0
    %1988 = vmatmul.mubr.f32.gmra.mrb[0].mxu0 %v1849
    %v1989 = vpop.f32.mrb[0].mxu0
    %v1990 = vadd.f32 0.0, %v1989
    %v1991 = vpop.f32.mrb[0].mxu0
    %v1992 = vadd.f32 0.0, %v1991
    %1993 = vdwg.mxu0
    %1994 = vmatprep.subr.mxu0 %v1862
    %1995 = vmatpush1.msra.mxu0 %v1861
    %1996 = vmatprep.subr.mxu0 %v1866
    %1997 = vmatpush1.msra.mxu0 %v1865
    %1998 = vmatprep.subr.mxu0 %v1870
    %1999 = vmatpush1.msra.mxu0 %v1869
    %2000 = vmatprep.subr.mxu0 %v1874
    %2001 = vmatpush1.msra.mxu0 %v1873
    %2002 = vmatprep.subr.mxu0 %v1878
    %2003 = vmatpush1.msra.mxu0 %v1877
    %2004 = vmatprep.subr.mxu0 %v1882
    %2005 = vmatpush1.msra.mxu0 %v1881
    %2006 = vmatprep.subr.mxu0 %v1886
    %2007 = vmatpush1.msra.mxu0 %v1885
    %2008 = vmatprep.subr.mxu0 %v1890
    %2009 = vmatpush1.msra.mxu0 %v1889
    %2010 = vmatprep.subr.mxu0 %v1894
    %2011 = vmatpush1.msra.mxu0 %v1893
    %2012 = vmatprep.subr.mxu0 %v1898
    %2013 = vmatpush1.msra.mxu0 %v1897
    %2014 = vmatprep.subr.mxu0 %v1902
    %2015 = vmatpush1.msra.mxu0 %v1901
    %2016 = vmatprep.subr.mxu0 %v1906
    %2017 = vmatpush1.msra.mxu0 %v1905
    %2018 = vmatprep.subr.mxu0 %v1910
    %2019 = vmatpush1.msra.mxu0 %v1909
    %2020 = vmatprep.subr.mxu0 %v1914
    %2021 = vmatpush1.msra.mxu0 %v1913
    %2022 = vmatprep.subr.mxu0 %v1918
    %2023 = vmatpush1.msra.mxu0 %v1917
    %2024 = vmatprep.subr.mxu0 %v1922
    %2025 = vmatpush1.msra.mxu0 %v1921
    %2026 = vmatprep.subr.mxu0 0.0
    %2027 = vmatpush1.msra.mxu0 0.0
    %2028 = vmatprep.subr.mxu0 0.0
    %2029 = vmatpush1.msra.mxu0 0.0
    %2030 = vmatprep.subr.mxu0 0.0
    %2031 = vmatpush1.msra.mxu0 0.0
    %2032 = vmatprep.subr.mxu0 0.0
    %2033 = vmatpush1.msra.mxu0 0.0
    %2034 = vmatprep.subr.mxu0 0.0
    %2035 = vmatpush1.msra.mxu0 0.0
    %2036 = vmatprep.subr.mxu0 0.0
    %2037 = vmatpush1.msra.mxu0 0.0
    %2038 = vmatprep.subr.mxu0 0.0
    %2039 = vmatpush1.msra.mxu0 0.0
    %2040 = vmatprep.subr.mxu0 0.0
    %2041 = vmatpush1.msra.mxu0 0.0
    %2042 = vmatprep.subr.mxu0 0.0
    %2043 = vmatpush1.msra.mxu0 0.0
    %2044 = vmatprep.subr.mxu0 0.0
    %2045 = vmatpush1.msra.mxu0 0.0
    %2046 = vmatprep.subr.mxu0 0.0
    %2047 = vmatpush1.msra.mxu0 0.0
    %2048 = vmatprep.subr.mxu0 0.0
    %2049 = vmatpush1.msra.mxu0 0.0
    %2050 = vmatprep.subr.mxu0 0.0
    %2051 = vmatpush1.msra.mxu0 0.0
    %2052 = vmatprep.subr.mxu0 0.0
    %2053 = vmatpush1.msra.mxu0 0.0
    %2054 = vmatprep.subr.mxu0 0.0
    %2055 = vmatpush1.msra.mxu0 0.0
    %2056 = vmatprep.subr.mxu0 0.0
    %2057 = vmatpush1.msra.mxu0 0.0
    %2058 = vmatprep.mubr.f32.mxu0 0.0
    %2059 = vmatmul.mubr.f32.gmra.mrb[0].mxu0 %v1849
    %v2060 = vpop.f32.mrb[0].mxu0
    %v2061 = vadd.f32 0.0, %v2060
    %v2062 = vpop.f32.mrb[0].mxu0
    %v2063 = vadd.f32 0.0, %v2062
    %2064 = vdwg.mxu0
    %v2065 = vadd.f32 %v1855, %v1990
    %v2066 = vadd.f32 %v1856, %v1992
    %v2067 = vadd.f32 %v1857, %v2061
    %v2068 = vadd.f32 %v1858, %v2063
    %v2069 = vxor.u32 %v2065, 2147483648
    %v2070 = vmul.f32 %v2069, 1.442695
    %v2071 = vpow.pop %v2070
    %v2072 = vadd.f32 %v2071, 1.0
    %v2073 = vrcp.pop %v2072
    %v2074 = vmul.f32 1.0, %v2073
    %v2075 = vxor.u32 %v2066, 2147483648
    %v2076 = vmul.f32 %v2075, 1.442695
    %v2077 = vpow.pop %v2076
    %v2078 = vadd.f32 %v2077, 1.0
    %v2079 = vrcp.pop %v2078
    %v2080 = vmul.f32 1.0, %v2079
    %v2081 = vtanh.pop %v2067
    %v2082 = vxor.u32 %v2068, 2147483648
    %v2083 = vmul.f32 %v2082, 1.442695
    %v2084 = vpow.pop %v2083
    %v2085 = vadd.f32 %v2084, 1.0
    %v2086 = vrcp.pop %v2085
    %v2087 = vmul.f32 1.0, %v2086
    %v2088 = vmul.f32 %v2080, %v1847
    %v2089 = vmul.f32 %v2074, %v2081
    %v2090 = vadd.f32 %v2088, %v2089
    %v2091 = vtanh.pop %v2090
    %v2092 = vmul.f32 %v2087, %v2091
    %s2093 = scalar_lea.vmem [#allocation10], 48
    %2094 = vst [vmem:[%s2093] sm:$0xff] %v2092
    %s2095 = smul.u32 7, 4
    %s2096 = smul.addr %s2095, 8
    %s2097 = scalar_lea.vmem [#allocation2], %s2096
    %v2098 = vld [vmem:[%s2097] sm:$0xff]
    %v2099 = vld [vmem:[%s2097 + $0x8] sm:$0xff]
    %v2100 = vld [vmem:[%s2097 + $0x10] sm:$0xff]
    %v2101 = vld [vmem:[%s2097 + $0x18] sm:$0xff]
    %v2102 = vld [vmem:[#allocation8] sm:$0xff]
    %v2103 = vld [vmem:[#allocation8 + $0x8] sm:$0xff]
    %v2104 = vld [vmem:[#allocation8 + $0x10] sm:$0xff]
    %v2105 = vld [vmem:[#allocation8 + $0x18] sm:$0xff]
    %v2106 = vld [vmem:[#allocation8 + $0x20] sm:$0xff]
    %v2107 = vld [vmem:[#allocation8 + $0x28] sm:$0xff]
    %v2108 = vld [vmem:[#allocation8 + $0x30] sm:$0xff]
    %v2109 = vld [vmem:[#allocation8 + $0x38] sm:$0xff]
    %v2110 = vld [vmem:[#allocation8 + $0x40] sm:$0xff]
    %v2111 = vld [vmem:[#allocation8 + $0x48] sm:$0xff]
    %v2112 = vld [vmem:[#allocation8 + $0x50] sm:$0xff]
    %v2113 = vld [vmem:[#allocation8 + $0x58] sm:$0xff]
    %v2114 = vld [vmem:[#allocation8 + $0x60] sm:$0xff]
    %v2115 = vld [vmem:[#allocation8 + $0x68] sm:$0xff]
    %v2116 = vld [vmem:[#allocation8 + $0x70] sm:$0xff]
    %v2117 = vld [vmem:[#allocation8 + $0x78] sm:$0xff]
    %v2118 = vld [vmem:[#allocation8 + $0x80] sm:$0xff]
    %v2119 = vld [vmem:[#allocation8 + $0x88] sm:$0xff]
    %v2120 = vld [vmem:[#allocation8 + $0x90] sm:$0xff]
    %v2121 = vld [vmem:[#allocation8 + $0x98] sm:$0xff]
    %v2122 = vld [vmem:[#allocation8 + $0xa0] sm:$0xff]
    %v2123 = vld [vmem:[#allocation8 + $0xa8] sm:$0xff]
    %v2124 = vld [vmem:[#allocation8 + $0xb0] sm:$0xff]
    %v2125 = vld [vmem:[#allocation8 + $0xb8] sm:$0xff]
    %v2126 = vld [vmem:[#allocation8 + $0xc0] sm:$0xff]
    %v2127 = vld [vmem:[#allocation8 + $0xc8] sm:$0xff]
    %v2128 = vld [vmem:[#allocation8 + $0xd0] sm:$0xff]
    %v2129 = vld [vmem:[#allocation8 + $0xd8] sm:$0xff]
    %v2130 = vld [vmem:[#allocation8 + $0xe0] sm:$0xff]
    %v2131 = vld [vmem:[#allocation8 + $0xe8] sm:$0xff]
    %v2132 = vld [vmem:[#allocation8 + $0xf0] sm:$0xff]
    %v2133 = vld [vmem:[#allocation8 + $0xf8] sm:$0xff]
    %v2134 = vld [vmem:[#allocation8 + $0x100] sm:$0xff]
    %v2135 = vld [vmem:[#allocation8 + $0x108] sm:$0xff]
    %v2136 = vld [vmem:[#allocation8 + $0x110] sm:$0xff]
    %v2137 = vld [vmem:[#allocation8 + $0x118] sm:$0xff]
    %v2138 = vld [vmem:[#allocation8 + $0x120] sm:$0xff]
    %v2139 = vld [vmem:[#allocation8 + $0x128] sm:$0xff]
    %v2140 = vld [vmem:[#allocation8 + $0x130] sm:$0xff]
    %v2141 = vld [vmem:[#allocation8 + $0x138] sm:$0xff]
    %v2142 = vld [vmem:[#allocation8 + $0x140] sm:$0xff]
    %v2143 = vld [vmem:[#allocation8 + $0x148] sm:$0xff]
    %v2144 = vld [vmem:[#allocation8 + $0x150] sm:$0xff]
    %v2145 = vld [vmem:[#allocation8 + $0x158] sm:$0xff]
    %v2146 = vld [vmem:[#allocation8 + $0x160] sm:$0xff]
    %v2147 = vld [vmem:[#allocation8 + $0x168] sm:$0xff]
    %v2148 = vld [vmem:[#allocation8 + $0x170] sm:$0xff]
    %v2149 = vld [vmem:[#allocation8 + $0x178] sm:$0xff]
    %v2150 = vld [vmem:[#allocation8 + $0x180] sm:$0xff]
    %v2151 = vld [vmem:[#allocation8 + $0x188] sm:$0xff]
    %v2152 = vld [vmem:[#allocation8 + $0x190] sm:$0xff]
    %v2153 = vld [vmem:[#allocation8 + $0x198] sm:$0xff]
    %v2154 = vld [vmem:[#allocation8 + $0x1a0] sm:$0xff]
    %v2155 = vld [vmem:[#allocation8 + $0x1a8] sm:$0xff]
    %v2156 = vld [vmem:[#allocation8 + $0x1b0] sm:$0xff]
    %v2157 = vld [vmem:[#allocation8 + $0x1b8] sm:$0xff]
    %v2158 = vld [vmem:[#allocation8 + $0x1c0] sm:$0xff]
    %v2159 = vld [vmem:[#allocation8 + $0x1c8] sm:$0xff]
    %v2160 = vld [vmem:[#allocation8 + $0x1d0] sm:$0xff]
    %v2161 = vld [vmem:[#allocation8 + $0x1d8] sm:$0xff]
    %v2162 = vld [vmem:[#allocation8 + $0x1e0] sm:$0xff]
    %v2163 = vld [vmem:[#allocation8 + $0x1e8] sm:$0xff]
    %v2164 = vld [vmem:[#allocation8 + $0x1f0] sm:$0xff]
    %v2165 = vld [vmem:[#allocation8 + $0x1f8] sm:$0xff]
    %2166 = vmatprep.subr.mxu0 %v2103
    %2167 = vmatpush1.msra.mxu0 %v2102
    %2168 = vmatprep.subr.mxu0 %v2107
    %2169 = vmatpush1.msra.mxu0 %v2106
    %2170 = vmatprep.subr.mxu0 %v2111
    %2171 = vmatpush1.msra.mxu0 %v2110
    %2172 = vmatprep.subr.mxu0 %v2115
    %2173 = vmatpush1.msra.mxu0 %v2114
    %2174 = vmatprep.subr.mxu0 %v2119
    %2175 = vmatpush1.msra.mxu0 %v2118
    %2176 = vmatprep.subr.mxu0 %v2123
    %2177 = vmatpush1.msra.mxu0 %v2122
    %2178 = vmatprep.subr.mxu0 %v2127
    %2179 = vmatpush1.msra.mxu0 %v2126
    %2180 = vmatprep.subr.mxu0 %v2131
    %2181 = vmatpush1.msra.mxu0 %v2130
    %2182 = vmatprep.subr.mxu0 %v2135
    %2183 = vmatpush1.msra.mxu0 %v2134
    %2184 = vmatprep.subr.mxu0 %v2139
    %2185 = vmatpush1.msra.mxu0 %v2138
    %2186 = vmatprep.subr.mxu0 %v2143
    %2187 = vmatpush1.msra.mxu0 %v2142
    %2188 = vmatprep.subr.mxu0 %v2147
    %2189 = vmatpush1.msra.mxu0 %v2146
    %2190 = vmatprep.subr.mxu0 %v2151
    %2191 = vmatpush1.msra.mxu0 %v2150
    %2192 = vmatprep.subr.mxu0 %v2155
    %2193 = vmatpush1.msra.mxu0 %v2154
    %2194 = vmatprep.subr.mxu0 %v2159
    %2195 = vmatpush1.msra.mxu0 %v2158
    %2196 = vmatprep.subr.mxu0 %v2163
    %2197 = vmatpush1.msra.mxu0 %v2162
    %2198 = vmatprep.subr.mxu0 0.0
    %2199 = vmatpush1.msra.mxu0 0.0
    %2200 = vmatprep.subr.mxu0 0.0
    %2201 = vmatpush1.msra.mxu0 0.0
    %2202 = vmatprep.subr.mxu0 0.0
    %2203 = vmatpush1.msra.mxu0 0.0
    %2204 = vmatprep.subr.mxu0 0.0
    %2205 = vmatpush1.msra.mxu0 0.0
    %2206 = vmatprep.subr.mxu0 0.0
    %2207 = vmatpush1.msra.mxu0 0.0
    %2208 = vmatprep.subr.mxu0 0.0
    %2209 = vmatpush1.msra.mxu0 0.0
    %2210 = vmatprep.subr.mxu0 0.0
    %2211 = vmatpush1.msra.mxu0 0.0
    %2212 = vmatprep.subr.mxu0 0.0
    %2213 = vmatpush1.msra.mxu0 0.0
    %2214 = vmatprep.subr.mxu0 0.0
    %2215 = vmatpush1.msra.mxu0 0.0
    %2216 = vmatprep.subr.mxu0 0.0
    %2217 = vmatpush1.msra.mxu0 0.0
    %2218 = vmatprep.subr.mxu0 0.0
    %2219 = vmatpush1.msra.mxu0 0.0
    %2220 = vmatprep.subr.mxu0 0.0
    %2221 = vmatpush1.msra.mxu0 0.0
    %2222 = vmatprep.subr.mxu0 0.0
    %2223 = vmatpush1.msra.mxu0 0.0
    %2224 = vmatprep.subr.mxu0 0.0
    %2225 = vmatpush1.msra.mxu0 0.0
    %2226 = vmatprep.subr.mxu0 0.0
    %2227 = vmatpush1.msra.mxu0 0.0
    %2228 = vmatprep.subr.mxu0 0.0
    %2229 = vmatpush1.msra.mxu0 0.0
    %2230 = vmatprep.mubr.f32.mxu0 0.0
    %2231 = vmatmul.mubr.f32.gmra.mrb[0].mxu0 %v2092
    %v2232 = vpop.f32.mrb[0].mxu0
    %v2233 = vadd.f32 0.0, %v2232
    %v2234 = vpop.f32.mrb[0].mxu0
    %v2235 = vadd.f32 0.0, %v2234
    %2236 = vdwg.mxu0
    %2237 = vmatprep.subr.mxu0 %v2105
    %2238 = vmatpush1.msra.mxu0 %v2104
    %2239 = vmatprep.subr.mxu0 %v2109
    %2240 = vmatpush1.msra.mxu0 %v2108
    %2241 = vmatprep.subr.mxu0 %v2113
    %2242 = vmatpush1.msra.mxu0 %v2112
    %2243 = vmatprep.subr.mxu0 %v2117
    %2244 = vmatpush1.msra.mxu0 %v2116
    %2245 = vmatprep.subr.mxu0 %v2121
    %2246 = vmatpush1.msra.mxu0 %v2120
    %2247 = vmatprep.subr.mxu0 %v2125
    %2248 = vmatpush1.msra.mxu0 %v2124
    %2249 = vmatprep.subr.mxu0 %v2129
    %2250 = vmatpush1.msra.mxu0 %v2128
    %2251 = vmatprep.subr.mxu0 %v2133
    %2252 = vmatpush1.msra.mxu0 %v2132
    %2253 = vmatprep.subr.mxu0 %v2137
    %2254 = vmatpush1.msra.mxu0 %v2136
    %2255 = vmatprep.subr.mxu0 %v2141
    %2256 = vmatpush1.msra.mxu0 %v2140
    %2257 = vmatprep.subr.mxu0 %v2145
    %2258 = vmatpush1.msra.mxu0 %v2144
    %2259 = vmatprep.subr.mxu0 %v2149
    %2260 = vmatpush1.msra.mxu0 %v2148
    %2261 = vmatprep.subr.mxu0 %v2153
    %2262 = vmatpush1.msra.mxu0 %v2152
    %2263 = vmatprep.subr.mxu0 %v2157
    %2264 = vmatpush1.msra.mxu0 %v2156
    %2265 = vmatprep.subr.mxu0 %v2161
    %2266 = vmatpush1.msra.mxu0 %v2160
    %2267 = vmatprep.subr.mxu0 %v2165
    %2268 = vmatpush1.msra.mxu0 %v2164
    %2269 = vmatprep.subr.mxu0 0.0
    %2270 = vmatpush1.msra.mxu0 0.0
    %2271 = vmatprep.subr.mxu0 0.0
    %2272 = vmatpush1.msra.mxu0 0.0
    %2273 = vmatprep.subr.mxu0 0.0
    %2274 = vmatpush1.msra.mxu0 0.0
    %2275 = vmatprep.subr.mxu0 0.0
    %2276 = vmatpush1.msra.mxu0 0.0
    %2277 = vmatprep.subr.mxu0 0.0
    %2278 = vmatpush1.msra.mxu0 0.0
    %2279 = vmatprep.subr.mxu0 0.0
    %2280 = vmatpush1.msra.mxu0 0.0
    %2281 = vmatprep.subr.mxu0 0.0
    %2282 = vmatpush1.msra.mxu0 0.0
    %2283 = vmatprep.subr.mxu0 0.0
    %2284 = vmatpush1.msra.mxu0 0.0
    %2285 = vmatprep.subr.mxu0 0.0
    %2286 = vmatpush1.msra.mxu0 0.0
    %2287 = vmatprep.subr.mxu0 0.0
    %2288 = vmatpush1.msra.mxu0 0.0
    %2289 = vmatprep.subr.mxu0 0.0
    %2290 = vmatpush1.msra.mxu0 0.0
    %2291 = vmatprep.subr.mxu0 0.0
    %2292 = vmatpush1.msra.mxu0 0.0
    %2293 = vmatprep.subr.mxu0 0.0
    %2294 = vmatpush1.msra.mxu0 0.0
    %2295 = vmatprep.subr.mxu0 0.0
    %2296 = vmatpush1.msra.mxu0 0.0
    %2297 = vmatprep.subr.mxu0 0.0
    %2298 = vmatpush1.msra.mxu0 0.0
    %2299 = vmatprep.subr.mxu0 0.0
    %2300 = vmatpush1.msra.mxu0 0.0
    %2301 = vmatprep.mubr.f32.mxu0 0.0
    %2302 = vmatmul.mubr.f32.gmra.mrb[0].mxu0 %v2092
    %v2303 = vpop.f32.mrb[0].mxu0
    %v2304 = vadd.f32 0.0, %v2303
    %v2305 = vpop.f32.mrb[0].mxu0
    %v2306 = vadd.f32 0.0, %v2305
    %2307 = vdwg.mxu0
    %v2308 = vadd.f32 %v2098, %v2233
    %v2309 = vadd.f32 %v2099, %v2235
    %v2310 = vadd.f32 %v2100, %v2304
    %v2311 = vadd.f32 %v2101, %v2306
    %v2312 = vxor.u32 %v2308, 2147483648
    %v2313 = vmul.f32 %v2312, 1.442695
    %v2314 = vpow.pop %v2313
    %v2315 = vadd.f32 %v2314, 1.0
    %v2316 = vrcp.pop %v2315
    %v2317 = vmul.f32 1.0, %v2316
    %v2318 = vxor.u32 %v2309, 2147483648
    %v2319 = vmul.f32 %v2318, 1.442695
    %v2320 = vpow.pop %v2319
    %v2321 = vadd.f32 %v2320, 1.0
    %v2322 = vrcp.pop %v2321
    %v2323 = vmul.f32 1.0, %v2322
    %v2324 = vtanh.pop %v2310
    %v2325 = vxor.u32 %v2311, 2147483648
    %v2326 = vmul.f32 %v2325, 1.442695
    %v2327 = vpow.pop %v2326
    %v2328 = vadd.f32 %v2327, 1.0
    %v2329 = vrcp.pop %v2328
    %v2330 = vmul.f32 1.0, %v2329
    %v2331 = vmul.f32 %v2323, %v2090
    %v2332 = vmul.f32 %v2317, %v2324
    %v2333 = vadd.f32 %v2331, %v2332
    %v2334 = vtanh.pop %v2333
    %v2335 = vmul.f32 %v2330, %v2334
    %s2336 = scalar_lea.vmem [#allocation10], 56
    %2337 = vst [vmem:[%s2336] sm:$0xff] %v2335
    %2338 = vst [vmem:[#allocation3] sm:$0xff] %v2335
    %2339 = vst [vmem:[#allocation4] sm:$0xff] %v2333
    %2340 = vst [vmem:[#allocation11] sm:$0xff] %v2335
    %2341 = vst [vmem:[#allocation13] sm:$0xff] %v2333
    // Predicated region
    $region38: #{tpu_custom_call.1} parent=1 // pred_check
      _
    $region39: #{tpu_custom_call.1} parent=1 // pred_check_branch
      %2343 = sbr.rel (0) target = $region41
    $region40: #{tpu_custom_call.1} parent=1 // pred_region
      %s2345 = ssub.s32 1024, 1024
      %2346 = vsyncadd [#allocation7], %s2345
      %s2347 = sshll.u32 [#allocation10], 4
      %s2348 = int_to_ptr.vmem [resolvable:$true] %s2347
      %2353 = dma.vmem_to_hbm [thread:$0]  %s2348, 1024, %s6, [#allocation7], 128, 128, 8
    $region41: #{tpu_custom_call.1} parent=1 // pred_fallthru
      _
    // Predicated region
    $region42: #{tpu_custom_call.1} parent=1 // pred_check
      _
    $region43: #{tpu_custom_call.1} parent=1 // pred_check_branch
      %2355 = sbr.rel (0) target = $region45
    $region44: #{tpu_custom_call.1} parent=1 // pred_region
      %s2357 = ssub.s32 128, 128
      %2358 = vsyncadd [#allocation12], %s2357
      %s2360 = sshll.u32 [#allocation11], 4
      %s2361 = int_to_ptr.vmem [resolvable:$true] %s2360
      %2363 = dma.vmem_to_hbm [thread:$0]  %s2361, 128, %s7, [#allocation12]
    $region45: #{tpu_custom_call.1} parent=1 // pred_fallthru
      _
    // Predicated region
    $region46: #{tpu_custom_call.1} parent=1 // pred_check
      _
    $region47: #{tpu_custom_call.1} parent=1 // pred_check_branch
      %2365 = sbr.rel (0) target = $region49
    $region48: #{tpu_custom_call.1} parent=1 // pred_region
      %s2367 = ssub.s32 128, 128
      %2368 = vsyncadd [#allocation12], %s2367
      %s2370 = sshll.u32 [#allocation13], 4
      %s2371 = int_to_ptr.vmem [resolvable:$true] %s2370
      %2373 = dma.vmem_to_hbm [thread:$0]  %s2371, 128, %s8, [#allocation12]
    $region49: #{tpu_custom_call.1} parent=1 // pred_fallthru
      _
    // Predicated region
    $region50: #{tpu_custom_call.1} parent=1 // pred_check
      _
    $region51: #{tpu_custom_call.1} parent=1 // pred_check_branch
      %2375 = sbr.rel (0) target = $region53
    $region52: #{tpu_custom_call.1} parent=1 // pred_region
      %2376 = dma.done [#allocation7], 1024
    $region53: #{tpu_custom_call.1} parent=1 // pred_fallthru
      _
    // Predicated region
    $region54: #{tpu_custom_call.1} parent=1 // pred_check
      _
    $region55: #{tpu_custom_call.1} parent=1 // pred_check_branch
      %2378 = sbr.rel (0) target = $region57
    $region56: #{tpu_custom_call.1} parent=1 // pred_region
      %2379 = dma.done [#allocation12], 128
    $region57: #{tpu_custom_call.1} parent=1 // pred_fallthru
      _
    // Predicated region
    $region58: #{tpu_custom_call.1} parent=1 // pred_check
      _
    $region59: #{tpu_custom_call.1} parent=1 // pred_check_branch
      %2381 = sbr.rel (0) target = $region61
    $region60: #{tpu_custom_call.1} parent=1 // pred_region
      %2382 = dma.done [#allocation12], 128
    $region61: #{tpu_custom_call.1} parent=1 // pred_fallthru
      _
    %2383 = vsyncpa [#allocation6], 1
    %2384 = vsyncpa [#allocation9], 1
    %2385 = vsyncpa [#allocation7], 1
    %2386 = vsyncpa [#allocation12], 1

</llo_original>
